<compile_context>
chip_gen: v7x
topology: tpu7x:2x2x1
jax: 0.10.0
libtpu: 0.0.40
codegen_flags: <defaults>
</compile_context>

<pallas_src>
import functools
import math

import jax
import jax.numpy as jnp
from jax.experimental import pallas as pl
from jax.experimental.pallas import tpu as pltpu

LN_EPS = 1e-5
NEG_INF = -1e9
LANE = 128
SUBLANE = 8
MIB = 1024 * 1024

# Resolved by a probe kernel in __main__ (outside any jit trace); False -> feature unused.
_SUPPORTS_BUFFERED = False


# ----------------------------- small helpers -----------------------------

def _vmem_limit(need_bytes):
    """Explicit scoped-VMEM limit per pallas_call (v7x-safe cap of 64 MiB total VMEM)."""
    return int(min(64 * MIB, max(32 * MIB, 2 * need_bytes)))


def _tile(dim, cap, base):
    """Largest divisor of `dim` that is <= cap and a multiple of `base` (layout-legal tile).

    Only falls back to the whole dim when no such divisor exists (small / ragged dims), so a
    dim that merely isn't a multiple of the cap no longer becomes one giant VMEM-blowing tile.
    """
    if dim <= cap:
        return dim
    t = (cap // base) * base
    while t >= base:
        if dim % t == 0:
            return t
        t -= base
    return dim


def _probe_buffered():
    """Check (eagerly, outside jit) that pl.Buffered(...) pipeline_mode lowers on this TPU."""
    try:
        def k(x_ref, w_ref, o_ref, acc_ref):
            @pl.when(pl.program_id(2) == 0)
            def _():
                acc_ref[...] = jnp.zeros_like(acc_ref)
            acc_ref[...] += jnp.dot(x_ref[...], w_ref[...],
                                    preferred_element_type=jnp.float32)

            @pl.when(pl.program_id(2) == pl.num_programs(2) - 1)
            def _():
                o_ref[...] = acc_ref[...]

        f = pl.pallas_call(
            k,
            out_shape=jax.ShapeDtypeStruct((8, 128), jnp.float32),
            grid=(1, 1, 2),
            in_specs=[pl.BlockSpec((8, 128), lambda i, j, kk: (i, kk)),
                      pl.BlockSpec((128, 128), lambda i, j, kk: (kk, j),
                                   pipeline_mode=pl.Buffered(3))],
            out_specs=pl.BlockSpec((8, 128), lambda i, j, kk: (i, j)),
            scratch_shapes=[pltpu.VMEM((8, 128), jnp.float32)],
            compiler_params=pltpu.CompilerParams(
                dimension_semantics=("parallel", "parallel", "arbitrary")),
        )
        x = jnp.zeros((8, 256), jnp.bfloat16)
        w = jnp.zeros((256, 128), jnp.bfloat16)
        jax.block_until_ready(f(x, w))
        return True
    except Exception:
        return False


# ----------------------------- Pallas kernels -----------------------------

def _linear_kernel(x_ref, w_ref, b_ref, o_ref, acc_ref, *, relu):
    """One (tm, tn) output tile; fp32 VMEM accumulation over the K grid axis.

    Inputs arrive already in bf16 (cast at init / at producer stores), so DMA bytes are bf16
    and no VALU slots are burned on in-kernel casts; bias stays fp32 and is added on the
    fp32 accumulator.
    """
    @pl.when(pl.program_id(2) == 0)
    def _():
        acc_ref[...] = jnp.zeros_like(acc_ref)

    acc_ref[...] += jnp.dot(x_ref[...], w_ref[...], preferred_element_type=jnp.float32)

    @pl.when(pl.program_id(2) == pl.num_programs(2) - 1)
    def _():
        y = acc_ref[...] + b_ref[...]
        if relu:
            y = jnp.maximum(y, 0.0)
        o_ref[...] = y.astype(o_ref.dtype)


def _layernorm_kernel(*refs, add_residual):
    """LayerNorm over the last dim (fp32 math); optionally fuses the residual add LN(x + r)."""
    if add_residual:
        x_ref, r_ref, g_ref, b_ref, o_ref = refs
        x = x_ref[...].astype(jnp.float32) + r_ref[...].astype(jnp.float32)
    else:
        x_ref, g_ref, b_ref, o_ref = refs
        x = x_ref[...].astype(jnp.float32)
    mean = jnp.mean(x, axis=-1, keepdims=True)
    var = jnp.mean(jnp.square(x - mean), axis=-1, keepdims=True)
    y = (x - mean) * jax.lax.rsqrt(var + LN_EPS)
    o_ref[...] = (y * g_ref[...] + b_ref[...]).astype(o_ref.dtype)


def _mha_kernel(q_ref, k_ref, v_ref, m_ref, o_ref, *, num_heads, scale):
    """Attention for one batch element, heads folded into the E axis of the block.

    q/k/v blocks (1, T, E) are bf16 slabs picked straight out of the fused projection tensors
    by the BlockSpec index_map (no wrapper slice copies).  Scores / softmax run in fp32
    (fp32 elementwise even with bf16 matmuls, per v5e guidance); p is cast to bf16 only at the
    MXU input of p@v.  Per-head contexts are concatenated in vregs and written with ONE
    lane-dense store (no per-head sub-128-lane partial stores).
    """
    head_dim = q_ref.shape[-1] // num_heads
    q = q_ref[0] * scale                  # scale folded into q once (all heads), bf16
    k = k_ref[0]
    v = v_ref[0]
    m = m_ref[0].astype(jnp.float32)      # (Tq, Tk) or (1, Tk) additive mask -> broadcast

    ctx = []
    for h in range(num_heads):            # static unroll; small H
        sl = slice(h * head_dim, (h + 1) * head_dim)
        # contract the last dims directly -- no in-kernel transpose of k
        s = jax.lax.dot_general(q[:, sl], k[:, sl],
                                dimension_numbers=(((1,), (1,)), ((), ())),
                                preferred_element_type=jnp.float32)      # (Tq, Tk) fp32
        s = s + m
        s = s - jnp.max(s, axis=-1, keepdims=True)
        p = jnp.exp(s)
        p = p * pl.reciprocal(jnp.sum(p, axis=-1, keepdims=True), approx=True)
        ctx.append(jnp.dot(p.astype(v.dtype), v[:, sl],
                           preferred_element_type=jnp.float32))          # (Tq, D) fp32
    o_ref[0] = jnp.concatenate(ctx, axis=-1).astype(o_ref.dtype)         # one lane-dense store


# ----------------------------- kernel wrappers -----------------------------

def linear(x2d, w, b, relu=False, out_dtype=jnp.bfloat16,
           tm_cap=256, tn_cap=256, tk_cap=512):
    """y = relu?(x @ w + b).  x2d/w bf16, b fp32.  Tile caps are v7x-safe (64 MiB VMEM);
    on v6e (128 MiB) bumping tm/tn caps to 512 is profitable at large M, N."""
    m, kdim = x2d.shape
    n = w.shape[1]
    tm = _tile(m, tm_cap, SUBLANE)
    tn = _tile(n, tn_cap, LANE)
    tk = _tile(kdim, tk_cap, LANE)

    # Decode-like shapes (few activation rows): weight DMA dominates the short MXU bursts,
    # so deepen weight buffering (only if this jax/libtpu supports it -- probed at startup).
    w_spec_kwargs = {}
    wbufs = 2
    if _SUPPORTS_BUFFERED and tm <= 64:
        w_spec_kwargs["pipeline_mode"] = pl.Buffered(3)
        wbufs = 3

    xb = jnp.dtype(x2d.dtype).itemsize
    wb = jnp.dtype(w.dtype).itemsize
    ob = jnp.dtype(out_dtype).itemsize
    need = (2 * tm * tk * xb + wbufs * tk * tn * wb + 2 * tn * 4
            + tm * tn * 4 + 2 * tm * tn * ob)

    return pl.pallas_call(
        functools.partial(_linear_kernel, relu=relu),
        out_shape=jax.ShapeDtypeStruct((m, n), out_dtype),
        grid=(m // tm, n // tn, kdim // tk),
        in_specs=[pl.BlockSpec((tm, tk), lambda i, j, kk: (i, kk)),
                  pl.BlockSpec((tk, tn), lambda i, j, kk: (kk, j), **w_spec_kwargs),
                  pl.BlockSpec((1, tn), lambda i, j, kk: (0, j))],
        out_specs=pl.BlockSpec((tm, tn), lambda i, j, kk: (i, j)),
        scratch_shapes=[pltpu.VMEM((tm, tn), jnp.float32)],
        compiler_params=pltpu.CompilerParams(
            dimension_semantics=("parallel", "parallel", "arbitrary"),
            vmem_limit_bytes=_vmem_limit(need)),
    )(x2d, w, b.reshape(1, n))


def layernorm(x2d, gamma, beta, residual=None, out_dtype=jnp.bfloat16, row_cap=512):
    """LayerNorm(x2d [+ residual]) over the feature dim, row-tiled grid, fp32 math."""
    n, e = x2d.shape
    # Scale the row tile with E so double-buffered x [+ r] + out plus fp32 temps stay well
    # under the scoped-VMEM limit even on v5e's 16 MiB default.
    per_row = e * 4 * (10 if residual is not None else 8)
    budget_rows = max(SUBLANE, (8 * MIB // max(per_row, 1)) // SUBLANE * SUBLANE)
    tr = _tile(n, min(row_cap, budget_rows), SUBLANE)

    row_spec = pl.BlockSpec((tr, e), lambda i: (i, 0))
    vec_spec = pl.BlockSpec((1, e), lambda i: (0, 0))
    args, in_specs = [x2d], [row_spec]
    if residual is not None:
        args.append(residual)
        in_specs.append(row_spec)
    args += [gamma.reshape(1, e), beta.reshape(1, e)]
    in_specs += [vec_spec, vec_spec]

    need = tr * per_row + 4 * e * 4
    return pl.pallas_call(
        functools.partial(_layernorm_kernel, add_residual=residual is not None),
        out_shape=jax.ShapeDtypeStruct((n, e), out_dtype),
        grid=(n // tr,),
        in_specs=in_specs,
        out_specs=row_spec,
        compiler_params=pltpu.CompilerParams(
            dimension_semantics=("parallel",),
            vmem_limit_bytes=_vmem_limit(need)),
    )(*args)


def attention(q_src, q_blk, k_src, k_blk, v_src, v_blk, add_mask, num_heads, embed_dim):
    """Scaled dot-product attention, one grid step per batch element.

    q_src/k_src/v_src: [B, T, n*E] fused-projection tensors; q_blk/k_blk/v_blk select the
    E-wide slab through the BlockSpec index_map (no XLA slice copies).
    add_mask: [1, Tq, Tk] (shared attn_mask) or [B, 1, Tk] (additive key-padding mask).
    """
    B, Tq, _ = q_src.shape
    Tk = k_src.shape[1]
    E = embed_dim
    scale = 1.0 / math.sqrt(E // num_heads)
    mb, mq, mk = add_mask.shape
    mask_map = (lambda b: (0, 0, 0)) if mb == 1 else (lambda b: (b, 0, 0))

    eb = jnp.dtype(q_src.dtype).itemsize
    need = 2 * (Tq * E * eb + 2 * Tk * E * eb + mq * mk * 4 + Tq * E * eb) + Tq * Tk * 4
    # TODO(synk): for production Tq/Tk, add a KV grid axis (flash-style online softmax) and
    # tile Tq so blocks fit v7x's 64 MiB VMEM and the DMA pipeline overlaps; whole-T blocks
    # are fine at these shapes.  A known-causal attn_mask could also be generated in-kernel
    # with broadcasted_iota instead of being DMA'd, but the module accepts arbitrary masks.
    return pl.pallas_call(
        functools.partial(_mha_kernel, num_heads=num_heads, scale=scale),
        out_shape=jax.ShapeDtypeStruct((B, Tq, E), q_src.dtype),
        grid=(B,),   # v7x: keep this parallel extent >= 2 (and even) so both TCs stay busy
        in_specs=[pl.BlockSpec((1, Tq, E), lambda b: (b, 0, q_blk)),
                  pl.BlockSpec((1, Tk, E), lambda b: (b, 0, k_blk)),
                  pl.BlockSpec((1, Tk, E), lambda b: (b, 0, v_blk)),
                  pl.BlockSpec((1, mq, mk), mask_map)],
        out_specs=pl.BlockSpec((1, Tq, E), lambda b: (b, 0, 0)),
        compiler_params=pltpu.CompilerParams(
            dimension_semantics=("parallel",),
            vmem_limit_bytes=_vmem_limit(need)),
    )(q_src, k_src, v_src, add_mask)


# ----------------------------- model glue (plain JAX) -----------------------------

def decoder_block(x, self_mask, enc2d, cross_mask, p, num_heads):
    """One DecoderTransformerBlock (post-LN), eval mode (all dropouts are identity)."""
    B, T, E = x.shape
    S = enc2d.shape[0] // B
    x2d = x.reshape(B * T, E)

    # Fused projections: decoder stream -> [self-Q | self-K | self-V | cross-Q],
    #                    encoder stream -> [cross-K | cross-V].  Reshapes are metadata-only.
    dec_proj = linear(x2d, p["w_dec_proj"], p["b_dec_proj"]).reshape(B, T, 4 * E)
    enc_proj = linear(enc2d, p["w_enc_proj"], p["b_enc_proj"]).reshape(B, S, 2 * E)

    if E % LANE == 0:
        # Slabs are selected by the attention BlockSpec index_map -> no XLA slice copies.
        qs, qs_i = dec_proj, 0
        ks, ks_i = dec_proj, 1
        vs, vs_i = dec_proj, 2
        qc, qc_i = dec_proj, 3
        kc, kc_i = enc_proj, 0
        vc, vc_i = enc_proj, 1
    else:
        # TODO(synk): non-lane-aligned E falls back to XLA slice copies (alignment required
        # for sub-lane BlockSpec windows).
        qs, qs_i = dec_proj[:, :, 0 * E:1 * E], 0
        ks, ks_i = dec_proj[:, :, 1 * E:2 * E], 0
        vs, vs_i = dec_proj[:, :, 2 * E:3 * E], 0
        qc, qc_i = dec_proj[:, :, 3 * E:4 * E], 0
        kc, kc_i = enc_proj[:, :, 0 * E:1 * E], 0
        vc, vc_i = enc_proj[:, :, 1 * E:2 * E], 0

    # Self-attention + out-proj, then fused (residual add + LayerNorm1).
    sa = attention(qs, qs_i, ks, ks_i, vs, vs_i, self_mask, num_heads, E)
    sa = linear(sa.reshape(B * T, E), p["self_wo"], p["self_bo"])
    h1 = layernorm(sa, p["ln1_g"], p["ln1_b"], residual=x2d)

    # Cross-attention: the query is projected from the ORIGINAL block input x (the reference
    # calls crossAttention(decoder_x, encoder_x, encoder_x)); the LN2 residual is h1.
    ca = attention(qc, qc_i, kc, kc_i, vc, vc_i, cross_mask, num_heads, E)
    ca = linear(ca.reshape(B * T, E), p["cross_wo"], p["cross_bo"])
    h2 = layernorm(ca, p["ln2_g"], p["ln2_b"], residual=h1)

    # Feed-forward + fused (residual add + LayerNorm3).
    ff1 = linear(h2, p["ff_w1"], p["ff_b1"], relu=True)
    ff2 = linear(ff1, p["ff_w2"], p["ff_b2"])
    out = layernorm(ff2, p["ln3_g"], p["ln3_b"], residual=h2)
    return out.reshape(B, T, E)
    # TODO(synk): fusing attention + its output projection (and whole sublayers via
    # pltpu.emit_pipeline) would remove one [B*T,E] HBM round trip per attention sublayer.


def transformer_decoder(decoder_x, decoder_mask, encoder_x, encoder_mask, params, num_heads):
    """
    decoder_x:    [B, T, E]  float32
    decoder_mask: [T, T]     float32 additive mask (0 / -1e9) for self-attention (attn_mask)
    encoder_x:    [B, S, E]  float32
    encoder_mask: [B, S]     bool key_padding_mask (True = ignore key position)
    returns:      [B, T, img_depth] float32
    """
    B, T, E = decoder_x.shape
    S = encoder_x.shape[1]

    # LayerNorm applied BEFORE the layer stack (TransformerDecoder.forward); bf16 output.
    x = layernorm(decoder_x.reshape(B * T, E), params["ln_g"], params["ln_b"]).reshape(B, T, E)

    # Cast the encoder stream to bf16 ONCE, outside the kernels, so matmul DMA bytes are bf16.
    enc2d = encoder_x.reshape(B * S, E).astype(jnp.bfloat16)

    # Tiny mask tensors -- no [B*H, T, T/S] broadcast materialized in HBM.
    self_mask = decoder_mask.astype(jnp.float32).reshape(1, T, T)
    cross_mask = jnp.where(encoder_mask, NEG_INF, 0.0).astype(jnp.float32).reshape(B, 1, S)

    for lp in params["layers"]:
        x = decoder_block(x, self_mask, enc2d, cross_mask, lp, num_heads)

    # Final projection: N padded to a multiple of 128 at init (lane-dense stores), slice back.
    out = linear(x.reshape(B * T, E), params["out_w"], params["out_b"], out_dtype=jnp.float32)
    img_depth = params["img_depth"]
    return out[:, :img_depth].reshape(B, T, img_depth)


# ----------------------------- deterministic params -----------------------------

def init_params(key, img_depth, embedding_dim, ff_dim, num_dec_layers):
    E, F = embedding_dim, ff_dim
    scale = 0.02

    def dense(k, din, dout):
        kw, kb = jax.random.split(k)
        # Weights stored in bf16 (full-rate MXU + halved weight DMA); biases stay fp32.
        w = (jax.random.normal(kw, (din, dout), jnp.float32) * scale).astype(jnp.bfloat16)
        b = jax.random.normal(kb, (dout,), jnp.float32) * scale
        return w, b

    keys = jax.random.split(key, num_dec_layers + 2)
    params = dict(ln_g=jnp.ones((E,), jnp.float32), ln_b=jnp.zeros((E,), jnp.float32),
                  img_depth=img_depth)

    layers = []
    for i in range(num_dec_layers):
        ks = jax.random.split(keys[i], 6)
        w_dec, b_dec = dense(ks[0], E, 4 * E)    # [self-Q | self-K | self-V | cross-Q]
        w_enc, b_enc = dense(ks[1], E, 2 * E)    # [cross-K | cross-V]
        self_wo, self_bo = dense(ks[2], E, E)
        cross_wo, cross_bo = dense(ks[3], E, E)
        ff_w1, ff_b1 = dense(ks[4], E, F)
        ff_w2, ff_b2 = dense(ks[5], F, E)
        layers.append(dict(
            w_dec_proj=w_dec, b_dec_proj=b_dec,
            w_enc_proj=w_enc, b_enc_proj=b_enc,
            self_wo=self_wo, self_bo=self_bo,
            cross_wo=cross_wo, cross_bo=cross_bo,
            ln1_g=jnp.ones((E,), jnp.float32), ln1_b=jnp.zeros((E,), jnp.float32),
            ln2_g=jnp.ones((E,), jnp.float32), ln2_b=jnp.zeros((E,), jnp.float32),
            ln3_g=jnp.ones((E,), jnp.float32), ln3_b=jnp.zeros((E,), jnp.float32),
            ff_w1=ff_w1, ff_b1=ff_b1, ff_w2=ff_w2, ff_b2=ff_b2,
        ))
    params["layers"] = layers

    # Final projection, with N padded to a lane-dense multiple of 128 (zeros in the padding).
    ow, ob = dense(keys[-1], E, img_depth)
    pad_n = ((img_depth + LANE - 1) // LANE) * LANE
    params["out_w"] = jnp.zeros((E, pad_n), jnp.bfloat16).at[:, :img_depth].set(ow)
    params["out_b"] = jnp.zeros((pad_n,), jnp.float32).at[:img_depth].set(ob)
    return params


# ----------------------------- main -----------------------------

if __name__ == "__main__":
    # Probe (eagerly, outside any jit trace) whether pl.Buffered pipeline_mode is supported.
    _SUPPORTS_BUFFERED = _probe_buffered()

    B, T, S = 2, 8, 8
    E, H, F = 128, 4, 256          # E lane-aligned -> BlockSpec slab selection fast path
    IMG_DEPTH = 16
    NUM_LAYERS = 2

    root = jax.random.PRNGKey(0)
    k_par, k_dec, k_enc = jax.random.split(root, 3)

    params = init_params(k_par, IMG_DEPTH, E, F, NUM_LAYERS)

    decoder_x = jax.random.normal(k_dec, (B, T, E), jnp.float32)
    encoder_x = jax.random.normal(k_enc, (B, S, E), jnp.float32)

    # causal additive float mask for self-attention (as attn_mask in PyTorch)
    causal = jnp.tril(jnp.ones((T, T), jnp.bool_))
    decoder_mask = jnp.where(causal, 0.0, NEG_INF).astype(jnp.float32)
    # key_padding_mask: last 2 encoder positions of batch element 1 are padding
    encoder_mask = jnp.zeros((B, S), jnp.bool_).at[1, S - 2:].set(True)

    fwd = jax.jit(lambda dx, dm, ex, em: transformer_decoder(dx, dm, ex, em, params, H))
    out = fwd(decoder_x, decoder_mask, encoder_x, encoder_mask)
    jax.block_until_ready(out)

    assert out.shape == (B, T, IMG_DEPTH)
    assert bool(jnp.all(jnp.isfinite(out)))
    print("KERNEL_OK")
</pallas_src>

<mosaic_0001>
module attributes {stable_mosaic.version = 11 : i64} {
  func.func @_linear_kernel(%arg0: i32, %arg1: i32, %arg2: i32, %arg3: memref<16x128xbf16, #tpu.memory_space<vmem>>, %arg4: memref<128x256xbf16, #tpu.memory_space<vmem>>, %arg5: memref<1x256xf32, #tpu.memory_space<vmem>>, %arg6: memref<16x256xbf16, #tpu.memory_space<vmem>>, %arg7: memref<16x256xf32, #tpu.memory_space<vmem>>) attributes {dimension_semantics = [#tpu.dimension_semantics<parallel>, #tpu.dimension_semantics<parallel>, #tpu.dimension_semantics<arbitrary>], iteration_bounds = array<i64: 1, 2, 1>, scalar_prefetch = 0 : i64, scratch_operands = 1 : i64, tpu.core_type = #tpu.core_type<tc>, window_params = [{transform_indices = @transform_0, window_bounds = array<i64: 16, 128>}, {transform_indices = @transform_1, window_bounds = array<i64: 128, 256>}, {transform_indices = @transform_2, window_bounds = array<i64: 1, 256>}, {transform_indices = @transform_3, window_bounds = array<i64: 16, 256>}]} {
    %c0_i32 = arith.constant 0 : i32
    %0 = arith.cmpi eq, %arg2, %c0_i32 : i32
    %1 = arith.extui %0 : i1 to i32
    %c0_i32_0 = arith.constant 0 : i32
    %2 = arith.cmpi ne, %1, %c0_i32_0 : i32
    scf.if %2 {
      %cst_10 = arith.constant 0.000000e+00 : f32
      %12 = vector.broadcast %cst_10 : f32 to vector<16x256xf32>
      %c0_11 = arith.constant 0 : index
      %c0_12 = arith.constant 0 : index
      %13 = vector.load %arg7[%c0_11, %c0_12] : memref<16x256xf32, #tpu.memory_space<vmem>>, vector<16x256xf32>
      tpu.vector_store %arg7[%c0_11, %c0_12], %12 {strides = array<i32>} : memref<16x256xf32, #tpu.memory_space<vmem>>, vector<16x256xf32>,
    } else {
    }
    %c0 = arith.constant 0 : index
    %c0_1 = arith.constant 0 : index
    %3 = vector.load %arg7[%c0, %c0_1] : memref<16x256xf32, #tpu.memory_space<vmem>>, vector<16x256xf32>
    %c0_2 = arith.constant 0 : index
    %c0_3 = arith.constant 0 : index
    %4 = vector.load %arg3[%c0_2, %c0_3] : memref<16x128xbf16, #tpu.memory_space<vmem>>, vector<16x128xbf16>
    %c0_4 = arith.constant 0 : index
    %c0_5 = arith.constant 0 : index
    %5 = vector.load %arg4[%c0_4, %c0_5] : memref<128x256xbf16, #tpu.memory_space<vmem>>, vector<128x256xbf16>
    %cst = arith.constant dense<0.000000e+00> : vector<16x256xf32>
    %6 = tpu.matmul %4, %5, %cst {dimension_numbers = #tpu.dot_dimension_numbers<[1], [0], [0], [1], [0, 0, 1, 1], [], []>} : vector<16x128xbf16>, vector<128x256xbf16>, vector<16x256xf32> -> vector<16x256xf32>
    %7 = arith.addf %3, %6 : vector<16x256xf32>
    %c0_6 = arith.constant 0 : index
    %c0_7 = arith.constant 0 : index
    %8 = vector.load %arg7[%c0_6, %c0_7] : memref<16x256xf32, #tpu.memory_space<vmem>>, vector<16x256xf32>
    tpu.vector_store %arg7[%c0_6, %c0_7], %7 {strides = array<i32>} : memref<16x256xf32, #tpu.memory_space<vmem>>, vector<16x256xf32>,
    %c0_i32_8 = arith.constant 0 : i32
    %9 = arith.cmpi eq, %arg2, %c0_i32_8 : i32
    %10 = arith.extui %9 : i1 to i32
    %c0_i32_9 = arith.constant 0 : i32
    %11 = arith.cmpi ne, %10, %c0_i32_9 : i32
    scf.if %11 {
      %c0_10 = arith.constant 0 : index
      %c0_11 = arith.constant 0 : index
      %12 = vector.load %arg7[%c0_10, %c0_11] : memref<16x256xf32, #tpu.memory_space<vmem>>, vector<16x256xf32>
      %c0_12 = arith.constant 0 : index
      %c0_13 = arith.constant 0 : index
      %13 = vector.load %arg5[%c0_12, %c0_13] : memref<1x256xf32, #tpu.memory_space<vmem>>, vector<1x256xf32>
      %14 = vector.broadcast %13 : vector<1x256xf32> to vector<16x256xf32>
      %15 = arith.addf %12, %14 : vector<16x256xf32>
      %16 = arith.truncf %15 : vector<16x256xf32> to vector<16x256xbf16>
      %c0_14 = arith.constant 0 : index
      %c0_15 = arith.constant 0 : index
      %17 = vector.load %arg6[%c0_14, %c0_15] : memref<16x256xbf16, #tpu.memory_space<vmem>>, vector<16x256xbf16>
      tpu.vector_store %arg6[%c0_14, %c0_15], %16 {strides = array<i32>} : memref<16x256xbf16, #tpu.memory_space<vmem>>, vector<16x256xbf16>,
    } else {
    }
    return
  }
  func.func @transform_0(%arg0: i32, %arg1: i32, %arg2: i32) -> (i32, i32) {
    %c0_i32 = arith.constant 0 : i32
    return %arg0, %arg2 : i32, i32
  }
  func.func @transform_1(%arg0: i32, %arg1: i32, %arg2: i32) -> (i32, i32) {
    %c0_i32 = arith.constant 0 : i32
    return %arg2, %arg1 : i32, i32
  }
  func.func @transform_2(%arg0: i32, %arg1: i32, %arg2: i32) -> (i32, i32) {
    %c0_i32 = arith.constant 0 : i32
    %c0_i32_0 = arith.constant 0 : i32
    return %c0_i32, %arg1 : i32, i32
  }
  func.func @transform_3(%arg0: i32, %arg1: i32, %arg2: i32) -> (i32, i32) {
    %c0_i32 = arith.constant 0 : i32
    return %arg0, %arg1 : i32, i32
  }
}

module attributes {stable_mosaic.version = 11 : i64} {
  func.func @_layernorm_kernel(%arg0: i32, %arg1: memref<16x128xf32, #tpu.memory_space<vmem>>, %arg2: memref<1x128xf32, #tpu.memory_space<vmem>>, %arg3: memref<1x128xf32, #tpu.memory_space<vmem>>, %arg4: memref<16x128xbf16, #tpu.memory_space<vmem>>) attributes {dimension_semantics = [#tpu.dimension_semantics<parallel>], iteration_bounds = array<i64: 1>, scalar_prefetch = 0 : i64, scratch_operands = 0 : i64, tpu.core_type = #tpu.core_type<tc>, window_params = [{transform_indices = @transform_0, window_bounds = array<i64: 16, 128>}, {pipeline_mode = #tpu.pipeline_mode<synchronous>, transform_indices = @transform_1, window_bounds = array<i64: 1, 128>}, {pipeline_mode = #tpu.pipeline_mode<synchronous>, transform_indices = @transform_2, window_bounds = array<i64: 1, 128>}, {transform_indices = @transform_3, window_bounds = array<i64: 16, 128>}]} {
    %c0 = arith.constant 0 : index
    %c0_0 = arith.constant 0 : index
    %0 = vector.load %arg1[%c0, %c0_0] : memref<16x128xf32, #tpu.memory_space<vmem>>, vector<16x128xf32>
    %cst = arith.constant dense<0.000000e+00> : vector<16xf32>
    %1 = vector.multi_reduction <add>, %0, %cst [1] : vector<16x128xf32> to vector<16xf32>
    %2 = vector.shape_cast %1 : vector<16xf32> to vector<16x1xf32>
    %cst_1 = arith.constant 1.280000e+02 : f32
    %3 = vector.broadcast %cst_1 : f32 to vector<16x1xf32>
    %4 = arith.divf %2, %3 : vector<16x1xf32>
    %5 = vector.broadcast %4 : vector<16x1xf32> to vector<16x128xf32>
    %6 = arith.subf %0, %5 : vector<16x128xf32>
    %7 = arith.mulf %6, %6 : vector<16x128xf32>
    %cst_2 = arith.constant dense<0.000000e+00> : vector<16xf32>
    %8 = vector.multi_reduction <add>, %7, %cst_2 [1] : vector<16x128xf32> to vector<16xf32>
    %9 = vector.shape_cast %8 : vector<16xf32> to vector<16x1xf32>
    %cst_3 = arith.constant 1.280000e+02 : f32
    %10 = vector.broadcast %cst_3 : f32 to vector<16x1xf32>
    %11 = arith.divf %9, %10 : vector<16x1xf32>
    %12 = vector.broadcast %4 : vector<16x1xf32> to vector<16x128xf32>
    %13 = arith.subf %0, %12 : vector<16x128xf32>
    %cst_4 = arith.constant 9.99999974E-6 : f32
    %14 = vector.broadcast %cst_4 : f32 to vector<16x1xf32>
    %15 = arith.addf %11, %14 : vector<16x1xf32>
    %16 = math.rsqrt %15 : vector<16x1xf32>
    %17 = vector.broadcast %16 : vector<16x1xf32> to vector<16x128xf32>
    %18 = arith.mulf %13, %17 : vector<16x128xf32>
    %c0_5 = arith.constant 0 : index
    %c0_6 = arith.constant 0 : index
    %19 = vector.load %arg2[%c0_5, %c0_6] : memref<1x128xf32, #tpu.memory_space<vmem>>, vector<1x128xf32>
    %20 = vector.broadcast %19 : vector<1x128xf32> to vector<16x128xf32>
    %21 = arith.mulf %18, %20 : vector<16x128xf32>
    %c0_7 = arith.constant 0 : index
    %c0_8 = arith.constant 0 : index
    %22 = vector.load %arg3[%c0_7, %c0_8] : memref<1x128xf32, #tpu.memory_space<vmem>>, vector<1x128xf32>
    %23 = vector.broadcast %22 : vector<1x128xf32> to vector<16x128xf32>
    %24 = arith.addf %21, %23 : vector<16x128xf32>
    %25 = arith.truncf %24 : vector<16x128xf32> to vector<16x128xbf16>
    %c0_9 = arith.constant 0 : index
    %c0_10 = arith.constant 0 : index
    %26 = vector.load %arg4[%c0_9, %c0_10] : memref<16x128xbf16, #tpu.memory_space<vmem>>, vector<16x128xbf16>
    tpu.vector_store %arg4[%c0_9, %c0_10], %25 {strides = array<i32>} : memref<16x128xbf16, #tpu.memory_space<vmem>>, vector<16x128xbf16>,
    return
  }
  func.func @transform_0(%arg0: i32) -> (i32, i32) {
    %c0_i32 = arith.constant 0 : i32
    %c0_i32_0 = arith.constant 0 : i32
    return %arg0, %c0_i32 : i32, i32
  }
  func.func @transform_1(%arg0: i32) -> (i32, i32) {
    %c0_i32 = arith.constant 0 : i32
    %c0_i32_0 = arith.constant 0 : i32
    %c0_i32_1 = arith.constant 0 : i32
    return %c0_i32, %c0_i32_0 : i32, i32
  }
  func.func @transform_2(%arg0: i32) -> (i32, i32) {
    %c0_i32 = arith.constant 0 : i32
    %c0_i32_0 = arith.constant 0 : i32
    %c0_i32_1 = arith.constant 0 : i32
    return %c0_i32, %c0_i32_0 : i32, i32
  }
  func.func @transform_3(%arg0: i32) -> (i32, i32) {
    %c0_i32 = arith.constant 0 : i32
    %c0_i32_0 = arith.constant 0 : i32
    return %arg0, %c0_i32 : i32, i32
  }
}

module attributes {stable_mosaic.version = 11 : i64} {
  func.func @_linear_kernel(%arg0: i32, %arg1: i32, %arg2: i32, %arg3: memref<16x128xbf16, #tpu.memory_space<vmem>>, %arg4: memref<128x128xbf16, #tpu.memory_space<vmem>>, %arg5: memref<1x128xf32, #tpu.memory_space<vmem>>, %arg6: memref<16x128xbf16, #tpu.memory_space<vmem>>, %arg7: memref<16x128xf32, #tpu.memory_space<vmem>>) attributes {dimension_semantics = [#tpu.dimension_semantics<parallel>, #tpu.dimension_semantics<parallel>, #tpu.dimension_semantics<arbitrary>], iteration_bounds = array<i64: 1, 1, 1>, scalar_prefetch = 0 : i64, scratch_operands = 1 : i64, tpu.core_type = #tpu.core_type<tc>, window_params = [{transform_indices = @transform_0, window_bounds = array<i64: 16, 128>}, {transform_indices = @transform_1, window_bounds = array<i64: 128, 128>}, {transform_indices = @transform_2, window_bounds = array<i64: 1, 128>}, {transform_indices = @transform_3, window_bounds = array<i64: 16, 128>}]} {
    %c0_i32 = arith.constant 0 : i32
    %0 = arith.cmpi eq, %arg2, %c0_i32 : i32
    %1 = arith.extui %0 : i1 to i32
    %c0_i32_0 = arith.constant 0 : i32
    %2 = arith.cmpi ne, %1, %c0_i32_0 : i32
    scf.if %2 {
      %cst_10 = arith.constant 0.000000e+00 : f32
      %12 = vector.broadcast %cst_10 : f32 to vector<16x128xf32>
      %c0_11 = arith.constant 0 : index
      %c0_12 = arith.constant 0 : index
      %13 = vector.load %arg7[%c0_11, %c0_12] : memref<16x128xf32, #tpu.memory_space<vmem>>, vector<16x128xf32>
      tpu.vector_store %arg7[%c0_11, %c0_12], %12 {strides = array<i32>} : memref<16x128xf32, #tpu.memory_space<vmem>>, vector<16x128xf32>,
    } else {
    }
    %c0 = arith.constant 0 : index
    %c0_1 = arith.constant 0 : index
    %3 = vector.load %arg7[%c0, %c0_1] : memref<16x128xf32, #tpu.memory_space<vmem>>, vector<16x128xf32>
    %c0_2 = arith.constant 0 : index
    %c0_3 = arith.constant 0 : index
    %4 = vector.load %arg3[%c0_2, %c0_3] : memref<16x128xbf16, #tpu.memory_space<vmem>>, vector<16x128xbf16>
    %c0_4 = arith.constant 0 : index
    %c0_5 = arith.constant 0 : index
    %5 = vector.load %arg4[%c0_4, %c0_5] : memref<128x128xbf16, #tpu.memory_space<vmem>>, vector<128x128xbf16>
    %cst = arith.constant dense<0.000000e+00> : vector<16x128xf32>
    %6 = tpu.matmul %4, %5, %cst {dimension_numbers = #tpu.dot_dimension_numbers<[1], [0], [0], [1], [0, 0, 1, 1], [], []>} : vector<16x128xbf16>, vector<128x128xbf16>, vector<16x128xf32> -> vector<16x128xf32>
    %7 = arith.addf %3, %6 : vector<16x128xf32>
    %c0_6 = arith.constant 0 : index
    %c0_7 = arith.constant 0 : index
    %8 = vector.load %arg7[%c0_6, %c0_7] : memref<16x128xf32, #tpu.memory_space<vmem>>, vector<16x128xf32>
    tpu.vector_store %arg7[%c0_6, %c0_7], %7 {strides = array<i32>} : memref<16x128xf32, #tpu.memory_space<vmem>>, vector<16x128xf32>,
    %c0_i32_8 = arith.constant 0 : i32
    %9 = arith.cmpi eq, %arg2, %c0_i32_8 : i32
    %10 = arith.extui %9 : i1 to i32
    %c0_i32_9 = arith.constant 0 : i32
    %11 = arith.cmpi ne, %10, %c0_i32_9 : i32
    scf.if %11 {
      %c0_10 = arith.constant 0 : index
      %c0_11 = arith.constant 0 : index
      %12 = vector.load %arg7[%c0_10, %c0_11] : memref<16x128xf32, #tpu.memory_space<vmem>>, vector<16x128xf32>
      %c0_12 = arith.constant 0 : index
      %c0_13 = arith.constant 0 : index
      %13 = vector.load %arg5[%c0_12, %c0_13] : memref<1x128xf32, #tpu.memory_space<vmem>>, vector<1x128xf32>
      %14 = vector.broadcast %13 : vector<1x128xf32> to vector<16x128xf32>
      %15 = arith.addf %12, %14 : vector<16x128xf32>
      %16 = arith.truncf %15 : vector<16x128xf32> to vector<16x128xbf16>
      %c0_14 = arith.constant 0 : index
      %c0_15 = arith.constant 0 : index
      %17 = vector.load %arg6[%c0_14, %c0_15] : memref<16x128xbf16, #tpu.memory_space<vmem>>, vector<16x128xbf16>
      tpu.vector_store %arg6[%c0_14, %c0_15], %16 {strides = array<i32>} : memref<16x128xbf16, #tpu.memory_space<vmem>>, vector<16x128xbf16>,
    } else {
    }
    return
  }
  func.func @transform_0(%arg0: i32, %arg1: i32, %arg2: i32) -> (i32, i32) {
    %c0_i32 = arith.constant 0 : i32
    return %arg0, %arg2 : i32, i32
  }
  func.func @transform_1(%arg0: i32, %arg1: i32, %arg2: i32) -> (i32, i32) {
    %c0_i32 = arith.constant 0 : i32
    return %arg2, %arg1 : i32, i32
  }
  func.func @transform_2(%arg0: i32, %arg1: i32, %arg2: i32) -> (i32, i32) {
    %c0_i32 = arith.constant 0 : i32
    %c0_i32_0 = arith.constant 0 : i32
    return %c0_i32, %arg1 : i32, i32
  }
  func.func @transform_3(%arg0: i32, %arg1: i32, %arg2: i32) -> (i32, i32) {
    %c0_i32 = arith.constant 0 : i32
    return %arg0, %arg1 : i32, i32
  }
}

module attributes {stable_mosaic.version = 11 : i64} {
  func.func @_mha_kernel(%arg0: i32, %arg1: memref<1x8x128xbf16, #tpu.memory_space<vmem>>, %arg2: memref<1x8x128xbf16, #tpu.memory_space<vmem>>, %arg3: memref<1x8x128xbf16, #tpu.memory_space<vmem>>, %arg4: memref<1x8x8xf32, #tpu.memory_space<vmem>>, %arg5: memref<1x8x128xbf16, #tpu.memory_space<vmem>>) attributes {dimension_semantics = [#tpu.dimension_semantics<parallel>], iteration_bounds = array<i64: 2>, scalar_prefetch = 0 : i64, scratch_operands = 0 : i64, tpu.core_type = #tpu.core_type<tc>, window_params = [{transform_indices = @transform_0, window_bounds = array<i64: 1, 8, 128>}, {transform_indices = @transform_1, window_bounds = array<i64: 1, 8, 128>}, {transform_indices = @transform_2, window_bounds = array<i64: 1, 8, 128>}, {pipeline_mode = #tpu.pipeline_mode<synchronous>, transform_indices = @transform_3, window_bounds = array<i64: 1, 8, 8>}, {transform_indices = @transform_4, window_bounds = array<i64: 1, 8, 128>}]} {
    %c0 = arith.constant 0 : index
    %c0_0 = arith.constant 0 : index
    %c0_1 = arith.constant 0 : index
    %0 = vector.load %arg1[%c0, %c0_0, %c0_1] : memref<1x8x128xbf16, #tpu.memory_space<vmem>>, vector<1x8x128xbf16>
    %1 = vector.shape_cast %0 : vector<1x8x128xbf16> to vector<8x128xbf16>
    %cst = arith.constant 1.767580e-01 : bf16
    %2 = vector.broadcast %cst : bf16 to vector<8x128xbf16>
    %3 = arith.mulf %1, %2 : vector<8x128xbf16>
    %c0_2 = arith.constant 0 : index
    %c0_3 = arith.constant 0 : index
    %c0_4 = arith.constant 0 : index
    %4 = vector.load %arg2[%c0_2, %c0_3, %c0_4] : memref<1x8x128xbf16, #tpu.memory_space<vmem>>, vector<1x8x128xbf16>
    %5 = vector.shape_cast %4 : vector<1x8x128xbf16> to vector<8x128xbf16>
    %c0_5 = arith.constant 0 : index
    %c0_6 = arith.constant 0 : index
    %c0_7 = arith.constant 0 : index
    %6 = vector.load %arg3[%c0_5, %c0_6, %c0_7] : memref<1x8x128xbf16, #tpu.memory_space<vmem>>, vector<1x8x128xbf16>
    %7 = vector.shape_cast %6 : vector<1x8x128xbf16> to vector<8x128xbf16>
    %c0_8 = arith.constant 0 : index
    %c0_9 = arith.constant 0 : index
    %c0_10 = arith.constant 0 : index
    %8 = vector.load %arg4[%c0_8, %c0_9, %c0_10] : memref<1x8x8xf32, #tpu.memory_space<vmem>>, vector<1x8x8xf32>
    %9 = vector.shape_cast %8 : vector<1x8x8xf32> to vector<8x8xf32>
    %10 = vector.extract_strided_slice %3 {offsets = [0, 0], sizes = [8, 32], strides = [1, 1]} : vector<8x128xbf16> to vector<8x32xbf16>
    %11 = vector.extract_strided_slice %5 {offsets = [0, 0], sizes = [8, 32], strides = [1, 1]} : vector<8x128xbf16> to vector<8x32xbf16>
    %cst_11 = arith.constant dense<0.000000e+00> : vector<8x8xf32>
    %12 = tpu.matmul %10, %11, %cst_11 {dimension_numbers = #tpu.dot_dimension_numbers<[1], [1], [0], [0], [0, 0, 1, 0], [], []>} : vector<8x32xbf16>, vector<8x32xbf16>, vector<8x8xf32> -> vector<8x8xf32>
    %13 = arith.addf %12, %9 : vector<8x8xf32>
    %cst_12 = arith.constant dense<0xFF800000> : vector<8xf32>
    %14 = vector.multi_reduction <maximumf>, %13, %cst_12 [1] : vector<8x8xf32> to vector<8xf32>
    %15 = vector.shape_cast %14 : vector<8xf32> to vector<8x1xf32>
    %16 = vector.broadcast %15 : vector<8x1xf32> to vector<8x8xf32>
    %17 = arith.subf %13, %16 : vector<8x8xf32>
    %18 = math.exp %17 : vector<8x8xf32>
    %cst_13 = arith.constant dense<0.000000e+00> : vector<8xf32>
    %19 = vector.multi_reduction <add>, %18, %cst_13 [1] : vector<8x8xf32> to vector<8xf32>
    %20 = vector.shape_cast %19 : vector<8xf32> to vector<8x1xf32>
    %21 = tpu.reciprocal %20 {approx = true} : vector<8x1xf32> -> vector<8x1xf32>
    %22 = vector.broadcast %21 : vector<8x1xf32> to vector<8x8xf32>
    %23 = arith.mulf %18, %22 : vector<8x8xf32>
    %24 = arith.truncf %23 : vector<8x8xf32> to vector<8x8xbf16>
    %25 = vector.extract_strided_slice %7 {offsets = [0, 0], sizes = [8, 32], strides = [1, 1]} : vector<8x128xbf16> to vector<8x32xbf16>
    %cst_14 = arith.constant dense<0.000000e+00> : vector<8x32xf32>
    %26 = tpu.matmul %24, %25, %cst_14 {dimension_numbers = #tpu.dot_dimension_numbers<[1], [0], [0], [1], [0, 0, 1, 1], [], []>} : vector<8x8xbf16>, vector<8x32xbf16>, vector<8x32xf32> -> vector<8x32xf32>
    %27 = vector.extract_strided_slice %3 {offsets = [0, 32], sizes = [8, 32], strides = [1, 1]} : vector<8x128xbf16> to vector<8x32xbf16>
    %28 = vector.extract_strided_slice %5 {offsets = [0, 32], sizes = [8, 32], strides = [1, 1]} : vector<8x128xbf16> to vector<8x32xbf16>
    %cst_15 = arith.constant dense<0.000000e+00> : vector<8x8xf32>
    %29 = tpu.matmul %27, %28, %cst_15 {dimension_numbers = #tpu.dot_dimension_numbers<[1], [1], [0], [0], [0, 0, 1, 0], [], []>} : vector<8x32xbf16>, vector<8x32xbf16>, vector<8x8xf32> -> vector<8x8xf32>
    %30 = arith.addf %29, %9 : vector<8x8xf32>
    %cst_16 = arith.constant dense<0xFF800000> : vector<8xf32>
    %31 = vector.multi_reduction <maximumf>, %30, %cst_16 [1] : vector<8x8xf32> to vector<8xf32>
    %32 = vector.shape_cast %31 : vector<8xf32> to vector<8x1xf32>
    %33 = vector.broadcast %32 : vector<8x1xf32> to vector<8x8xf32>
    %34 = arith.subf %30, %33 : vector<8x8xf32>
    %35 = math.exp %34 : vector<8x8xf32>
    %cst_17 = arith.constant dense<0.000000e+00> : vector<8xf32>
    %36 = vector.multi_reduction <add>, %35, %cst_17 [1] : vector<8x8xf32> to vector<8xf32>
    %37 = vector.shape_cast %36 : vector<8xf32> to vector<8x1xf32>
    %38 = tpu.reciprocal %37 {approx = true} : vector<8x1xf32> -> vector<8x1xf32>
    %39 = vector.broadcast %38 : vector<8x1xf32> to vector<8x8xf32>
    %40 = arith.mulf %35, %39 : vector<8x8xf32>
    %41 = arith.truncf %40 : vector<8x8xf32> to vector<8x8xbf16>
    %42 = vector.extract_strided_slice %7 {offsets = [0, 32], sizes = [8, 32], strides = [1, 1]} : vector<8x128xbf16> to vector<8x32xbf16>
    %cst_18 = arith.constant dense<0.000000e+00> : vector<8x32xf32>
    %43 = tpu.matmul %41, %42, %cst_18 {dimension_numbers = #tpu.dot_dimension_numbers<[1], [0], [0], [1], [0, 0, 1, 1], [], []>} : vector<8x8xbf16>, vector<8x32xbf16>, vector<8x32xf32> -> vector<8x32xf32>
    %44 = vector.extract_strided_slice %3 {offsets = [0, 64], sizes = [8, 32], strides = [1, 1]} : vector<8x128xbf16> to vector<8x32xbf16>
    %45 = vector.extract_strided_slice %5 {offsets = [0, 64], sizes = [8, 32], strides = [1, 1]} : vector<8x128xbf16> to vector<8x32xbf16>
    %cst_19 = arith.constant dense<0.000000e+00> : vector<8x8xf32>
    %46 = tpu.matmul %44, %45, %cst_19 {dimension_numbers = #tpu.dot_dimension_numbers<[1], [1], [0], [0], [0, 0, 1, 0], [], []>} : vector<8x32xbf16>, vector<8x32xbf16>, vector<8x8xf32> -> vector<8x8xf32>
    %47 = arith.addf %46, %9 : vector<8x8xf32>
    %cst_20 = arith.constant dense<0xFF800000> : vector<8xf32>
    %48 = vector.multi_reduction <maximumf>, %47, %cst_20 [1] : vector<8x8xf32> to vector<8xf32>
    %49 = vector.shape_cast %48 : vector<8xf32> to vector<8x1xf32>
    %50 = vector.broadcast %49 : vector<8x1xf32> to vector<8x8xf32>
    %51 = arith.subf %47, %50 : vector<8x8xf32>
    %52 = math.exp %51 : vector<8x8xf32>
    %cst_21 = arith.constant dense<0.000000e+00> : vector<8xf32>
    %53 = vector.multi_reduction <add>, %52, %cst_21 [1] : vector<8x8xf32> to vector<8xf32>
    %54 = vector.shape_cast %53 : vector<8xf32> to vector<8x1xf32>
    %55 = tpu.reciprocal %54 {approx = true} : vector<8x1xf32> -> vector<8x1xf32>
    %56 = vector.broadcast %55 : vector<8x1xf32> to vector<8x8xf32>
    %57 = arith.mulf %52, %56 : vector<8x8xf32>
    %58 = arith.truncf %57 : vector<8x8xf32> to vector<8x8xbf16>
    %59 = vector.extract_strided_slice %7 {offsets = [0, 64], sizes = [8, 32], strides = [1, 1]} : vector<8x128xbf16> to vector<8x32xbf16>
    %cst_22 = arith.constant dense<0.000000e+00> : vector<8x32xf32>
    %60 = tpu.matmul %58, %59, %cst_22 {dimension_numbers = #tpu.dot_dimension_numbers<[1], [0], [0], [1], [0, 0, 1, 1], [], []>} : vector<8x8xbf16>, vector<8x32xbf16>, vector<8x32xf32> -> vector<8x32xf32>
    %61 = vector.extract_strided_slice %3 {offsets = [0, 96], sizes = [8, 32], strides = [1, 1]} : vector<8x128xbf16> to vector<8x32xbf16>
    %62 = vector.extract_strided_slice %5 {offsets = [0, 96], sizes = [8, 32], strides = [1, 1]} : vector<8x128xbf16> to vector<8x32xbf16>
    %cst_23 = arith.constant dense<0.000000e+00> : vector<8x8xf32>
    %63 = tpu.matmul %61, %62, %cst_23 {dimension_numbers = #tpu.dot_dimension_numbers<[1], [1], [0], [0], [0, 0, 1, 0], [], []>} : vector<8x32xbf16>, vector<8x32xbf16>, vector<8x8xf32> -> vector<8x8xf32>
    %64 = arith.addf %63, %9 : vector<8x8xf32>
    %cst_24 = arith.constant dense<0xFF800000> : vector<8xf32>
    %65 = vector.multi_reduction <maximumf>, %64, %cst_24 [1] : vector<8x8xf32> to vector<8xf32>
    %66 = vector.shape_cast %65 : vector<8xf32> to vector<8x1xf32>
    %67 = vector.broadcast %66 : vector<8x1xf32> to vector<8x8xf32>
    %68 = arith.subf %64, %67 : vector<8x8xf32>
    %69 = math.exp %68 : vector<8x8xf32>
    %cst_25 = arith.constant dense<0.000000e+00> : vector<8xf32>
    %70 = vector.multi_reduction <add>, %69, %cst_25 [1] : vector<8x8xf32> to vector<8xf32>
    %71 = vector.shape_cast %70 : vector<8xf32> to vector<8x1xf32>
    %72 = tpu.reciprocal %71 {approx = true} : vector<8x1xf32> -> vector<8x1xf32>
    %73 = vector.broadcast %72 : vector<8x1xf32> to vector<8x8xf32>
    %74 = arith.mulf %69, %73 : vector<8x8xf32>
    %75 = arith.truncf %74 : vector<8x8xf32> to vector<8x8xbf16>
    %76 = vector.extract_strided_slice %7 {offsets = [0, 96], sizes = [8, 32], strides = [1, 1]} : vector<8x128xbf16> to vector<8x32xbf16>
    %cst_26 = arith.constant dense<0.000000e+00> : vector<8x32xf32>
    %77 = tpu.matmul %75, %76, %cst_26 {dimension_numbers = #tpu.dot_dimension_numbers<[1], [0], [0], [1], [0, 0, 1, 1], [], []>} : vector<8x8xbf16>, vector<8x32xbf16>, vector<8x32xf32> -> vector<8x32xf32>
    %78 = tpu.concatenate %26, %43, %60, %77 in 1 : vector<8x32xf32>, vector<8x32xf32>, vector<8x32xf32>, vector<8x32xf32> -> vector<8x128xf32>
    %79 = arith.truncf %78 : vector<8x128xf32> to vector<8x128xbf16>
    %c0_27 = arith.constant 0 : index
    %c0_28 = arith.constant 0 : index
    %c0_29 = arith.constant 0 : index
    %80 = vector.load %arg5[%c0_27, %c0_28, %c0_29] : memref<1x8x128xbf16, #tpu.memory_space<vmem>>, vector<1x8x128xbf16>
    %81 = vector.shape_cast %80 : vector<1x8x128xbf16> to vector<8x128xbf16>
    %82 = vector.shape_cast %79 : vector<8x128xbf16> to vector<1x8x128xbf16>
    tpu.vector_store %arg5[%c0_27, %c0_28, %c0_29], %82 {strides = array<i32>} : memref<1x8x128xbf16, #tpu.memory_space<vmem>>, vector<1x8x128xbf16>,
    return
  }
  func.func @transform_0(%arg0: i32) -> (i32, i32, i32) {
    %c0_i32 = arith.constant 0 : i32
    %c0_i32_0 = arith.constant 0 : i32
    %c0_i32_1 = arith.constant 0 : i32
    return %arg0, %c0_i32, %c0_i32_0 : i32, i32, i32
  }
  func.func @transform_1(%arg0: i32) -> (i32, i32, i32) {
    %c0_i32 = arith.constant 0 : i32
    %c1_i32 = arith.constant 1 : i32
    %c0_i32_0 = arith.constant 0 : i32
    return %arg0, %c0_i32, %c1_i32 : i32, i32, i32
  }
  func.func @transform_2(%arg0: i32) -> (i32, i32, i32) {
    %c0_i32 = arith.constant 0 : i32
    %c2_i32 = arith.constant 2 : i32
    %c0_i32_0 = arith.constant 0 : i32
    return %arg0, %c0_i32, %c2_i32 : i32, i32, i32
  }
  func.func @transform_3(%arg0: i32) -> (i32, i32, i32) {
    %c0_i32 = arith.constant 0 : i32
    %c0_i32_0 = arith.constant 0 : i32
    %c0_i32_1 = arith.constant 0 : i32
    %c0_i32_2 = arith.constant 0 : i32
    return %c0_i32, %c0_i32_0, %c0_i32_1 : i32, i32, i32
  }
  func.func @transform_4(%arg0: i32) -> (i32, i32, i32) {
    %c0_i32 = arith.constant 0 : i32
    %c0_i32_0 = arith.constant 0 : i32
    %c0_i32_1 = arith.constant 0 : i32
    return %arg0, %c0_i32, %c0_i32_0 : i32, i32, i32
  }
}

module attributes {stable_mosaic.version = 11 : i64} {
  func.func @_layernorm_kernel(%arg0: i32, %arg1: memref<16x128xbf16, #tpu.memory_space<vmem>>, %arg2: memref<16x128xbf16, #tpu.memory_space<vmem>>, %arg3: memref<1x128xf32, #tpu.memory_space<vmem>>, %arg4: memref<1x128xf32, #tpu.memory_space<vmem>>, %arg5: memref<16x128xbf16, #tpu.memory_space<vmem>>) attributes {dimension_semantics = [#tpu.dimension_semantics<parallel>], iteration_bounds = array<i64: 1>, scalar_prefetch = 0 : i64, scratch_operands = 0 : i64, tpu.core_type = #tpu.core_type<tc>, window_params = [{transform_indices = @transform_0, window_bounds = array<i64: 16, 128>}, {transform_indices = @transform_1, window_bounds = array<i64: 16, 128>}, {pipeline_mode = #tpu.pipeline_mode<synchronous>, transform_indices = @transform_2, window_bounds = array<i64: 1, 128>}, {pipeline_mode = #tpu.pipeline_mode<synchronous>, transform_indices = @transform_3, window_bounds = array<i64: 1, 128>}, {transform_indices = @transform_4, window_bounds = array<i64: 16, 128>}]} {
    %c0 = arith.constant 0 : index
    %c0_0 = arith.constant 0 : index
    %0 = vector.load %arg1[%c0, %c0_0] : memref<16x128xbf16, #tpu.memory_space<vmem>>, vector<16x128xbf16>
    %1 = arith.extf %0 : vector<16x128xbf16> to vector<16x128xf32>
    %c0_1 = arith.constant 0 : index
    %c0_2 = arith.constant 0 : index
    %2 = vector.load %arg2[%c0_1, %c0_2] : memref<16x128xbf16, #tpu.memory_space<vmem>>, vector<16x128xbf16>
    %3 = arith.extf %2 : vector<16x128xbf16> to vector<16x128xf32>
    %4 = arith.addf %1, %3 : vector<16x128xf32>
    %cst = arith.constant dense<0.000000e+00> : vector<16xf32>
    %5 = vector.multi_reduction <add>, %4, %cst [1] : vector<16x128xf32> to vector<16xf32>
    %6 = vector.shape_cast %5 : vector<16xf32> to vector<16x1xf32>
    %cst_3 = arith.constant 1.280000e+02 : f32
    %7 = vector.broadcast %cst_3 : f32 to vector<16x1xf32>
    %8 = arith.divf %6, %7 : vector<16x1xf32>
    %9 = vector.broadcast %8 : vector<16x1xf32> to vector<16x128xf32>
    %10 = arith.subf %4, %9 : vector<16x128xf32>
    %11 = arith.mulf %10, %10 : vector<16x128xf32>
    %cst_4 = arith.constant dense<0.000000e+00> : vector<16xf32>
    %12 = vector.multi_reduction <add>, %11, %cst_4 [1] : vector<16x128xf32> to vector<16xf32>
    %13 = vector.shape_cast %12 : vector<16xf32> to vector<16x1xf32>
    %cst_5 = arith.constant 1.280000e+02 : f32
    %14 = vector.broadcast %cst_5 : f32 to vector<16x1xf32>
    %15 = arith.divf %13, %14 : vector<16x1xf32>
    %16 = vector.broadcast %8 : vector<16x1xf32> to vector<16x128xf32>
    %17 = arith.subf %4, %16 : vector<16x128xf32>
    %cst_6 = arith.constant 9.99999974E-6 : f32
    %18 = vector.broadcast %cst_6 : f32 to vector<16x1xf32>
    %19 = arith.addf %15, %18 : vector<16x1xf32>
    %20 = math.rsqrt %19 : vector<16x1xf32>
    %21 = vector.broadcast %20 : vector<16x1xf32> to vector<16x128xf32>
    %22 = arith.mulf %17, %21 : vector<16x128xf32>
    %c0_7 = arith.constant 0 : index
    %c0_8 = arith.constant 0 : index
    %23 = vector.load %arg3[%c0_7, %c0_8] : memref<1x128xf32, #tpu.memory_space<vmem>>, vector<1x128xf32>
    %24 = vector.broadcast %23 : vector<1x128xf32> to vector<16x128xf32>
    %25 = arith.mulf %22, %24 : vector<16x128xf32>
    %c0_9 = arith.constant 0 : index
    %c0_10 = arith.constant 0 : index
    %26 = vector.load %arg4[%c0_9, %c0_10] : memref<1x128xf32, #tpu.memory_space<vmem>>, vector<1x128xf32>
    %27 = vector.broadcast %26 : vector<1x128xf32> to vector<16x128xf32>
    %28 = arith.addf %25, %27 : vector<16x128xf32>
    %29 = arith.truncf %28 : vector<16x128xf32> to vector<16x128xbf16>
    %c0_11 = arith.constant 0 : index
    %c0_12 = arith.constant 0 : index
    %30 = vector.load %arg5[%c0_11, %c0_12] : memref<16x128xbf16, #tpu.memory_space<vmem>>, vector<16x128xbf16>
    tpu.vector_store %arg5[%c0_11, %c0_12], %29 {strides = array<i32>} : memref<16x128xbf16, #tpu.memory_space<vmem>>, vector<16x128xbf16>,
    return
  }
  func.func @transform_0(%arg0: i32) -> (i32, i32) {
    %c0_i32 = arith.constant 0 : i32
    %c0_i32_0 = arith.constant 0 : i32
    return %arg0, %c0_i32 : i32, i32
  }
  func.func @transform_1(%arg0: i32) -> (i32, i32) {
    %c0_i32 = arith.constant 0 : i32
    %c0_i32_0 = arith.constant 0 : i32
    return %arg0, %c0_i32 : i32, i32
  }
  func.func @transform_2(%arg0: i32) -> (i32, i32) {
    %c0_i32 = arith.constant 0 : i32
    %c0_i32_0 = arith.constant 0 : i32
    %c0_i32_1 = arith.constant 0 : i32
    return %c0_i32, %c0_i32_0 : i32, i32
  }
  func.func @transform_3(%arg0: i32) -> (i32, i32) {
    %c0_i32 = arith.constant 0 : i32
    %c0_i32_0 = arith.constant 0 : i32
    %c0_i32_1 = arith.constant 0 : i32
    return %c0_i32, %c0_i32_0 : i32, i32
  }
  func.func @transform_4(%arg0: i32) -> (i32, i32) {
    %c0_i32 = arith.constant 0 : i32
    %c0_i32_0 = arith.constant 0 : i32
    return %arg0, %c0_i32 : i32, i32
  }
}

module attributes {stable_mosaic.version = 11 : i64} {
  func.func @_linear_kernel(%arg0: i32, %arg1: i32, %arg2: i32, %arg3: memref<16x128xbf16, #tpu.memory_space<vmem>>, %arg4: memref<128x256xbf16, #tpu.memory_space<vmem>>, %arg5: memref<1x256xf32, #tpu.memory_space<vmem>>, %arg6: memref<16x256xbf16, #tpu.memory_space<vmem>>, %arg7: memref<16x256xf32, #tpu.memory_space<vmem>>) attributes {dimension_semantics = [#tpu.dimension_semantics<parallel>, #tpu.dimension_semantics<parallel>, #tpu.dimension_semantics<arbitrary>], iteration_bounds = array<i64: 1, 1, 1>, scalar_prefetch = 0 : i64, scratch_operands = 1 : i64, tpu.core_type = #tpu.core_type<tc>, window_params = [{transform_indices = @transform_0, window_bounds = array<i64: 16, 128>}, {transform_indices = @transform_1, window_bounds = array<i64: 128, 256>}, {transform_indices = @transform_2, window_bounds = array<i64: 1, 256>}, {transform_indices = @transform_3, window_bounds = array<i64: 16, 256>}]} {
    %c0_i32 = arith.constant 0 : i32
    %0 = arith.cmpi eq, %arg2, %c0_i32 : i32
    %1 = arith.extui %0 : i1 to i32
    %c0_i32_0 = arith.constant 0 : i32
    %2 = arith.cmpi ne, %1, %c0_i32_0 : i32
    scf.if %2 {
      %cst_10 = arith.constant 0.000000e+00 : f32
      %12 = vector.broadcast %cst_10 : f32 to vector<16x256xf32>
      %c0_11 = arith.constant 0 : index
      %c0_12 = arith.constant 0 : index
      %13 = vector.load %arg7[%c0_11, %c0_12] : memref<16x256xf32, #tpu.memory_space<vmem>>, vector<16x256xf32>
      tpu.vector_store %arg7[%c0_11, %c0_12], %12 {strides = array<i32>} : memref<16x256xf32, #tpu.memory_space<vmem>>, vector<16x256xf32>,
    } else {
    }
    %c0 = arith.constant 0 : index
    %c0_1 = arith.constant 0 : index
    %3 = vector.load %arg7[%c0, %c0_1] : memref<16x256xf32, #tpu.memory_space<vmem>>, vector<16x256xf32>
    %c0_2 = arith.constant 0 : index
    %c0_3 = arith.constant 0 : index
    %4 = vector.load %arg3[%c0_2, %c0_3] : memref<16x128xbf16, #tpu.memory_space<vmem>>, vector<16x128xbf16>
    %c0_4 = arith.constant 0 : index
    %c0_5 = arith.constant 0 : index
    %5 = vector.load %arg4[%c0_4, %c0_5] : memref<128x256xbf16, #tpu.memory_space<vmem>>, vector<128x256xbf16>
    %cst = arith.constant dense<0.000000e+00> : vector<16x256xf32>
    %6 = tpu.matmul %4, %5, %cst {dimension_numbers = #tpu.dot_dimension_numbers<[1], [0], [0], [1], [0, 0, 1, 1], [], []>} : vector<16x128xbf16>, vector<128x256xbf16>, vector<16x256xf32> -> vector<16x256xf32>
    %7 = arith.addf %3, %6 : vector<16x256xf32>
    %c0_6 = arith.constant 0 : index
    %c0_7 = arith.constant 0 : index
    %8 = vector.load %arg7[%c0_6, %c0_7] : memref<16x256xf32, #tpu.memory_space<vmem>>, vector<16x256xf32>
    tpu.vector_store %arg7[%c0_6, %c0_7], %7 {strides = array<i32>} : memref<16x256xf32, #tpu.memory_space<vmem>>, vector<16x256xf32>,
    %c0_i32_8 = arith.constant 0 : i32
    %9 = arith.cmpi eq, %arg2, %c0_i32_8 : i32
    %10 = arith.extui %9 : i1 to i32
    %c0_i32_9 = arith.constant 0 : i32
    %11 = arith.cmpi ne, %10, %c0_i32_9 : i32
    scf.if %11 {
      %c0_10 = arith.constant 0 : index
      %c0_11 = arith.constant 0 : index
      %12 = vector.load %arg7[%c0_10, %c0_11] : memref<16x256xf32, #tpu.memory_space<vmem>>, vector<16x256xf32>
      %c0_12 = arith.constant 0 : index
      %c0_13 = arith.constant 0 : index
      %13 = vector.load %arg5[%c0_12, %c0_13] : memref<1x256xf32, #tpu.memory_space<vmem>>, vector<1x256xf32>
      %14 = vector.broadcast %13 : vector<1x256xf32> to vector<16x256xf32>
      %15 = arith.addf %12, %14 : vector<16x256xf32>
      %16 = arith.truncf %15 : vector<16x256xf32> to vector<16x256xbf16>
      %c0_14 = arith.constant 0 : index
      %c0_15 = arith.constant 0 : index
      %17 = vector.load %arg6[%c0_14, %c0_15] : memref<16x256xbf16, #tpu.memory_space<vmem>>, vector<16x256xbf16>
      tpu.vector_store %arg6[%c0_14, %c0_15], %16 {strides = array<i32>} : memref<16x256xbf16, #tpu.memory_space<vmem>>, vector<16x256xbf16>,
    } else {
    }
    return
  }
  func.func @transform_0(%arg0: i32, %arg1: i32, %arg2: i32) -> (i32, i32) {
    %c0_i32 = arith.constant 0 : i32
    return %arg0, %arg2 : i32, i32
  }
  func.func @transform_1(%arg0: i32, %arg1: i32, %arg2: i32) -> (i32, i32) {
    %c0_i32 = arith.constant 0 : i32
    return %arg2, %arg1 : i32, i32
  }
  func.func @transform_2(%arg0: i32, %arg1: i32, %arg2: i32) -> (i32, i32) {
    %c0_i32 = arith.constant 0 : i32
    %c0_i32_0 = arith.constant 0 : i32
    return %c0_i32, %arg1 : i32, i32
  }
  func.func @transform_3(%arg0: i32, %arg1: i32, %arg2: i32) -> (i32, i32) {
    %c0_i32 = arith.constant 0 : i32
    return %arg0, %arg1 : i32, i32
  }
}

module attributes {stable_mosaic.version = 11 : i64} {
  func.func @_linear_kernel(%arg0: i32, %arg1: i32, %arg2: i32, %arg3: memref<16x128xbf16, #tpu.memory_space<vmem>>, %arg4: memref<128x256xbf16, #tpu.memory_space<vmem>>, %arg5: memref<1x256xf32, #tpu.memory_space<vmem>>, %arg6: memref<16x256xbf16, #tpu.memory_space<vmem>>, %arg7: memref<16x256xf32, #tpu.memory_space<vmem>>) attributes {dimension_semantics = [#tpu.dimension_semantics<parallel>, #tpu.dimension_semantics<parallel>, #tpu.dimension_semantics<arbitrary>], iteration_bounds = array<i64: 1, 1, 1>, scalar_prefetch = 0 : i64, scratch_operands = 1 : i64, tpu.core_type = #tpu.core_type<tc>, window_params = [{transform_indices = @transform_0, window_bounds = array<i64: 16, 128>}, {transform_indices = @transform_1, window_bounds = array<i64: 128, 256>}, {transform_indices = @transform_2, window_bounds = array<i64: 1, 256>}, {transform_indices = @transform_3, window_bounds = array<i64: 16, 256>}]} {
    %c0_i32 = arith.constant 0 : i32
    %0 = arith.cmpi eq, %arg2, %c0_i32 : i32
    %1 = arith.extui %0 : i1 to i32
    %c0_i32_0 = arith.constant 0 : i32
    %2 = arith.cmpi ne, %1, %c0_i32_0 : i32
    scf.if %2 {
      %cst_10 = arith.constant 0.000000e+00 : f32
      %12 = vector.broadcast %cst_10 : f32 to vector<16x256xf32>
      %c0_11 = arith.constant 0 : index
      %c0_12 = arith.constant 0 : index
      %13 = vector.load %arg7[%c0_11, %c0_12] : memref<16x256xf32, #tpu.memory_space<vmem>>, vector<16x256xf32>
      tpu.vector_store %arg7[%c0_11, %c0_12], %12 {strides = array<i32>} : memref<16x256xf32, #tpu.memory_space<vmem>>, vector<16x256xf32>,
    } else {
    }
    %c0 = arith.constant 0 : index
    %c0_1 = arith.constant 0 : index
    %3 = vector.load %arg7[%c0, %c0_1] : memref<16x256xf32, #tpu.memory_space<vmem>>, vector<16x256xf32>
    %c0_2 = arith.constant 0 : index
    %c0_3 = arith.constant 0 : index
    %4 = vector.load %arg3[%c0_2, %c0_3] : memref<16x128xbf16, #tpu.memory_space<vmem>>, vector<16x128xbf16>
    %c0_4 = arith.constant 0 : index
    %c0_5 = arith.constant 0 : index
    %5 = vector.load %arg4[%c0_4, %c0_5] : memref<128x256xbf16, #tpu.memory_space<vmem>>, vector<128x256xbf16>
    %cst = arith.constant dense<0.000000e+00> : vector<16x256xf32>
    %6 = tpu.matmul %4, %5, %cst {dimension_numbers = #tpu.dot_dimension_numbers<[1], [0], [0], [1], [0, 0, 1, 1], [], []>} : vector<16x128xbf16>, vector<128x256xbf16>, vector<16x256xf32> -> vector<16x256xf32>
    %7 = arith.addf %3, %6 : vector<16x256xf32>
    %c0_6 = arith.constant 0 : index
    %c0_7 = arith.constant 0 : index
    %8 = vector.load %arg7[%c0_6, %c0_7] : memref<16x256xf32, #tpu.memory_space<vmem>>, vector<16x256xf32>
    tpu.vector_store %arg7[%c0_6, %c0_7], %7 {strides = array<i32>} : memref<16x256xf32, #tpu.memory_space<vmem>>, vector<16x256xf32>,
    %c0_i32_8 = arith.constant 0 : i32
    %9 = arith.cmpi eq, %arg2, %c0_i32_8 : i32
    %10 = arith.extui %9 : i1 to i32
    %c0_i32_9 = arith.constant 0 : i32
    %11 = arith.cmpi ne, %10, %c0_i32_9 : i32
    scf.if %11 {
      %c0_10 = arith.constant 0 : index
      %c0_11 = arith.constant 0 : index
      %12 = vector.load %arg7[%c0_10, %c0_11] : memref<16x256xf32, #tpu.memory_space<vmem>>, vector<16x256xf32>
      %c0_12 = arith.constant 0 : index
      %c0_13 = arith.constant 0 : index
      %13 = vector.load %arg5[%c0_12, %c0_13] : memref<1x256xf32, #tpu.memory_space<vmem>>, vector<1x256xf32>
      %14 = vector.broadcast %13 : vector<1x256xf32> to vector<16x256xf32>
      %15 = arith.addf %12, %14 : vector<16x256xf32>
      %cst_14 = arith.constant 0.000000e+00 : f32
      %16 = vector.broadcast %cst_14 : f32 to vector<16x256xf32>
      %17 = arith.maximumf %15, %16 : vector<16x256xf32>
      %18 = arith.truncf %17 : vector<16x256xf32> to vector<16x256xbf16>
      %c0_15 = arith.constant 0 : index
      %c0_16 = arith.constant 0 : index
      %19 = vector.load %arg6[%c0_15, %c0_16] : memref<16x256xbf16, #tpu.memory_space<vmem>>, vector<16x256xbf16>
      tpu.vector_store %arg6[%c0_15, %c0_16], %18 {strides = array<i32>} : memref<16x256xbf16, #tpu.memory_space<vmem>>, vector<16x256xbf16>,
    } else {
    }
    return
  }
  func.func @transform_0(%arg0: i32, %arg1: i32, %arg2: i32) -> (i32, i32) {
    %c0_i32 = arith.constant 0 : i32
    return %arg0, %arg2 : i32, i32
  }
  func.func @transform_1(%arg0: i32, %arg1: i32, %arg2: i32) -> (i32, i32) {
    %c0_i32 = arith.constant 0 : i32
    return %arg2, %arg1 : i32, i32
  }
  func.func @transform_2(%arg0: i32, %arg1: i32, %arg2: i32) -> (i32, i32) {
    %c0_i32 = arith.constant 0 : i32
    %c0_i32_0 = arith.constant 0 : i32
    return %c0_i32, %arg1 : i32, i32
  }
  func.func @transform_3(%arg0: i32, %arg1: i32, %arg2: i32) -> (i32, i32) {
    %c0_i32 = arith.constant 0 : i32
    return %arg0, %arg1 : i32, i32
  }
}

module attributes {stable_mosaic.version = 11 : i64} {
  func.func @_mha_kernel(%arg0: i32, %arg1: memref<1x8x128xbf16, #tpu.memory_space<vmem>>, %arg2: memref<1x8x128xbf16, #tpu.memory_space<vmem>>, %arg3: memref<1x8x128xbf16, #tpu.memory_space<vmem>>, %arg4: memref<1x1x8xf32, #tpu.memory_space<vmem>>, %arg5: memref<1x8x128xbf16, #tpu.memory_space<vmem>>) attributes {dimension_semantics = [#tpu.dimension_semantics<parallel>], iteration_bounds = array<i64: 2>, scalar_prefetch = 0 : i64, scratch_operands = 0 : i64, tpu.core_type = #tpu.core_type<tc>, window_params = [{transform_indices = @transform_0, window_bounds = array<i64: 1, 8, 128>}, {transform_indices = @transform_1, window_bounds = array<i64: 1, 8, 128>}, {transform_indices = @transform_2, window_bounds = array<i64: 1, 8, 128>}, {transform_indices = @transform_3, window_bounds = array<i64: 1, 1, 8>}, {transform_indices = @transform_4, window_bounds = array<i64: 1, 8, 128>}]} {
    %c0 = arith.constant 0 : index
    %c0_0 = arith.constant 0 : index
    %c0_1 = arith.constant 0 : index
    %0 = vector.load %arg1[%c0, %c0_0, %c0_1] : memref<1x8x128xbf16, #tpu.memory_space<vmem>>, vector<1x8x128xbf16>
    %1 = vector.shape_cast %0 : vector<1x8x128xbf16> to vector<8x128xbf16>
    %cst = arith.constant 1.767580e-01 : bf16
    %2 = vector.broadcast %cst : bf16 to vector<8x128xbf16>
    %3 = arith.mulf %1, %2 : vector<8x128xbf16>
    %c0_2 = arith.constant 0 : index
    %c0_3 = arith.constant 0 : index
    %c0_4 = arith.constant 0 : index
    %4 = vector.load %arg2[%c0_2, %c0_3, %c0_4] : memref<1x8x128xbf16, #tpu.memory_space<vmem>>, vector<1x8x128xbf16>
    %5 = vector.shape_cast %4 : vector<1x8x128xbf16> to vector<8x128xbf16>
    %c0_5 = arith.constant 0 : index
    %c0_6 = arith.constant 0 : index
    %c0_7 = arith.constant 0 : index
    %6 = vector.load %arg3[%c0_5, %c0_6, %c0_7] : memref<1x8x128xbf16, #tpu.memory_space<vmem>>, vector<1x8x128xbf16>
    %7 = vector.shape_cast %6 : vector<1x8x128xbf16> to vector<8x128xbf16>
    %c0_8 = arith.constant 0 : index
    %c0_9 = arith.constant 0 : index
    %c0_10 = arith.constant 0 : index
    %8 = vector.load %arg4[%c0_8, %c0_9, %c0_10] : memref<1x1x8xf32, #tpu.memory_space<vmem>>, vector<1x1x8xf32>
    %9 = vector.shape_cast %8 : vector<1x1x8xf32> to vector<1x8xf32>
    %10 = vector.extract_strided_slice %3 {offsets = [0, 0], sizes = [8, 32], strides = [1, 1]} : vector<8x128xbf16> to vector<8x32xbf16>
    %11 = vector.extract_strided_slice %5 {offsets = [0, 0], sizes = [8, 32], strides = [1, 1]} : vector<8x128xbf16> to vector<8x32xbf16>
    %cst_11 = arith.constant dense<0.000000e+00> : vector<8x8xf32>
    %12 = tpu.matmul %10, %11, %cst_11 {dimension_numbers = #tpu.dot_dimension_numbers<[1], [1], [0], [0], [0, 0, 1, 0], [], []>} : vector<8x32xbf16>, vector<8x32xbf16>, vector<8x8xf32> -> vector<8x8xf32>
    %13 = vector.broadcast %9 : vector<1x8xf32> to vector<8x8xf32>
    %14 = arith.addf %12, %13 : vector<8x8xf32>
    %cst_12 = arith.constant dense<0xFF800000> : vector<8xf32>
    %15 = vector.multi_reduction <maximumf>, %14, %cst_12 [1] : vector<8x8xf32> to vector<8xf32>
    %16 = vector.shape_cast %15 : vector<8xf32> to vector<8x1xf32>
    %17 = vector.broadcast %16 : vector<8x1xf32> to vector<8x8xf32>
    %18 = arith.subf %14, %17 : vector<8x8xf32>
    %19 = math.exp %18 : vector<8x8xf32>
    %cst_13 = arith.constant dense<0.000000e+00> : vector<8xf32>
    %20 = vector.multi_reduction <add>, %19, %cst_13 [1] : vector<8x8xf32> to vector<8xf32>
    %21 = vector.shape_cast %20 : vector<8xf32> to vector<8x1xf32>
    %22 = tpu.reciprocal %21 {approx = true} : vector<8x1xf32> -> vector<8x1xf32>
    %23 = vector.broadcast %22 : vector<8x1xf32> to vector<8x8xf32>
    %24 = arith.mulf %19, %23 : vector<8x8xf32>
    %25 = arith.truncf %24 : vector<8x8xf32> to vector<8x8xbf16>
    %26 = vector.extract_strided_slice %7 {offsets = [0, 0], sizes = [8, 32], strides = [1, 1]} : vector<8x128xbf16> to vector<8x32xbf16>
    %cst_14 = arith.constant dense<0.000000e+00> : vector<8x32xf32>
    %27 = tpu.matmul %25, %26, %cst_14 {dimension_numbers = #tpu.dot_dimension_numbers<[1], [0], [0], [1], [0, 0, 1, 1], [], []>} : vector<8x8xbf16>, vector<8x32xbf16>, vector<8x32xf32> -> vector<8x32xf32>
    %28 = vector.extract_strided_slice %3 {offsets = [0, 32], sizes = [8, 32], strides = [1, 1]} : vector<8x128xbf16> to vector<8x32xbf16>
    %29 = vector.extract_strided_slice %5 {offsets = [0, 32], sizes = [8, 32], strides = [1, 1]} : vector<8x128xbf16> to vector<8x32xbf16>
    %cst_15 = arith.constant dense<0.000000e+00> : vector<8x8xf32>
    %30 = tpu.matmul %28, %29, %cst_15 {dimension_numbers = #tpu.dot_dimension_numbers<[1], [1], [0], [0], [0, 0, 1, 0], [], []>} : vector<8x32xbf16>, vector<8x32xbf16>, vector<8x8xf32> -> vector<8x8xf32>
    %31 = vector.broadcast %9 : vector<1x8xf32> to vector<8x8xf32>
    %32 = arith.addf %30, %31 : vector<8x8xf32>
    %cst_16 = arith.constant dense<0xFF800000> : vector<8xf32>
    %33 = vector.multi_reduction <maximumf>, %32, %cst_16 [1] : vector<8x8xf32> to vector<8xf32>
    %34 = vector.shape_cast %33 : vector<8xf32> to vector<8x1xf32>
    %35 = vector.broadcast %34 : vector<8x1xf32> to vector<8x8xf32>
    %36 = arith.subf %32, %35 : vector<8x8xf32>
    %37 = math.exp %36 : vector<8x8xf32>
    %cst_17 = arith.constant dense<0.000000e+00> : vector<8xf32>
    %38 = vector.multi_reduction <add>, %37, %cst_17 [1] : vector<8x8xf32> to vector<8xf32>
    %39 = vector.shape_cast %38 : vector<8xf32> to vector<8x1xf32>
    %40 = tpu.reciprocal %39 {approx = true} : vector<8x1xf32> -> vector<8x1xf32>
    %41 = vector.broadcast %40 : vector<8x1xf32> to vector<8x8xf32>
    %42 = arith.mulf %37, %41 : vector<8x8xf32>
    %43 = arith.truncf %42 : vector<8x8xf32> to vector<8x8xbf16>
    %44 = vector.extract_strided_slice %7 {offsets = [0, 32], sizes = [8, 32], strides = [1, 1]} : vector<8x128xbf16> to vector<8x32xbf16>
    %cst_18 = arith.constant dense<0.000000e+00> : vector<8x32xf32>
    %45 = tpu.matmul %43, %44, %cst_18 {dimension_numbers = #tpu.dot_dimension_numbers<[1], [0], [0], [1], [0, 0, 1, 1], [], []>} : vector<8x8xbf16>, vector<8x32xbf16>, vector<8x32xf32> -> vector<8x32xf32>
    %46 = vector.extract_strided_slice %3 {offsets = [0, 64], sizes = [8, 32], strides = [1, 1]} : vector<8x128xbf16> to vector<8x32xbf16>
    %47 = vector.extract_strided_slice %5 {offsets = [0, 64], sizes = [8, 32], strides = [1, 1]} : vector<8x128xbf16> to vector<8x32xbf16>
    %cst_19 = arith.constant dense<0.000000e+00> : vector<8x8xf32>
    %48 = tpu.matmul %46, %47, %cst_19 {dimension_numbers = #tpu.dot_dimension_numbers<[1], [1], [0], [0], [0, 0, 1, 0], [], []>} : vector<8x32xbf16>, vector<8x32xbf16>, vector<8x8xf32> -> vector<8x8xf32>
    %49 = vector.broadcast %9 : vector<1x8xf32> to vector<8x8xf32>
    %50 = arith.addf %48, %49 : vector<8x8xf32>
    %cst_20 = arith.constant dense<0xFF800000> : vector<8xf32>
    %51 = vector.multi_reduction <maximumf>, %50, %cst_20 [1] : vector<8x8xf32> to vector<8xf32>
    %52 = vector.shape_cast %51 : vector<8xf32> to vector<8x1xf32>
    %53 = vector.broadcast %52 : vector<8x1xf32> to vector<8x8xf32>
    %54 = arith.subf %50, %53 : vector<8x8xf32>
    %55 = math.exp %54 : vector<8x8xf32>
    %cst_21 = arith.constant dense<0.000000e+00> : vector<8xf32>
    %56 = vector.multi_reduction <add>, %55, %cst_21 [1] : vector<8x8xf32> to vector<8xf32>
    %57 = vector.shape_cast %56 : vector<8xf32> to vector<8x1xf32>
    %58 = tpu.reciprocal %57 {approx = true} : vector<8x1xf32> -> vector<8x1xf32>
    %59 = vector.broadcast %58 : vector<8x1xf32> to vector<8x8xf32>
    %60 = arith.mulf %55, %59 : vector<8x8xf32>
    %61 = arith.truncf %60 : vector<8x8xf32> to vector<8x8xbf16>
    %62 = vector.extract_strided_slice %7 {offsets = [0, 64], sizes = [8, 32], strides = [1, 1]} : vector<8x128xbf16> to vector<8x32xbf16>
    %cst_22 = arith.constant dense<0.000000e+00> : vector<8x32xf32>
    %63 = tpu.matmul %61, %62, %cst_22 {dimension_numbers = #tpu.dot_dimension_numbers<[1], [0], [0], [1], [0, 0, 1, 1], [], []>} : vector<8x8xbf16>, vector<8x32xbf16>, vector<8x32xf32> -> vector<8x32xf32>
    %64 = vector.extract_strided_slice %3 {offsets = [0, 96], sizes = [8, 32], strides = [1, 1]} : vector<8x128xbf16> to vector<8x32xbf16>
    %65 = vector.extract_strided_slice %5 {offsets = [0, 96], sizes = [8, 32], strides = [1, 1]} : vector<8x128xbf16> to vector<8x32xbf16>
    %cst_23 = arith.constant dense<0.000000e+00> : vector<8x8xf32>
    %66 = tpu.matmul %64, %65, %cst_23 {dimension_numbers = #tpu.dot_dimension_numbers<[1], [1], [0], [0], [0, 0, 1, 0], [], []>} : vector<8x32xbf16>, vector<8x32xbf16>, vector<8x8xf32> -> vector<8x8xf32>
    %67 = vector.broadcast %9 : vector<1x8xf32> to vector<8x8xf32>
    %68 = arith.addf %66, %67 : vector<8x8xf32>
    %cst_24 = arith.constant dense<0xFF800000> : vector<8xf32>
    %69 = vector.multi_reduction <maximumf>, %68, %cst_24 [1] : vector<8x8xf32> to vector<8xf32>
    %70 = vector.shape_cast %69 : vector<8xf32> to vector<8x1xf32>
    %71 = vector.broadcast %70 : vector<8x1xf32> to vector<8x8xf32>
    %72 = arith.subf %68, %71 : vector<8x8xf32>
    %73 = math.exp %72 : vector<8x8xf32>
    %cst_25 = arith.constant dense<0.000000e+00> : vector<8xf32>
    %74 = vector.multi_reduction <add>, %73, %cst_25 [1] : vector<8x8xf32> to vector<8xf32>
    %75 = vector.shape_cast %74 : vector<8xf32> to vector<8x1xf32>
    %76 = tpu.reciprocal %75 {approx = true} : vector<8x1xf32> -> vector<8x1xf32>
    %77 = vector.broadcast %76 : vector<8x1xf32> to vector<8x8xf32>
    %78 = arith.mulf %73, %77 : vector<8x8xf32>
    %79 = arith.truncf %78 : vector<8x8xf32> to vector<8x8xbf16>
    %80 = vector.extract_strided_slice %7 {offsets = [0, 96], sizes = [8, 32], strides = [1, 1]} : vector<8x128xbf16> to vector<8x32xbf16>
    %cst_26 = arith.constant dense<0.000000e+00> : vector<8x32xf32>
    %81 = tpu.matmul %79, %80, %cst_26 {dimension_numbers = #tpu.dot_dimension_numbers<[1], [0], [0], [1], [0, 0, 1, 1], [], []>} : vector<8x8xbf16>, vector<8x32xbf16>, vector<8x32xf32> -> vector<8x32xf32>
    %82 = tpu.concatenate %27, %45, %63, %81 in 1 : vector<8x32xf32>, vector<8x32xf32>, vector<8x32xf32>, vector<8x32xf32> -> vector<8x128xf32>
    %83 = arith.truncf %82 : vector<8x128xf32> to vector<8x128xbf16>
    %c0_27 = arith.constant 0 : index
    %c0_28 = arith.constant 0 : index
    %c0_29 = arith.constant 0 : index
    %84 = vector.load %arg5[%c0_27, %c0_28, %c0_29] : memref<1x8x128xbf16, #tpu.memory_space<vmem>>, vector<1x8x128xbf16>
    %85 = vector.shape_cast %84 : vector<1x8x128xbf16> to vector<8x128xbf16>
    %86 = vector.shape_cast %83 : vector<8x128xbf16> to vector<1x8x128xbf16>
    tpu.vector_store %arg5[%c0_27, %c0_28, %c0_29], %86 {strides = array<i32>} : memref<1x8x128xbf16, #tpu.memory_space<vmem>>, vector<1x8x128xbf16>,
    return
  }
  func.func @transform_0(%arg0: i32) -> (i32, i32, i32) {
    %c0_i32 = arith.constant 0 : i32
    %c3_i32 = arith.constant 3 : i32
    %c0_i32_0 = arith.constant 0 : i32
    return %arg0, %c0_i32, %c3_i32 : i32, i32, i32
  }
  func.func @transform_1(%arg0: i32) -> (i32, i32, i32) {
    %c0_i32 = arith.constant 0 : i32
    %c0_i32_0 = arith.constant 0 : i32
    %c0_i32_1 = arith.constant 0 : i32
    return %arg0, %c0_i32, %c0_i32_0 : i32, i32, i32
  }
  func.func @transform_2(%arg0: i32) -> (i32, i32, i32) {
    %c0_i32 = arith.constant 0 : i32
    %c1_i32 = arith.constant 1 : i32
    %c0_i32_0 = arith.constant 0 : i32
    return %arg0, %c0_i32, %c1_i32 : i32, i32, i32
  }
  func.func @transform_3(%arg0: i32) -> (i32, i32, i32) {
    %c0_i32 = arith.constant 0 : i32
    %c0_i32_0 = arith.constant 0 : i32
    %c0_i32_1 = arith.constant 0 : i32
    return %arg0, %c0_i32, %c0_i32_0 : i32, i32, i32
  }
  func.func @transform_4(%arg0: i32) -> (i32, i32, i32) {
    %c0_i32 = arith.constant 0 : i32
    %c0_i32_0 = arith.constant 0 : i32
    %c0_i32_1 = arith.constant 0 : i32
    return %arg0, %c0_i32, %c0_i32_0 : i32, i32, i32
  }
}

module attributes {stable_mosaic.version = 11 : i64} {
  func.func @_linear_kernel(%arg0: i32, %arg1: i32, %arg2: i32, %arg3: memref<16x256xbf16, #tpu.memory_space<vmem>>, %arg4: memref<256x128xbf16, #tpu.memory_space<vmem>>, %arg5: memref<1x128xf32, #tpu.memory_space<vmem>>, %arg6: memref<16x128xbf16, #tpu.memory_space<vmem>>, %arg7: memref<16x128xf32, #tpu.memory_space<vmem>>) attributes {dimension_semantics = [#tpu.dimension_semantics<parallel>, #tpu.dimension_semantics<parallel>, #tpu.dimension_semantics<arbitrary>], iteration_bounds = array<i64: 1, 1, 1>, scalar_prefetch = 0 : i64, scratch_operands = 1 : i64, tpu.core_type = #tpu.core_type<tc>, window_params = [{transform_indices = @transform_0, window_bounds = array<i64: 16, 256>}, {transform_indices = @transform_1, window_bounds = array<i64: 256, 128>}, {transform_indices = @transform_2, window_bounds = array<i64: 1, 128>}, {transform_indices = @transform_3, window_bounds = array<i64: 16, 128>}]} {
    %c0_i32 = arith.constant 0 : i32
    %0 = arith.cmpi eq, %arg2, %c0_i32 : i32
    %1 = arith.extui %0 : i1 to i32
    %c0_i32_0 = arith.constant 0 : i32
    %2 = arith.cmpi ne, %1, %c0_i32_0 : i32
    scf.if %2 {
      %cst_10 = arith.constant 0.000000e+00 : f32
      %12 = vector.broadcast %cst_10 : f32 to vector<16x128xf32>
      %c0_11 = arith.constant 0 : index
      %c0_12 = arith.constant 0 : index
      %13 = vector.load %arg7[%c0_11, %c0_12] : memref<16x128xf32, #tpu.memory_space<vmem>>, vector<16x128xf32>
      tpu.vector_store %arg7[%c0_11, %c0_12], %12 {strides = array<i32>} : memref<16x128xf32, #tpu.memory_space<vmem>>, vector<16x128xf32>,
    } else {
    }
    %c0 = arith.constant 0 : index
    %c0_1 = arith.constant 0 : index
    %3 = vector.load %arg7[%c0, %c0_1] : memref<16x128xf32, #tpu.memory_space<vmem>>, vector<16x128xf32>
    %c0_2 = arith.constant 0 : index
    %c0_3 = arith.constant 0 : index
    %4 = vector.load %arg3[%c0_2, %c0_3] : memref<16x256xbf16, #tpu.memory_space<vmem>>, vector<16x256xbf16>
    %c0_4 = arith.constant 0 : index
    %c0_5 = arith.constant 0 : index
    %5 = vector.load %arg4[%c0_4, %c0_5] : memref<256x128xbf16, #tpu.memory_space<vmem>>, vector<256x128xbf16>
    %cst = arith.constant dense<0.000000e+00> : vector<16x128xf32>
    %6 = tpu.matmul %4, %5, %cst {dimension_numbers = #tpu.dot_dimension_numbers<[1], [0], [0], [1], [0, 0, 1, 1], [], []>} : vector<16x256xbf16>, vector<256x128xbf16>, vector<16x128xf32> -> vector<16x128xf32>
    %7 = arith.addf %3, %6 : vector<16x128xf32>
    %c0_6 = arith.constant 0 : index
    %c0_7 = arith.constant 0 : index
    %8 = vector.load %arg7[%c0_6, %c0_7] : memref<16x128xf32, #tpu.memory_space<vmem>>, vector<16x128xf32>
    tpu.vector_store %arg7[%c0_6, %c0_7], %7 {strides = array<i32>} : memref<16x128xf32, #tpu.memory_space<vmem>>, vector<16x128xf32>,
    %c0_i32_8 = arith.constant 0 : i32
    %9 = arith.cmpi eq, %arg2, %c0_i32_8 : i32
    %10 = arith.extui %9 : i1 to i32
    %c0_i32_9 = arith.constant 0 : i32
    %11 = arith.cmpi ne, %10, %c0_i32_9 : i32
    scf.if %11 {
      %c0_10 = arith.constant 0 : index
      %c0_11 = arith.constant 0 : index
      %12 = vector.load %arg7[%c0_10, %c0_11] : memref<16x128xf32, #tpu.memory_space<vmem>>, vector<16x128xf32>
      %c0_12 = arith.constant 0 : index
      %c0_13 = arith.constant 0 : index
      %13 = vector.load %arg5[%c0_12, %c0_13] : memref<1x128xf32, #tpu.memory_space<vmem>>, vector<1x128xf32>
      %14 = vector.broadcast %13 : vector<1x128xf32> to vector<16x128xf32>
      %15 = arith.addf %12, %14 : vector<16x128xf32>
      %16 = arith.truncf %15 : vector<16x128xf32> to vector<16x128xbf16>
      %c0_14 = arith.constant 0 : index
      %c0_15 = arith.constant 0 : index
      %17 = vector.load %arg6[%c0_14, %c0_15] : memref<16x128xbf16, #tpu.memory_space<vmem>>, vector<16x128xbf16>
      tpu.vector_store %arg6[%c0_14, %c0_15], %16 {strides = array<i32>} : memref<16x128xbf16, #tpu.memory_space<vmem>>, vector<16x128xbf16>,
    } else {
    }
    return
  }
  func.func @transform_0(%arg0: i32, %arg1: i32, %arg2: i32) -> (i32, i32) {
    %c0_i32 = arith.constant 0 : i32
    return %arg0, %arg2 : i32, i32
  }
  func.func @transform_1(%arg0: i32, %arg1: i32, %arg2: i32) -> (i32, i32) {
    %c0_i32 = arith.constant 0 : i32
    return %arg2, %arg1 : i32, i32
  }
  func.func @transform_2(%arg0: i32, %arg1: i32, %arg2: i32) -> (i32, i32) {
    %c0_i32 = arith.constant 0 : i32
    %c0_i32_0 = arith.constant 0 : i32
    return %c0_i32, %arg1 : i32, i32
  }
  func.func @transform_3(%arg0: i32, %arg1: i32, %arg2: i32) -> (i32, i32) {
    %c0_i32 = arith.constant 0 : i32
    return %arg0, %arg1 : i32, i32
  }
}

module attributes {stable_mosaic.version = 11 : i64} {
  func.func @_linear_kernel(%arg0: i32, %arg1: i32, %arg2: i32, %arg3: memref<16x128xbf16, #tpu.memory_space<vmem>>, %arg4: memref<128x128xbf16, #tpu.memory_space<vmem>>, %arg5: memref<1x128xf32, #tpu.memory_space<vmem>>, %arg6: memref<16x128xf32, #tpu.memory_space<vmem>>, %arg7: memref<16x128xf32, #tpu.memory_space<vmem>>) attributes {dimension_semantics = [#tpu.dimension_semantics<parallel>, #tpu.dimension_semantics<parallel>, #tpu.dimension_semantics<arbitrary>], iteration_bounds = array<i64: 1, 1, 1>, scalar_prefetch = 0 : i64, scratch_operands = 1 : i64, tpu.core_type = #tpu.core_type<tc>, window_params = [{transform_indices = @transform_0, window_bounds = array<i64: 16, 128>}, {transform_indices = @transform_1, window_bounds = array<i64: 128, 128>}, {transform_indices = @transform_2, window_bounds = array<i64: 1, 128>}, {transform_indices = @transform_3, window_bounds = array<i64: 16, 128>}]} {
    %c0_i32 = arith.constant 0 : i32
    %0 = arith.cmpi eq, %arg2, %c0_i32 : i32
    %1 = arith.extui %0 : i1 to i32
    %c0_i32_0 = arith.constant 0 : i32
    %2 = arith.cmpi ne, %1, %c0_i32_0 : i32
    scf.if %2 {
      %cst_10 = arith.constant 0.000000e+00 : f32
      %12 = vector.broadcast %cst_10 : f32 to vector<16x128xf32>
      %c0_11 = arith.constant 0 : index
      %c0_12 = arith.constant 0 : index
      %13 = vector.load %arg7[%c0_11, %c0_12] : memref<16x128xf32, #tpu.memory_space<vmem>>, vector<16x128xf32>
      tpu.vector_store %arg7[%c0_11, %c0_12], %12 {strides = array<i32>} : memref<16x128xf32, #tpu.memory_space<vmem>>, vector<16x128xf32>,
    } else {
    }
    %c0 = arith.constant 0 : index
    %c0_1 = arith.constant 0 : index
    %3 = vector.load %arg7[%c0, %c0_1] : memref<16x128xf32, #tpu.memory_space<vmem>>, vector<16x128xf32>
    %c0_2 = arith.constant 0 : index
    %c0_3 = arith.constant 0 : index
    %4 = vector.load %arg3[%c0_2, %c0_3] : memref<16x128xbf16, #tpu.memory_space<vmem>>, vector<16x128xbf16>
    %c0_4 = arith.constant 0 : index
    %c0_5 = arith.constant 0 : index
    %5 = vector.load %arg4[%c0_4, %c0_5] : memref<128x128xbf16, #tpu.memory_space<vmem>>, vector<128x128xbf16>
    %cst = arith.constant dense<0.000000e+00> : vector<16x128xf32>
    %6 = tpu.matmul %4, %5, %cst {dimension_numbers = #tpu.dot_dimension_numbers<[1], [0], [0], [1], [0, 0, 1, 1], [], []>} : vector<16x128xbf16>, vector<128x128xbf16>, vector<16x128xf32> -> vector<16x128xf32>
    %7 = arith.addf %3, %6 : vector<16x128xf32>
    %c0_6 = arith.constant 0 : index
    %c0_7 = arith.constant 0 : index
    %8 = vector.load %arg7[%c0_6, %c0_7] : memref<16x128xf32, #tpu.memory_space<vmem>>, vector<16x128xf32>
    tpu.vector_store %arg7[%c0_6, %c0_7], %7 {strides = array<i32>} : memref<16x128xf32, #tpu.memory_space<vmem>>, vector<16x128xf32>,
    %c0_i32_8 = arith.constant 0 : i32
    %9 = arith.cmpi eq, %arg2, %c0_i32_8 : i32
    %10 = arith.extui %9 : i1 to i32
    %c0_i32_9 = arith.constant 0 : i32
    %11 = arith.cmpi ne, %10, %c0_i32_9 : i32
    scf.if %11 {
      %c0_10 = arith.constant 0 : index
      %c0_11 = arith.constant 0 : index
      %12 = vector.load %arg7[%c0_10, %c0_11] : memref<16x128xf32, #tpu.memory_space<vmem>>, vector<16x128xf32>
      %c0_12 = arith.constant 0 : index
      %c0_13 = arith.constant 0 : index
      %13 = vector.load %arg5[%c0_12, %c0_13] : memref<1x128xf32, #tpu.memory_space<vmem>>, vector<1x128xf32>
      %14 = vector.broadcast %13 : vector<1x128xf32> to vector<16x128xf32>
      %15 = arith.addf %12, %14 : vector<16x128xf32>
      %c0_14 = arith.constant 0 : index
      %c0_15 = arith.constant 0 : index
      %16 = vector.load %arg6[%c0_14, %c0_15] : memref<16x128xf32, #tpu.memory_space<vmem>>, vector<16x128xf32>
      tpu.vector_store %arg6[%c0_14, %c0_15], %15 {strides = array<i32>} : memref<16x128xf32, #tpu.memory_space<vmem>>, vector<16x128xf32>,
    } else {
    }
    return
  }
  func.func @transform_0(%arg0: i32, %arg1: i32, %arg2: i32) -> (i32, i32) {
    %c0_i32 = arith.constant 0 : i32
    return %arg0, %arg2 : i32, i32
  }
  func.func @transform_1(%arg0: i32, %arg1: i32, %arg2: i32) -> (i32, i32) {
    %c0_i32 = arith.constant 0 : i32
    return %arg2, %arg1 : i32, i32
  }
  func.func @transform_2(%arg0: i32, %arg1: i32, %arg2: i32) -> (i32, i32) {
    %c0_i32 = arith.constant 0 : i32
    %c0_i32_0 = arith.constant 0 : i32
    return %c0_i32, %arg1 : i32, i32
  }
  func.func @transform_3(%arg0: i32, %arg1: i32, %arg2: i32) -> (i32, i32) {
    %c0_i32 = arith.constant 0 : i32
    return %arg0, %arg1 : i32, i32
  }
}

</mosaic_0001>

<llo_original>
// kernel: _lambda_.24
$region0: #{_lambda_.24}
  #allocation0 [shape = 'u32[]', space=smem, size = 0x4, offset = 0x4, fixed_abs, tag = 'smem constant byte address 0x4 - core index']
  #allocation1 [shape = 'u32[144,128]{1,0:T(1,128)}', space=vmem, size = 0x12000, scoped, tag = 'internal scratch']
  %s0 = inlined_call_operand.vmem [shape: f32[16,128], index: 0, kind: input, shape index: {}]
  %s1 = inlined_call_operand.vmem [shape: f32[1,128], index: 1, kind: input, shape index: {}]
  %s2 = inlined_call_operand.vmem [shape: f32[1,128], index: 2, kind: input, shape index: {}]
  %s3 = inlined_call_operand.vmem [shape: bf16[16,128], index: 3, kind: output, shape index: {}]
  %s4 = sld [smem:[#allocation0]]
  $region22: #{_lambda_.24} parent=0
    _
  %s6 = ssub.s32 1, %s4
  %s7 = scalar_select 0, %s6, %s4
  // Predicated region
  $region2: #{_lambda_.24} parent=0 // pred_check
    _
  $region3: #{_lambda_.24} parent=0 // pred_check_branch
    %9 = sbr.rel (0) target = $region5
  $region4: #{_lambda_.24} parent=0 // pred_region
    _
  $region5: #{_lambda_.24} parent=0 // pred_fallthru
    _
  // Predicated region
  $region6: #{_lambda_.24} parent=0 // pred_check
    _
  $region7: #{_lambda_.24} parent=0 // pred_check_branch
    %11 = sbr.rel (0) target = $region9
  $region8: #{_lambda_.24} parent=0 // pred_region
    _
  $region9: #{_lambda_.24} parent=0 // pred_fallthru
    _
  // Predicated region
  $region10: #{_lambda_.24} parent=0 // pred_check
    _
  $region11: #{_lambda_.24} parent=0 // pred_check_branch
    %13 = sbr.rel (0) target = $region13
  $region12: #{_lambda_.24} parent=0 // pred_region
    _
  $region13: #{_lambda_.24} parent=0 // pred_fallthru
    _
  %v14 = vld [vmem:[%s0] sm:$0xff]
  %v15 = vld [vmem:[%s0 + $0x8] sm:$0xff]
  %16 = vadd.xlane.f32.xlu0 %v14
  %v17 = vpop.xlane.xlu0 %16
  %18 = vadd.xlane.f32.xlu0 %v15
  %v19 = vpop.xlane.xlu0 %18
  %v20 = vrcp.pop 128.0
  %v21 = vmul.f32 %v17, %v20
  %v22 = vmul.f32 %v19, %v20
  %v23 = vsub.f32 %v14, %v21
  %v24 = vsub.f32 %v15, %v22
  %v25 = vmul.f32 %v23, %v23
  %v26 = vmul.f32 %v24, %v24
  %27 = vadd.xlane.f32.xlu0 %v25
  %v28 = vpop.xlane.xlu0 %27
  %29 = vadd.xlane.f32.xlu0 %v26
  %v30 = vpop.xlane.xlu0 %29
  %v31 = vmul.f32 %v28, %v20
  %v32 = vmul.f32 %v30, %v20
  %v33 = vadd.f32 %v31, 1e-05
  %v34 = vadd.f32 %v32, 1e-05
  %v35 = vrsqrt.pop %v33
  %v36 = vrsqrt.pop %v34
  %v37 = vmul.f32 %v23, %v35
  %v38 = vmul.f32 %v24, %v36
  %v39 = vld [vmem:[%s1] sm:$0x1]
  %v41 = vlaneseq
  %v42 = vshrl.u32 %v41, 7
  %v43 = vsub.s32 0, %v42
  %v44 = vrot.slane %v39, %v43
  %v46 = vmul.f32 %v37, %v44
  %v47 = vmul.f32 %v38, %v44
  %v48 = vld [vmem:[%s2] sm:$0x1]
  %v50 = vlaneseq
  %v51 = vshrl.u32 %v50, 7
  %v52 = vsub.s32 0, %v51
  %v53 = vrot.slane %v48, %v52
  %v55 = vadd.f32 %v46, %v53
  %v56 = vadd.f32 %v47, %v53
  %v57 = vpack.c.bf16 %v56, %v55
  %v59 = vunpack.c.l.b16 %v57
  %v60 = vunpack.c.h.b16 %v57
  %v61 = vpack.c.b16 %v59, %v59
  %v62 = vpack.c.b16 %v60, %v60
  %65 = vst [vmem:[%s3] sm:$0xf] %v61
  %66 = vst [vmem:[%s3 + $0x4] sm:$0xf] %v62
  // Predicated region
  $region14: #{_lambda_.24} parent=0 // pred_check
    _
  $region15: #{_lambda_.24} parent=0 // pred_check_branch
    %68 = sbr.rel (0) target = $region17
  $region16: #{_lambda_.24} parent=0 // pred_region
    _
  $region17: #{_lambda_.24} parent=0 // pred_fallthru
    _
  // Predicated region
  $region18: #{_lambda_.24} parent=0 // pred_check
    _
  $region19: #{_lambda_.24} parent=0 // pred_check_branch
    %70 = sbr.rel (0) target = $region21
  $region20: #{_lambda_.24} parent=0 // pred_region
    _
  $region21: #{_lambda_.24} parent=0 // pred_fallthru
    _

// kernel: _lambda_.25
$region0: #{_lambda_.25}
  #allocation0 [shape = 'u32[]', space=smem, size = 0x4, offset = 0x4, fixed_abs, tag = 'smem constant byte address 0x4 - core index']
  #allocation1 [shape = 'u32[144,128]{1,0:T(1,128)}', space=vmem, size = 0x12000, scoped, tag = 'internal scratch']
  #allocation2 [shape = 'f32[16,256]{1,0:T(8,128)}', space=vmem, size = 0x4000, scoped, tag = 'scratch operand']
  %s0 = inlined_call_operand.vmem [shape: bf16[16,128], index: 0, kind: input, shape index: {}]
  %s1 = inlined_call_operand.vmem [shape: bf16[128,512], index: 1, kind: input, shape index: {}]
  %s2 = inlined_call_operand.vmem [shape: f32[1,512], index: 2, kind: input, shape index: {}]
  %s3 = inlined_call_operand.vmem [shape: bf16[16,512], index: 3, kind: output, shape index: {}]
  %s4 = sld [smem:[#allocation0]]
  $region125: #{_lambda_.25} parent=0
    _
  %s6 = ssub.s32 1, %s4
  %s7 = scalar_select 0, %s6, %s4
  $region1: #{_lambda_.25} parent=0
    #allocation3 [shape = 'u8[131072]{0}', space=vmem, size = 0x20000, scoped, tag = 'input window, operand 1']
    #allocation4 [shape = 'u8[16384]{0}', space=vmem, size = 0x4000, scoped, tag = 'output window, operand 0']
    loop: start=0, step=1, limit=4
    $region2: #{_lambda_.25} parent=1 // loop_pre_header
      _
    $region3: #{_lambda_.25} parent=1 // loop_header
      %s9 = sphi 0, %s13
      %p10 = scmp.ge.s32.totalorder %s9, 4
      %s16 = sphi 0, %s35
      %s17 = sphi 0, %s31
      %s18 = sphi 0, %s27
      %s19 = sphi 0, %s16
      %s20 = sphi 0, %s17
      %s21 = sphi 0, %s18
      %s22 = sphi 0, %s19
      %s23 = sphi 0, %s20
      %s24 = sphi 0, %s21
      %s40 = sphi 0, %s42
      %s43 = sphi 0, %s40
      %s44 = sphi 0, %s43
      %s60 = sphi 0, %s44
      %s68 = sphi 0, %s70
      %s71 = sphi 0, %s68
      %s72 = sphi 0, %s71
      %s88 = sphi 0, %s72
      %s94 = sphi 0, %s96
      %s97 = sphi 0, %s94
      %s98 = sphi 0, %s97
      %s114 = sphi 0, %s98
      %s122 = sphi 0, %s124
      %s125 = sphi 0, %s122
      %s126 = sphi 0, %s125
      %s142 = sphi 0, %s126
    $region4: #{_lambda_.25} parent=1 // loop_header_branch
      %12 = sbr.rel (%p10) target = $region8
    $region5: #{_lambda_.25} parent=1 // loop_body
      %s14 = ssub.s32 %s9, 1
      %s15 = ssub.s32 %s9, 2
      %s25 = sadd.s32 1, %s18
      %p26 = scmp.ge.s32.totalorder %s25, 1
      %s27 = scalar_select %p26, 0, %s25
      %s28 = sadd.s32 1, %s17
      %s29 = scalar_select %p26, %s28, %s17
      %p30 = scmp.ge.s32.totalorder %s29, 2
      %s31 = scalar_select %p30, 0, %s29
      %s32 = sadd.s32 1, %s16
      %s33 = scalar_select %p30, %s32, %s16
      %p34 = scmp.ge.s32.totalorder %s33, 1
      %s35 = scalar_select %p34, 0, %s33
      %s36 = ssub.s32 %s16, %s35
      %s37 = ssub.s32 %s18, %s27
      %s38 = sor.u32 %s36, %s37
      %p39 = scmp.eq.s32.totalorder %s38, 0
      %s41 = sadd.s32 %s40, 1
      %s42 = scalar_select %p39, %s40, %s41
      %p45 = pneg %p39
      %p46 = scmp.eq.s32.totalorder %s9, 1
      %p47 = por %p45, %p46
      %p48 = scmp.ne.s32.totalorder %s40, %s43
      %p49 = scmp.eq.s32.totalorder %s9, 0
      %p50 = por %p48, %p49
      %p51 = scmp.ne.s32.totalorder %s40, %s43
      %p52 = scmp.eq.s32.totalorder %s14, 1
      %p53 = por %p51, %p52
      %p54 = scmp.ne.s32.totalorder %s43, %s44
      %p55 = scmp.eq.s32.totalorder %s14, 0
      %p56 = por %p54, %p55
      %p57 = scmp.ne.s32.totalorder %s43, %s44
      %p58 = scmp.eq.s32.totalorder %s15, 1
      %p59 = por %p57, %p58
      %p61 = scmp.ne.s32.totalorder %s44, %s60
      %p62 = scmp.eq.s32.totalorder %s15, 0
      %p63 = por %p61, %p62
      %s64 = ssub.s32 %s18, %s27
      %s65 = ssub.s32 %s17, %s31
      %s66 = sor.u32 %s64, %s65
      %p67 = scmp.eq.s32.totalorder %s66, 0
      %s69 = sadd.s32 %s68, 1
      %s70 = scalar_select %p67, %s68, %s69
      %p73 = pneg %p67
      %p74 = scmp.eq.s32.totalorder %s9, 1
      %p75 = por %p73, %p74
      %p76 = scmp.ne.s32.totalorder %s68, %s71
      %p77 = scmp.eq.s32.totalorder %s9, 0
      %p78 = por %p76, %p77
      %p79 = scmp.ne.s32.totalorder %s68, %s71
      %p80 = scmp.eq.s32.totalorder %s14, 1
      %p81 = por %p79, %p80
      %p82 = scmp.ne.s32.totalorder %s71, %s72
      %p83 = scmp.eq.s32.totalorder %s14, 0
      %p84 = por %p82, %p83
      %p85 = scmp.ne.s32.totalorder %s71, %s72
      %p86 = scmp.eq.s32.totalorder %s15, 1
      %p87 = por %p85, %p86
      %p89 = scmp.ne.s32.totalorder %s72, %s88
      %p90 = scmp.eq.s32.totalorder %s15, 0
      %p91 = por %p89, %p90
      %s92 = ssub.s32 %s17, %s31
      %p93 = scmp.eq.s32.totalorder %s92, 0
      %s95 = sadd.s32 %s94, 1
      %s96 = scalar_select %p93, %s94, %s95
      %p99 = pneg %p93
      %p100 = scmp.eq.s32.totalorder %s9, 1
      %p101 = por %p99, %p100
      %p102 = scmp.ne.s32.totalorder %s94, %s97
      %p103 = scmp.eq.s32.totalorder %s9, 0
      %p104 = por %p102, %p103
      %p105 = scmp.ne.s32.totalorder %s94, %s97
      %p106 = scmp.eq.s32.totalorder %s14, 1
      %p107 = por %p105, %p106
      %p108 = scmp.ne.s32.totalorder %s97, %s98
      %p109 = scmp.eq.s32.totalorder %s14, 0
      %p110 = por %p108, %p109
      %p111 = scmp.ne.s32.totalorder %s97, %s98
      %p112 = scmp.eq.s32.totalorder %s15, 1
      %p113 = por %p111, %p112
      %p115 = scmp.ne.s32.totalorder %s98, %s114
      %p116 = scmp.eq.s32.totalorder %s15, 0
      %p117 = por %p115, %p116
      %s118 = ssub.s32 %s16, %s35
      %s119 = ssub.s32 %s17, %s31
      %s120 = sor.u32 %s118, %s119
      %p121 = scmp.eq.s32.totalorder %s120, 0
      %s123 = sadd.s32 %s122, 1
      %s124 = scalar_select %p121, %s122, %s123
      %p127 = pneg %p121
      %p128 = scmp.eq.s32.totalorder %s9, 1
      %p129 = por %p127, %p128
      %p130 = scmp.ne.s32.totalorder %s122, %s125
      %p131 = scmp.eq.s32.totalorder %s9, 0
      %p132 = por %p130, %p131
      %p133 = scmp.ne.s32.totalorder %s122, %s125
      %p134 = scmp.eq.s32.totalorder %s14, 1
      %p135 = por %p133, %p134
      %p136 = scmp.ne.s32.totalorder %s125, %s126
      %p137 = scmp.eq.s32.totalorder %s14, 0
      %p138 = por %p136, %p137
      %p139 = scmp.ne.s32.totalorder %s125, %s126
      %p140 = scmp.eq.s32.totalorder %s15, 1
      %p141 = por %p139, %p140
      %p143 = scmp.ne.s32.totalorder %s126, %s142
      %p144 = scmp.eq.s32.totalorder %s15, 0
      %p145 = por %p143, %p144
      %p146 = scmp.le.s32.totalorder 1, %s9
      %p147 = scmp.lt.s32.totalorder %s9, 3
      %p148 = pnand %p146, %p147
      %p149 = pneg %p148
      // Predicated region
      $region9: #{_lambda_.25} parent=5 // pred_check
        _
      $region10: #{_lambda_.25} parent=5 // pred_check_branch
        %151 = sbr.rel (%p148) target = $region12
      $region11: #{_lambda_.25} parent=5 // pred_region
        %s152 = ssub.s32 %s9, 1
        // Predicated region
        $region13: #{_lambda_.25} parent=11 // pred_check
          %p153 = pneg %p56
        $region14: #{_lambda_.25} parent=11 // pred_check_branch
          %155 = sbr.rel (%p153) target = $region16
        $region15: #{_lambda_.25} parent=11 // pred_region
          %s156 = smul.u32 2, %s19
          %p157 = scmp.lt.s32.totalorder %s156, 1
          %s158 = scalar_select %p157, %s156, 1
          %p159 = scmp.lt.s32.totalorder %s21, 0
          %s160 = scalar_select %p159, %s21, 0
          %s161 = sadd.s32 %s160, %s158
          %s162 = smul.addr %s161, 4
          %s163 = scalar_lea.vmem %s0, %s162
          %s164 = smul.u32 2, %s19
        $region16: #{_lambda_.25} parent=11 // pred_fallthru
          _
      $region12: #{_lambda_.25} parent=5 // pred_fallthru
        _
      %p165 = scmp.lt.s32.totalorder %s9, 2
      // Predicated region
      $region17: #{_lambda_.25} parent=5 // pred_check
        %p166 = pneg %p165
      $region18: #{_lambda_.25} parent=5 // pred_check_branch
        %168 = sbr.rel (%p166) target = $region20
      $region19: #{_lambda_.25} parent=5 // pred_region
        // Predicated region
        $region21: #{_lambda_.25} parent=19 // pred_check
          %p169 = pneg %p78
        $region22: #{_lambda_.25} parent=19 // pred_check_branch
          %171 = sbr.rel (%p169) target = $region24
        $region23: #{_lambda_.25} parent=19 // pred_region
          %s172 = sand.u32 %s68, 1
          %s173 = sand.u32 %s68, 1
          %s174 = smul.addr %s173, 128
          %s175 = scalar_lea.vmem [#allocation3], %s174
          %s176 = smul.u32 16, %s18
          %s177 = smul.u32 2, %s17
          %s178 = smul.addr %s176, 4
          %s179 = sadd.s32 %s177, %s178
          %s180 = smul.addr %s179, 4
          %s181 = scalar_lea.vmem %s1, %s180
          // Predicated region
          $region25: #{_lambda_.25} parent=23 // pred_check
            _
          $region26: #{_lambda_.25} parent=23 // pred_check_branch
            %183 = sbr.rel (0) target = $region28
          $region27: #{_lambda_.25} parent=23 // pred_region
            // Predicated region
            $region29: #{_lambda_.25} parent=27 // pred_check
              _
            $region30: #{_lambda_.25} parent=27 // pred_check_branch
              %185 = sbr.rel (0) target = $region32
            $region31: #{_lambda_.25} parent=27 // pred_region
              // Predicated region
              $region44: #{_lambda_.25} parent=31 // pred_check
                _
              $region45: #{_lambda_.25} parent=31 // pred_check_branch
                %230 = sbr.rel (0) target = $region47
              $region46: #{_lambda_.25} parent=31 // pred_region
                loop: start=0, step=1, limit=1
                $region48: #{_lambda_.25} parent=46 // loop_pre_header
                  _
                $region49: #{_lambda_.25} parent=46 // loop_header
                  %s232 = sphi 0, %s236
                  %p233 = scmp.ge.s32.totalorder %s232, 1
                  %s237 = sphi %s181, %s181
                  %s238 = sphi %s175, %s175
                $region50: #{_lambda_.25} parent=46 // loop_header_branch
                  %235 = sbr.rel (%p233) target = $region54
                $region51: #{_lambda_.25} parent=46 // loop_body
                  %v239 = vld [vmem:[%s237] sm:$0xff]
                  %240 = vst [vmem:[%s238] sm:$0xff] %v239
                  %v241 = vld [vmem:[%s237 + $0x10] sm:$0xff]
                  %242 = vst [vmem:[%s238 + $0x8] sm:$0xff] %v241
                  %v243 = vld [vmem:[%s237 + $0x20] sm:$0xff]
                  %244 = vst [vmem:[%s238 + $0x10] sm:$0xff] %v243
                  %v245 = vld [vmem:[%s237 + $0x30] sm:$0xff]
                  %246 = vst [vmem:[%s238 + $0x18] sm:$0xff] %v245
                  %v247 = vld [vmem:[%s237 + $0x40] sm:$0xff]
                  %248 = vst [vmem:[%s238 + $0x20] sm:$0xff] %v247
                  %v249 = vld [vmem:[%s237 + $0x50] sm:$0xff]
                  %250 = vst [vmem:[%s238 + $0x28] sm:$0xff] %v249
                  %v251 = vld [vmem:[%s237 + $0x60] sm:$0xff]
                  %252 = vst [vmem:[%s238 + $0x30] sm:$0xff] %v251
                  %v253 = vld [vmem:[%s237 + $0x70] sm:$0xff]
                  %254 = vst [vmem:[%s238 + $0x38] sm:$0xff] %v253
                  %v255 = vld [vmem:[%s237 + $0x80] sm:$0xff]
                  %256 = vst [vmem:[%s238 + $0x40] sm:$0xff] %v255
                  %v257 = vld [vmem:[%s237 + $0x90] sm:$0xff]
                  %258 = vst [vmem:[%s238 + $0x48] sm:$0xff] %v257
                  %v259 = vld [vmem:[%s237 + $0xa0] sm:$0xff]
                  %260 = vst [vmem:[%s238 + $0x50] sm:$0xff] %v259
                  %v261 = vld [vmem:[%s237 + $0xb0] sm:$0xff]
                  %262 = vst [vmem:[%s238 + $0x58] sm:$0xff] %v261
                  %v263 = vld [vmem:[%s237 + $0xc0] sm:$0xff]
                  %264 = vst [vmem:[%s238 + $0x60] sm:$0xff] %v263
                  %v265 = vld [vmem:[%s237 + $0xd0] sm:$0xff]
                  %266 = vst [vmem:[%s238 + $0x68] sm:$0xff] %v265
                  %v267 = vld [vmem:[%s237 + $0xe0] sm:$0xff]
                  %268 = vst [vmem:[%s238 + $0x70] sm:$0xff] %v267
                  %v269 = vld [vmem:[%s237 + $0xf0] sm:$0xff]
                  %270 = vst [vmem:[%s238 + $0x78] sm:$0xff] %v269
                $region52: #{_lambda_.25} parent=46 // loop_footer
                  %s236 = sadd.s32 1, %s232
                $region53: #{_lambda_.25} parent=46 // loop_footer_branch
                  %231 = sbr.rel target = $region49
                $region54: #{_lambda_.25} parent=46 // loop_exit
                  _
              $region47: #{_lambda_.25} parent=31 // pred_fallthru
                _
              // Predicated region
              $region55: #{_lambda_.25} parent=31 // pred_check
                _
              $region56: #{_lambda_.25} parent=31 // pred_check_branch
                %272 = sbr.rel target = $region58
              $region57: #{_lambda_.25} parent=31 // pred_region
                _
              $region58: #{_lambda_.25} parent=31 // pred_fallthru
                _
            $region32: #{_lambda_.25} parent=27 // pred_fallthru
              _
            // Predicated region
            $region33: #{_lambda_.25} parent=27 // pred_check
              _
            $region34: #{_lambda_.25} parent=27 // pred_check_branch
              %187 = sbr.rel target = $region36
            $region35: #{_lambda_.25} parent=27 // pred_region
              loop: start=0, step=1, limit=1
              $region37: #{_lambda_.25} parent=35 // loop_pre_header
                _
              $region38: #{_lambda_.25} parent=35 // loop_header
                %s190 = sphi 0, %s194
                %p191 = scmp.ge.s32.totalorder %s190, 1
                %s195 = sphi %s181, %s181
                %s196 = sphi %s175, %s175
              $region39: #{_lambda_.25} parent=35 // loop_header_branch
                %193 = sbr.rel (%p191) target = $region43
              $region40: #{_lambda_.25} parent=35 // loop_body
                %v197 = vld [vmem:[%s195] sm:$0xff]
                %198 = vst [vmem:[%s196] sm:$0xff] %v197
                %v199 = vld [vmem:[%s195 + $0x10] sm:$0xff]
                %200 = vst [vmem:[%s196 + $0x8] sm:$0xff] %v199
                %v201 = vld [vmem:[%s195 + $0x20] sm:$0xff]
                %202 = vst [vmem:[%s196 + $0x10] sm:$0xff] %v201
                %v203 = vld [vmem:[%s195 + $0x30] sm:$0xff]
                %204 = vst [vmem:[%s196 + $0x18] sm:$0xff] %v203
                %v205 = vld [vmem:[%s195 + $0x40] sm:$0xff]
                %206 = vst [vmem:[%s196 + $0x20] sm:$0xff] %v205
                %v207 = vld [vmem:[%s195 + $0x50] sm:$0xff]
                %208 = vst [vmem:[%s196 + $0x28] sm:$0xff] %v207
                %v209 = vld [vmem:[%s195 + $0x60] sm:$0xff]
                %210 = vst [vmem:[%s196 + $0x30] sm:$0xff] %v209
                %v211 = vld [vmem:[%s195 + $0x70] sm:$0xff]
                %212 = vst [vmem:[%s196 + $0x38] sm:$0xff] %v211
                %v213 = vld [vmem:[%s195 + $0x80] sm:$0xff]
                %214 = vst [vmem:[%s196 + $0x40] sm:$0xff] %v213
                %v215 = vld [vmem:[%s195 + $0x90] sm:$0xff]
                %216 = vst [vmem:[%s196 + $0x48] sm:$0xff] %v215
                %v217 = vld [vmem:[%s195 + $0xa0] sm:$0xff]
                %218 = vst [vmem:[%s196 + $0x50] sm:$0xff] %v217
                %v219 = vld [vmem:[%s195 + $0xb0] sm:$0xff]
                %220 = vst [vmem:[%s196 + $0x58] sm:$0xff] %v219
                %v221 = vld [vmem:[%s195 + $0xc0] sm:$0xff]
                %222 = vst [vmem:[%s196 + $0x60] sm:$0xff] %v221
                %v223 = vld [vmem:[%s195 + $0xd0] sm:$0xff]
                %224 = vst [vmem:[%s196 + $0x68] sm:$0xff] %v223
                %v225 = vld [vmem:[%s195 + $0xe0] sm:$0xff]
                %226 = vst [vmem:[%s196 + $0x70] sm:$0xff] %v225
                %v227 = vld [vmem:[%s195 + $0xf0] sm:$0xff]
                %228 = vst [vmem:[%s196 + $0x78] sm:$0xff] %v227
              $region41: #{_lambda_.25} parent=35 // loop_footer
                %s194 = sadd.s32 1, %s190
              $region42: #{_lambda_.25} parent=35 // loop_footer_branch
                %189 = sbr.rel target = $region38
              $region43: #{_lambda_.25} parent=35 // loop_exit
                _
            $region36: #{_lambda_.25} parent=27 // pred_fallthru
              _
          $region28: #{_lambda_.25} parent=23 // pred_fallthru
            _
          %273 = vnop
        $region24: #{_lambda_.25} parent=19 // pred_fallthru
          _
        // Predicated region
        $region59: #{_lambda_.25} parent=19 // pred_check
          %p274 = pneg %p104
        $region60: #{_lambda_.25} parent=19 // pred_check_branch
          %276 = sbr.rel (%p274) target = $region62
        $region61: #{_lambda_.25} parent=19 // pred_region
          %s277 = smul.u32 2, %s17
          %p278 = scmp.lt.s32.totalorder %s277, 3
          %s279 = scalar_select %p278, %s277, 3
          %s280 = scalar_lea.vmem %s2, %s279
          %s281 = smul.u32 2, %s17
        $region62: #{_lambda_.25} parent=19 // pred_fallthru
          _
      $region20: #{_lambda_.25} parent=5 // pred_fallthru
        _
      %p282 = scmp.le.s32.totalorder 1, %s9
      %p283 = scmp.lt.s32.totalorder %s9, 3
      %p284 = pnand %p282, %p283
      %p285 = pneg %p284
      // Predicated region
      $region63: #{_lambda_.25} parent=5 // pred_check
        _
      $region64: #{_lambda_.25} parent=5 // pred_check_branch
        %287 = sbr.rel (%p284) target = $region66
      $region65: #{_lambda_.25} parent=5 // pred_region
        %s288 = ssub.s32 %s9, 1
        %s289 = sand.u32 %s71, 1
        %s290 = sand.u32 %s71, 1
        %s291 = smul.addr %s290, 128
        %s292 = scalar_lea.vmem [#allocation3], %s291
        // Predicated region
        $region67: #{_lambda_.25} parent=65 // pred_check
          %p293 = pneg %p84
        $region68: #{_lambda_.25} parent=65 // pred_check_branch
          %295 = sbr.rel (%p293) target = $region70
        $region69: #{_lambda_.25} parent=65 // pred_region
          _
        $region70: #{_lambda_.25} parent=65 // pred_fallthru
          _
        %s296 = smul.u32 2, %s19
        %p297 = scmp.lt.s32.totalorder %s296, 1
        %s298 = scalar_select %p297, %s296, 1
        %p299 = scmp.lt.s32.totalorder %s21, 0
        %s300 = scalar_select %p299, %s21, 0
        %s301 = sadd.s32 %s300, %s298
        %s302 = smul.addr %s301, 4
        %s303 = scalar_lea.vmem %s0, %s302
        %p304 = pneg %p56
        %p305 = pneg %p53
        %s306 = sand.u32 %s71, 1
        %s307 = sand.u32 %s71, 1
        %s308 = smul.addr %s307, 128
        %s309 = scalar_lea.vmem [#allocation3], %s308
        %p310 = pneg %p84
        %p311 = pneg %p81
        %s312 = smul.u32 2, %s20
        %p313 = scmp.lt.s32.totalorder %s312, 3
        %s314 = scalar_select %p313, %s312, 3
        %s315 = scalar_lea.vmem %s2, %s314
        %p316 = pneg %p110
        %p317 = pneg %p107
        %p318 = pneg %p138
        %p319 = pneg %p135
        %s320 = sand.u32 %s125, 1
        %s321 = sand.u32 %s125, 1
        %s322 = smul.addr %s321, 16
        %s323 = scalar_lea.vmem [#allocation4], %s322
        %s324 = smul.u32 2, %s19
        %p325 = scmp.lt.s32.totalorder %s324, 1
        %s326 = scalar_select %p325, %s324, 1
        %p327 = scmp.lt.s32.totalorder %s21, 0
        %s328 = scalar_select %p327, %s21, 0
        %s329 = sadd.s32 %s328, %s326
        %s330 = smul.addr %s329, 4
        %s331 = scalar_lea.vmem %s0, %s330
        %s332 = smul.u32 2, %s19
        %s333 = smul.u32 16, %s21
        %s334 = smul.u32 2, %s20
        %s335 = smul.u32 2, %s20
        %p336 = scmp.lt.s32.totalorder %s335, 3
        %s337 = scalar_select %p336, %s335, 3
        %s338 = scalar_lea.vmem %s2, %s337
        %s339 = smul.u32 2, %s20
        %s340 = smul.u32 2, %s19
        %s341 = smul.u32 2, %s20
        %p343 = scmp.eq.s32.totalorder %s21, 0
        // Predicated region
        $region71: #{_lambda_.25} parent=65 // pred_check
          %p344 = pneg %p343
        $region72: #{_lambda_.25} parent=65 // pred_check_branch
          %346 = sbr.rel (%p344) target = $region74
        $region73: #{_lambda_.25} parent=65 // pred_region
          %347 = vst [vmem:[#allocation2] sm:$0xff] 0.0
          %348 = vst [vmem:[#allocation2 + $0x8] sm:$0xff] 0.0
          %349 = vst [vmem:[#allocation2 + $0x10] sm:$0xff] 0.0
          %350 = vst [vmem:[#allocation2 + $0x18] sm:$0xff] 0.0
        $region74: #{_lambda_.25} parent=65 // pred_fallthru
          _
        %v351 = vld [vmem:[#allocation2] sm:$0xff]
        %v352 = vld [vmem:[#allocation2 + $0x8] sm:$0xff]
        %v353 = vld [vmem:[#allocation2 + $0x10] sm:$0xff]
        %v354 = vld [vmem:[#allocation2 + $0x18] sm:$0xff]
        %v355 = vld [vmem:[%s331] sm:$0xf]
        %v356 = vld [vmem:[%s331 + $0x4] sm:$0xf]
        %v357 = vld [vmem:[%s292] sm:$0xff]
        %v358 = vld [vmem:[%s292 + $0x8] sm:$0xff]
        %v359 = vld [vmem:[%s292 + $0x10] sm:$0xff]
        %v360 = vld [vmem:[%s292 + $0x18] sm:$0xff]
        %v361 = vld [vmem:[%s292 + $0x20] sm:$0xff]
        %v362 = vld [vmem:[%s292 + $0x28] sm:$0xff]
        %v363 = vld [vmem:[%s292 + $0x30] sm:$0xff]
        %v364 = vld [vmem:[%s292 + $0x38] sm:$0xff]
        %v365 = vld [vmem:[%s292 + $0x40] sm:$0xff]
        %v366 = vld [vmem:[%s292 + $0x48] sm:$0xff]
        %v367 = vld [vmem:[%s292 + $0x50] sm:$0xff]
        %v368 = vld [vmem:[%s292 + $0x58] sm:$0xff]
        %v369 = vld [vmem:[%s292 + $0x60] sm:$0xff]
        %v370 = vld [vmem:[%s292 + $0x68] sm:$0xff]
        %v371 = vld [vmem:[%s292 + $0x70] sm:$0xff]
        %v372 = vld [vmem:[%s292 + $0x78] sm:$0xff]
        %v375 = vunpack.c.l.b16 %v355
        %v376 = vunpack.c.l.b16 %v356
        %v377 = vpack.c.b16 %v376, %v375
        %v395 = vunpack.c.l.b16 %v357
        %v396 = vunpack.c.h.b16 %v357
        %v397 = vunpack.c.l.b16 %v358
        %v398 = vunpack.c.h.b16 %v358
        %v399 = vunpack.c.l.b16 %v359
        %v400 = vunpack.c.h.b16 %v359
        %v401 = vunpack.c.l.b16 %v360
        %v402 = vunpack.c.h.b16 %v360
        %v403 = vunpack.c.l.b16 %v361
        %v404 = vunpack.c.h.b16 %v361
        %v405 = vunpack.c.l.b16 %v362
        %v406 = vunpack.c.h.b16 %v362
        %v407 = vunpack.c.l.b16 %v363
        %v408 = vunpack.c.h.b16 %v363
        %v409 = vunpack.c.l.b16 %v364
        %v410 = vunpack.c.h.b16 %v364
        %v411 = vunpack.c.l.b16 %v365
        %v412 = vunpack.c.h.b16 %v365
        %v413 = vunpack.c.l.b16 %v366
        %v414 = vunpack.c.h.b16 %v366
        %v415 = vunpack.c.l.b16 %v367
        %v416 = vunpack.c.h.b16 %v367
        %v417 = vunpack.c.l.b16 %v368
        %v418 = vunpack.c.h.b16 %v368
        %v419 = vunpack.c.l.b16 %v369
        %v420 = vunpack.c.h.b16 %v369
        %v421 = vunpack.c.l.b16 %v370
        %v422 = vunpack.c.h.b16 %v370
        %v423 = vunpack.c.l.b16 %v371
        %v424 = vunpack.c.h.b16 %v371
        %v425 = vunpack.c.l.b16 %v372
        %v426 = vunpack.c.h.b16 %v372
        %v427 = vpack.c.b16 %v397, %v395
        %v428 = vpack.c.b16 %v398, %v396
        %v429 = vpack.c.b16 %v401, %v399
        %v430 = vpack.c.b16 %v402, %v400
        %v431 = vpack.c.b16 %v405, %v403
        %v432 = vpack.c.b16 %v406, %v404
        %v433 = vpack.c.b16 %v409, %v407
        %v434 = vpack.c.b16 %v410, %v408
        %v435 = vpack.c.b16 %v413, %v411
        %v436 = vpack.c.b16 %v414, %v412
        %v437 = vpack.c.b16 %v417, %v415
        %v438 = vpack.c.b16 %v418, %v416
        %v439 = vpack.c.b16 %v421, %v419
        %v440 = vpack.c.b16 %v422, %v420
        %v441 = vpack.c.b16 %v425, %v423
        %v442 = vpack.c.b16 %v426, %v424
        %459 = vmatprep.subr.bf16.mxu0 %v428
        %460 = vmatpush1.bf16.msra.mxu0 %v427
        %461 = vmatprep.subr.bf16.mxu0 %v430
        %462 = vmatpush1.bf16.msra.mxu0 %v429
        %463 = vmatprep.subr.bf16.mxu0 %v432
        %464 = vmatpush1.bf16.msra.mxu0 %v431
        %465 = vmatprep.subr.bf16.mxu0 %v434
        %466 = vmatpush1.bf16.msra.mxu0 %v433
        %467 = vmatprep.subr.bf16.mxu0 %v436
        %468 = vmatpush1.bf16.msra.mxu0 %v435
        %469 = vmatprep.subr.bf16.mxu0 %v438
        %470 = vmatpush1.bf16.msra.mxu0 %v437
        %471 = vmatprep.subr.bf16.mxu0 %v440
        %472 = vmatpush1.bf16.msra.mxu0 %v439
        %473 = vmatprep.subr.bf16.mxu0 %v442
        %474 = vmatpush1.bf16.msra.mxu0 %v441
        %475 = vmatprep.subr.bf16.mxu0 0
        %476 = vmatpush1.bf16.msra.mxu0 0
        %477 = vmatprep.subr.bf16.mxu0 0
        %478 = vmatpush1.bf16.msra.mxu0 0
        %479 = vmatprep.subr.bf16.mxu0 0
        %480 = vmatpush1.bf16.msra.mxu0 0
        %481 = vmatprep.subr.bf16.mxu0 0
        %482 = vmatpush1.bf16.msra.mxu0 0
        %483 = vmatprep.subr.bf16.mxu0 0
        %484 = vmatpush1.bf16.msra.mxu0 0
        %485 = vmatprep.subr.bf16.mxu0 0
        %486 = vmatpush1.bf16.msra.mxu0 0
        %487 = vmatprep.subr.bf16.mxu0 0
        %488 = vmatpush1.bf16.msra.mxu0 0
        %489 = vmatprep.subr.bf16.mxu0 0
        %490 = vmatpush1.bf16.msra.mxu0 0
        %491 = vmatprep.mubr.bf16.mxu0 0
        %492 = vmatmul.mubr.bf16.gmra.mrb[0].mxu0 %v377
        %v493 = vpop.f32.mrb[0].mxu0
        %v494 = vadd.f32 0.0, %v493
        %v495 = vpop.f32.mrb[0].mxu0
        %v496 = vadd.f32 0.0, %v495
        %v497 = vpop.f32.mrb[0].mxu0
        %v498 = vadd.f32 0.0, %v497
        %v499 = vpop.f32.mrb[0].mxu0
        %v500 = vadd.f32 0.0, %v499
        %501 = vdwg.mxu0
        %v502 = vadd.f32 %v351, %v494
        %v503 = vadd.f32 %v352, %v496
        %v504 = vadd.f32 %v353, %v498
        %v505 = vadd.f32 %v354, %v500
        %506 = vst [vmem:[#allocation2] sm:$0xff] %v502
        %507 = vst [vmem:[#allocation2 + $0x8] sm:$0xff] %v503
        %508 = vst [vmem:[#allocation2 + $0x10] sm:$0xff] %v504
        %509 = vst [vmem:[#allocation2 + $0x18] sm:$0xff] %v505
        // Predicated region
        $region75: #{_lambda_.25} parent=65 // pred_check
          %p510 = pneg %p343
        $region76: #{_lambda_.25} parent=65 // pred_check_branch
          %512 = sbr.rel (%p510) target = $region78
        $region77: #{_lambda_.25} parent=65 // pred_region
          %v513 = vld [vmem:[#allocation2] sm:$0xff]
          %v514 = vld [vmem:[#allocation2 + $0x8] sm:$0xff]
          %v515 = vld [vmem:[#allocation2 + $0x10] sm:$0xff]
          %v516 = vld [vmem:[#allocation2 + $0x18] sm:$0xff]
          %v517 = vld [vmem:[%s338] sm:$0x3]
          %v519 = vlaneseq
          %v520 = vshrl.u32 %v519, 7
          %v521 = vsub.s32 0, %v520
          %v522 = vrot.slane %v517, %v521
          %v523 = vlaneseq
          %v524 = vshrl.u32 %v523, 7
          %v525 = vsub.s32 1, %v524
          %v526 = vrot.slane %v517, %v525
          %v529 = vadd.f32 %v513, %v522
          %v530 = vadd.f32 %v514, %v526
          %v531 = vadd.f32 %v515, %v522
          %v532 = vadd.f32 %v516, %v526
          %v533 = vpack.c.bf16 %v531, %v529
          %v534 = vpack.c.bf16 %v532, %v530
          %v537 = vunpack.c.l.b16 %v533
          %v538 = vunpack.c.l.b16 %v534
          %v539 = vunpack.c.h.b16 %v533
          %v540 = vunpack.c.h.b16 %v534
          %v541 = vpack.c.b16 %v538, %v537
          %v542 = vpack.c.b16 %v540, %v539
          %545 = vst [vmem:[%s323] sm:$0xff] %v541
          %546 = vst [vmem:[%s323 + $0x8] sm:$0xff] %v542
        $region78: #{_lambda_.25} parent=65 // pred_fallthru
          _
        %s547 = sand.u32 %s125, 1
        %s548 = sand.u32 %s125, 1
        %s549 = smul.addr %s548, 16
        %s550 = scalar_lea.vmem [#allocation4], %s549
        // Predicated region
        $region79: #{_lambda_.25} parent=65 // pred_check
          %p551 = pneg %p135
        $region80: #{_lambda_.25} parent=65 // pred_check_branch
          %553 = sbr.rel (%p551) target = $region82
        $region81: #{_lambda_.25} parent=65 // pred_region
          %s554 = smul.u32 2, %s19
          %s555 = smul.u32 2, %s20
          %s556 = smul.addr %s554, 4
          %s557 = sadd.s32 %s555, %s556
          %s558 = smul.addr %s557, 4
          %s559 = scalar_lea.vmem %s3, %s558
          // Predicated region
          $region83: #{_lambda_.25} parent=81 // pred_check
            _
          $region84: #{_lambda_.25} parent=81 // pred_check_branch
            %561 = sbr.rel (0) target = $region86
          $region85: #{_lambda_.25} parent=81 // pred_region
            // Predicated region
            $region87: #{_lambda_.25} parent=85 // pred_check
              _
            $region88: #{_lambda_.25} parent=85 // pred_check_branch
              %563 = sbr.rel (0) target = $region90
            $region89: #{_lambda_.25} parent=85 // pred_region
              // Predicated region
              $region102: #{_lambda_.25} parent=89 // pred_check
                _
              $region103: #{_lambda_.25} parent=89 // pred_check_branch
                %580 = sbr.rel (0) target = $region105
              $region104: #{_lambda_.25} parent=89 // pred_region
                loop: start=0, step=1, limit=1
                $region106: #{_lambda_.25} parent=104 // loop_pre_header
                  _
                $region107: #{_lambda_.25} parent=104 // loop_header
                  %s582 = sphi 0, %s586
                  %p583 = scmp.ge.s32.totalorder %s582, 1
                  %s587 = sphi %s550, %s550
                  %s588 = sphi %s559, %s559
                $region108: #{_lambda_.25} parent=104 // loop_header_branch
                  %585 = sbr.rel (%p583) target = $region112
                $region109: #{_lambda_.25} parent=104 // loop_body
                  %v589 = vld [vmem:[%s587] sm:$0xff]
                  %590 = vst [vmem:[%s588] sm:$0xff] %v589
                  %v591 = vld [vmem:[%s587 + $0x8] sm:$0xff]
                  %592 = vst [vmem:[%s588 + $0x10] sm:$0xff] %v591
                $region110: #{_lambda_.25} parent=104 // loop_footer
                  %s586 = sadd.s32 1, %s582
                $region111: #{_lambda_.25} parent=104 // loop_footer_branch
                  %581 = sbr.rel target = $region107
                $region112: #{_lambda_.25} parent=104 // loop_exit
                  _
              $region105: #{_lambda_.25} parent=89 // pred_fallthru
                _
              // Predicated region
              $region113: #{_lambda_.25} parent=89 // pred_check
                _
              $region114: #{_lambda_.25} parent=89 // pred_check_branch
                %594 = sbr.rel target = $region116
              $region115: #{_lambda_.25} parent=89 // pred_region
                _
              $region116: #{_lambda_.25} parent=89 // pred_fallthru
                _
            $region90: #{_lambda_.25} parent=85 // pred_fallthru
              _
            // Predicated region
            $region91: #{_lambda_.25} parent=85 // pred_check
              _
            $region92: #{_lambda_.25} parent=85 // pred_check_branch
              %565 = sbr.rel target = $region94
            $region93: #{_lambda_.25} parent=85 // pred_region
              loop: start=0, step=1, limit=1
              $region95: #{_lambda_.25} parent=93 // loop_pre_header
                _
              $region96: #{_lambda_.25} parent=93 // loop_header
                %s568 = sphi 0, %s572
                %p569 = scmp.ge.s32.totalorder %s568, 1
                %s573 = sphi %s550, %s550
                %s574 = sphi %s559, %s559
              $region97: #{_lambda_.25} parent=93 // loop_header_branch
                %571 = sbr.rel (%p569) target = $region101
              $region98: #{_lambda_.25} parent=93 // loop_body
                %v575 = vld [vmem:[%s573] sm:$0xff]
                %576 = vst [vmem:[%s574] sm:$0xff] %v575
                %v577 = vld [vmem:[%s573 + $0x8] sm:$0xff]
                %578 = vst [vmem:[%s574 + $0x10] sm:$0xff] %v577
              $region99: #{_lambda_.25} parent=93 // loop_footer
                %s572 = sadd.s32 1, %s568
              $region100: #{_lambda_.25} parent=93 // loop_footer_branch
                %567 = sbr.rel target = $region96
              $region101: #{_lambda_.25} parent=93 // loop_exit
                _
            $region94: #{_lambda_.25} parent=85 // pred_fallthru
              _
          $region86: #{_lambda_.25} parent=81 // pred_fallthru
            _
          %595 = vnop
        $region82: #{_lambda_.25} parent=65 // pred_fallthru
          _
      $region66: #{_lambda_.25} parent=5 // pred_fallthru
        _
      %p596 = scmp.le.s32.totalorder 2, %s9
      // Predicated region
      $region117: #{_lambda_.25} parent=5 // pred_check
        %p597 = pneg %p596
      $region118: #{_lambda_.25} parent=5 // pred_check_branch
        %599 = sbr.rel (%p597) target = $region120
      $region119: #{_lambda_.25} parent=5 // pred_region
        %s600 = ssub.s32 %s9, 2
        // Predicated region
        $region121: #{_lambda_.25} parent=119 // pred_check
          %p601 = pneg %p141
        $region122: #{_lambda_.25} parent=119 // pred_check_branch
          %603 = sbr.rel (%p601) target = $region124
        $region123: #{_lambda_.25} parent=119 // pred_region
          %s604 = sand.u32 %s126, 1
          %s605 = sand.u32 %s126, 1
          %s606 = smul.addr %s605, 16
          %s607 = scalar_lea.vmem [#allocation4], %s606
        $region124: #{_lambda_.25} parent=119 // pred_fallthru
          _
      $region120: #{_lambda_.25} parent=5 // pred_fallthru
        _
    $region6: #{_lambda_.25} parent=1 // loop_footer
      %s13 = sadd.s32 1, %s9
    $region7: #{_lambda_.25} parent=1 // loop_footer_branch
      %8 = sbr.rel target = $region3
    $region8: #{_lambda_.25} parent=1 // loop_exit
      _

// kernel: _lambda_.28
$region0: #{_lambda_.28}
  #allocation0 [shape = 'u32[]', space=smem, size = 0x4, offset = 0x4, fixed_abs, tag = 'smem constant byte address 0x4 - core index']
  #allocation1 [shape = 'u32[144,128]{1,0:T(1,128)}', space=vmem, size = 0x12000, scoped, tag = 'internal scratch']
  #allocation2 [shape = 'f32[16,128]{1,0:T(8,128)}', space=vmem, size = 0x2000, scoped, tag = 'scratch operand']
  %s0 = inlined_call_operand.vmem [shape: bf16[16,128], index: 0, kind: input, shape index: {}]
  %s1 = inlined_call_operand.vmem [shape: bf16[128,128], index: 1, kind: input, shape index: {}]
  %s2 = inlined_call_operand.vmem [shape: f32[1,128], index: 2, kind: input, shape index: {}]
  %s3 = inlined_call_operand.vmem [shape: bf16[16,128], index: 3, kind: output, shape index: {}]
  %s4 = sld [smem:[#allocation0]]
  $region30: #{_lambda_.28} parent=0
    _
  %s6 = ssub.s32 1, %s4
  %s7 = scalar_select 0, %s6, %s4
  // Predicated region
  $region2: #{_lambda_.28} parent=0 // pred_check
    _
  $region3: #{_lambda_.28} parent=0 // pred_check_branch
    %9 = sbr.rel (0) target = $region5
  $region4: #{_lambda_.28} parent=0 // pred_region
    _
  $region5: #{_lambda_.28} parent=0 // pred_fallthru
    _
  // Predicated region
  $region6: #{_lambda_.28} parent=0 // pred_check
    _
  $region7: #{_lambda_.28} parent=0 // pred_check_branch
    %11 = sbr.rel (0) target = $region9
  $region8: #{_lambda_.28} parent=0 // pred_region
    _
  $region9: #{_lambda_.28} parent=0 // pred_fallthru
    _
  // Predicated region
  $region10: #{_lambda_.28} parent=0 // pred_check
    _
  $region11: #{_lambda_.28} parent=0 // pred_check_branch
    %13 = sbr.rel (0) target = $region13
  $region12: #{_lambda_.28} parent=0 // pred_region
    _
  $region13: #{_lambda_.28} parent=0 // pred_fallthru
    _
  %p15 = scmp.eq.s32.totalorder 0, 0
  // Predicated region
  $region14: #{_lambda_.28} parent=0 // pred_check
    %p16 = pneg %p15
  $region15: #{_lambda_.28} parent=0 // pred_check_branch
    %18 = sbr.rel (%p16) target = $region17
  $region16: #{_lambda_.28} parent=0 // pred_region
    %19 = vst [vmem:[#allocation2] sm:$0xff] 0.0
    %20 = vst [vmem:[#allocation2 + $0x8] sm:$0xff] 0.0
  $region17: #{_lambda_.28} parent=0 // pred_fallthru
    _
  %v21 = vld [vmem:[#allocation2] sm:$0xff]
  %v22 = vld [vmem:[#allocation2 + $0x8] sm:$0xff]
  %v23 = vld [vmem:[%s0] sm:$0xf]
  %v24 = vld [vmem:[%s0 + $0x4] sm:$0xf]
  %v25 = vld [vmem:[%s1] sm:$0xf]
  %v26 = vld [vmem:[%s1 + $0x4] sm:$0xf]
  %v27 = vld [vmem:[%s1 + $0x8] sm:$0xf]
  %v28 = vld [vmem:[%s1 + $0xc] sm:$0xf]
  %v29 = vld [vmem:[%s1 + $0x10] sm:$0xf]
  %v30 = vld [vmem:[%s1 + $0x14] sm:$0xf]
  %v31 = vld [vmem:[%s1 + $0x18] sm:$0xf]
  %v32 = vld [vmem:[%s1 + $0x1c] sm:$0xf]
  %v33 = vld [vmem:[%s1 + $0x20] sm:$0xf]
  %v34 = vld [vmem:[%s1 + $0x24] sm:$0xf]
  %v35 = vld [vmem:[%s1 + $0x28] sm:$0xf]
  %v36 = vld [vmem:[%s1 + $0x2c] sm:$0xf]
  %v37 = vld [vmem:[%s1 + $0x30] sm:$0xf]
  %v38 = vld [vmem:[%s1 + $0x34] sm:$0xf]
  %v39 = vld [vmem:[%s1 + $0x38] sm:$0xf]
  %v40 = vld [vmem:[%s1 + $0x3c] sm:$0xf]
  %v43 = vunpack.c.l.b16 %v23
  %v44 = vunpack.c.l.b16 %v24
  %v45 = vpack.c.b16 %v44, %v43
  %v63 = vunpack.c.l.b16 %v25
  %v64 = vunpack.c.l.b16 %v26
  %v65 = vunpack.c.l.b16 %v27
  %v66 = vunpack.c.l.b16 %v28
  %v67 = vunpack.c.l.b16 %v29
  %v68 = vunpack.c.l.b16 %v30
  %v69 = vunpack.c.l.b16 %v31
  %v70 = vunpack.c.l.b16 %v32
  %v71 = vunpack.c.l.b16 %v33
  %v72 = vunpack.c.l.b16 %v34
  %v73 = vunpack.c.l.b16 %v35
  %v74 = vunpack.c.l.b16 %v36
  %v75 = vunpack.c.l.b16 %v37
  %v76 = vunpack.c.l.b16 %v38
  %v77 = vunpack.c.l.b16 %v39
  %v78 = vunpack.c.l.b16 %v40
  %v79 = vpack.c.b16 %v64, %v63
  %v80 = vpack.c.b16 %v66, %v65
  %v81 = vpack.c.b16 %v68, %v67
  %v82 = vpack.c.b16 %v70, %v69
  %v83 = vpack.c.b16 %v72, %v71
  %v84 = vpack.c.b16 %v74, %v73
  %v85 = vpack.c.b16 %v76, %v75
  %v86 = vpack.c.b16 %v78, %v77
  %95 = vmatprep.subr.bf16.mxu0 0
  %96 = vmatpush1.bf16.msra.mxu0 %v79
  %97 = vmatprep.subr.bf16.mxu0 0
  %98 = vmatpush1.bf16.msra.mxu0 %v80
  %99 = vmatprep.subr.bf16.mxu0 0
  %100 = vmatpush1.bf16.msra.mxu0 %v81
  %101 = vmatprep.subr.bf16.mxu0 0
  %102 = vmatpush1.bf16.msra.mxu0 %v82
  %103 = vmatprep.subr.bf16.mxu0 0
  %104 = vmatpush1.bf16.msra.mxu0 %v83
  %105 = vmatprep.subr.bf16.mxu0 0
  %106 = vmatpush1.bf16.msra.mxu0 %v84
  %107 = vmatprep.subr.bf16.mxu0 0
  %108 = vmatpush1.bf16.msra.mxu0 %v85
  %109 = vmatprep.subr.bf16.mxu0 0
  %110 = vmatpush1.bf16.msra.mxu0 %v86
  %111 = vmatprep.subr.bf16.mxu0 0
  %112 = vmatpush1.bf16.msra.mxu0 0
  %113 = vmatprep.subr.bf16.mxu0 0
  %114 = vmatpush1.bf16.msra.mxu0 0
  %115 = vmatprep.subr.bf16.mxu0 0
  %116 = vmatpush1.bf16.msra.mxu0 0
  %117 = vmatprep.subr.bf16.mxu0 0
  %118 = vmatpush1.bf16.msra.mxu0 0
  %119 = vmatprep.subr.bf16.mxu0 0
  %120 = vmatpush1.bf16.msra.mxu0 0
  %121 = vmatprep.subr.bf16.mxu0 0
  %122 = vmatpush1.bf16.msra.mxu0 0
  %123 = vmatprep.subr.bf16.mxu0 0
  %124 = vmatpush1.bf16.msra.mxu0 0
  %125 = vmatprep.subr.bf16.mxu0 0
  %126 = vmatpush1.bf16.msra.mxu0 0
  %127 = vmatprep.mubr.bf16.mxu0 0
  %128 = vmatmul.mubr.bf16.gmra.mrb[0].mxu0 %v45
  %v129 = vpop.f32.mrb[0].mxu0
  %v130 = vadd.f32 0.0, %v129
  %v131 = vpop.f32.mrb[0].mxu0
  %v132 = vpop.f32.mrb[0].mxu0
  %v133 = vadd.f32 0.0, %v132
  %v134 = vpop.f32.mrb[0].mxu0
  %135 = vdwg.mxu0
  %v136 = vadd.f32 %v21, %v130
  %v137 = vadd.f32 %v22, %v133
  %138 = vst [vmem:[#allocation2] sm:$0xff] %v136
  %139 = vst [vmem:[#allocation2 + $0x8] sm:$0xff] %v137
  // Predicated region
  $region18: #{_lambda_.28} parent=0 // pred_check
    %p140 = pneg %p15
  $region19: #{_lambda_.28} parent=0 // pred_check_branch
    %142 = sbr.rel (%p140) target = $region21
  $region20: #{_lambda_.28} parent=0 // pred_region
    %v143 = vld [vmem:[#allocation2] sm:$0xff]
    %v144 = vld [vmem:[#allocation2 + $0x8] sm:$0xff]
    %v145 = vld [vmem:[%s2] sm:$0x1]
    %v147 = vlaneseq
    %v148 = vshrl.u32 %v147, 7
    %v149 = vsub.s32 0, %v148
    %v150 = vrot.slane %v145, %v149
    %v152 = vadd.f32 %v143, %v150
    %v153 = vadd.f32 %v144, %v150
    %v154 = vpack.c.bf16 %v153, %v152
    %v156 = vunpack.c.l.b16 %v154
    %v157 = vunpack.c.h.b16 %v154
    %v158 = vpack.c.b16 %v156, %v156
    %v159 = vpack.c.b16 %v157, %v157
    %162 = vst [vmem:[%s3] sm:$0xf] %v158
    %163 = vst [vmem:[%s3 + $0x4] sm:$0xf] %v159
  $region21: #{_lambda_.28} parent=0 // pred_fallthru
    _
  // Predicated region
  $region22: #{_lambda_.28} parent=0 // pred_check
    _
  $region23: #{_lambda_.28} parent=0 // pred_check_branch
    %165 = sbr.rel (0) target = $region25
  $region24: #{_lambda_.28} parent=0 // pred_region
    _
  $region25: #{_lambda_.28} parent=0 // pred_fallthru
    _
  // Predicated region
  $region26: #{_lambda_.28} parent=0 // pred_check
    _
  $region27: #{_lambda_.28} parent=0 // pred_check_branch
    %167 = sbr.rel (0) target = $region29
  $region28: #{_lambda_.28} parent=0 // pred_region
    _
  $region29: #{_lambda_.28} parent=0 // pred_fallthru
    _

// kernel: _lambda_.29
$region0: #{_lambda_.29}
  #allocation0 [shape = 'u32[]', space=smem, size = 0x4, offset = 0x4, fixed_abs, tag = 'smem constant byte address 0x4 - core index']
  #allocation1 [shape = 'u32[144,128]{1,0:T(1,128)}', space=vmem, size = 0x12000, scoped, tag = 'internal scratch']
  %s0 = inlined_call_operand.vmem [shape: bf16[16,128], index: 0, kind: input, shape index: {}]
  %s1 = inlined_call_operand.vmem [shape: bf16[16,128], index: 1, kind: input, shape index: {}]
  %s2 = inlined_call_operand.vmem [shape: f32[1,128], index: 2, kind: input, shape index: {}]
  %s3 = inlined_call_operand.vmem [shape: f32[1,128], index: 3, kind: input, shape index: {}]
  %s4 = inlined_call_operand.vmem [shape: bf16[16,128], index: 4, kind: output, shape index: {}]
  %s5 = sld [smem:[#allocation0]]
  $region26: #{_lambda_.29} parent=0
    _
  %s7 = ssub.s32 1, %s5
  %s8 = scalar_select 0, %s7, %s5
  // Predicated region
  $region2: #{_lambda_.29} parent=0 // pred_check
    _
  $region3: #{_lambda_.29} parent=0 // pred_check_branch
    %10 = sbr.rel (0) target = $region5
  $region4: #{_lambda_.29} parent=0 // pred_region
    _
  $region5: #{_lambda_.29} parent=0 // pred_fallthru
    _
  // Predicated region
  $region6: #{_lambda_.29} parent=0 // pred_check
    _
  $region7: #{_lambda_.29} parent=0 // pred_check_branch
    %12 = sbr.rel (0) target = $region9
  $region8: #{_lambda_.29} parent=0 // pred_region
    _
  $region9: #{_lambda_.29} parent=0 // pred_fallthru
    _
  // Predicated region
  $region10: #{_lambda_.29} parent=0 // pred_check
    _
  $region11: #{_lambda_.29} parent=0 // pred_check_branch
    %14 = sbr.rel (0) target = $region13
  $region12: #{_lambda_.29} parent=0 // pred_region
    _
  $region13: #{_lambda_.29} parent=0 // pred_fallthru
    _
  // Predicated region
  $region14: #{_lambda_.29} parent=0 // pred_check
    _
  $region15: #{_lambda_.29} parent=0 // pred_check_branch
    %16 = sbr.rel (0) target = $region17
  $region16: #{_lambda_.29} parent=0 // pred_region
    _
  $region17: #{_lambda_.29} parent=0 // pred_fallthru
    _
  %v17 = vld [vmem:[%s0] sm:$0xf]
  %v18 = vld [vmem:[%s0 + $0x4] sm:$0xf]
  %v19 = vunpack.c.l.bf16 %v17
  %v20 = vunpack.c.l.bf16 %v18
  %v21 = vld [vmem:[%s1] sm:$0xf]
  %v22 = vld [vmem:[%s1 + $0x4] sm:$0xf]
  %v23 = vunpack.c.l.bf16 %v21
  %v24 = vunpack.c.l.bf16 %v22
  %v25 = vadd.f32 %v19, %v23
  %v26 = vadd.f32 %v20, %v24
  %27 = vadd.xlane.f32.xlu0 %v25
  %v28 = vpop.xlane.xlu0 %27
  %29 = vadd.xlane.f32.xlu0 %v26
  %v30 = vpop.xlane.xlu0 %29
  %v31 = vrcp.pop 128.0
  %v32 = vmul.f32 %v28, %v31
  %v33 = vmul.f32 %v30, %v31
  %v34 = vsub.f32 %v25, %v32
  %v35 = vsub.f32 %v26, %v33
  %v36 = vmul.f32 %v34, %v34
  %v37 = vmul.f32 %v35, %v35
  %38 = vadd.xlane.f32.xlu0 %v36
  %v39 = vpop.xlane.xlu0 %38
  %40 = vadd.xlane.f32.xlu0 %v37
  %v41 = vpop.xlane.xlu0 %40
  %v42 = vmul.f32 %v39, %v31
  %v43 = vmul.f32 %v41, %v31
  %v44 = vadd.f32 %v42, 1e-05
  %v45 = vadd.f32 %v43, 1e-05
  %v46 = vrsqrt.pop %v44
  %v47 = vrsqrt.pop %v45
  %v48 = vmul.f32 %v34, %v46
  %v49 = vmul.f32 %v35, %v47
  %v50 = vld [vmem:[%s2] sm:$0x1]
  %v52 = vlaneseq
  %v53 = vshrl.u32 %v52, 7
  %v54 = vsub.s32 0, %v53
  %v55 = vrot.slane %v50, %v54
  %v57 = vmul.f32 %v48, %v55
  %v58 = vmul.f32 %v49, %v55
  %v59 = vld [vmem:[%s3] sm:$0x1]
  %v61 = vlaneseq
  %v62 = vshrl.u32 %v61, 7
  %v63 = vsub.s32 0, %v62
  %v64 = vrot.slane %v59, %v63
  %v66 = vadd.f32 %v57, %v64
  %v67 = vadd.f32 %v58, %v64
  %v68 = vpack.c.bf16 %v67, %v66
  %v70 = vunpack.c.l.b16 %v68
  %v71 = vunpack.c.h.b16 %v68
  %v72 = vpack.c.b16 %v70, %v70
  %v73 = vpack.c.b16 %v71, %v71
  %76 = vst [vmem:[%s4] sm:$0xf] %v72
  %77 = vst [vmem:[%s4 + $0x4] sm:$0xf] %v73
  // Predicated region
  $region18: #{_lambda_.29} parent=0 // pred_check
    _
  $region19: #{_lambda_.29} parent=0 // pred_check_branch
    %79 = sbr.rel (0) target = $region21
  $region20: #{_lambda_.29} parent=0 // pred_region
    _
  $region21: #{_lambda_.29} parent=0 // pred_fallthru
    _
  // Predicated region
  $region22: #{_lambda_.29} parent=0 // pred_check
    _
  $region23: #{_lambda_.29} parent=0 // pred_check_branch
    %81 = sbr.rel (0) target = $region25
  $region24: #{_lambda_.29} parent=0 // pred_region
    _
  $region25: #{_lambda_.29} parent=0 // pred_fallthru
    _

// kernel: _lambda_.27
$region0: #{_lambda_.27}
  #allocation0 [shape = 'u32[]', space=smem, size = 0x4, offset = 0x4, fixed_abs, tag = 'smem constant byte address 0x4 - core index']
  #allocation1 [shape = 'u32[144,128]{1,0:T(1,128)}', space=vmem, size = 0x12000, scoped, tag = 'internal scratch']
  %s0 = inlined_call_operand.vmem [shape: bf16[2,8,512], index: 0, kind: input, shape index: {}, may-alias: {0,1,2}]
  %s1 = inlined_call_operand.vmem [shape: bf16[2,8,512], index: 1, kind: input, shape index: {}, may-alias: {0,1,2}]
  %s2 = inlined_call_operand.vmem [shape: bf16[2,8,512], index: 2, kind: input, shape index: {}, may-alias: {0,1,2}]
  %s3 = inlined_call_operand.vmem [shape: f32[1,8,8], index: 3, kind: input, shape index: {}]
  %s4 = inlined_call_operand.vmem [shape: bf16[2,8,128], index: 4, kind: output, shape index: {}]
  %s5 = sld [smem:[#allocation0]]
  $region49: #{_lambda_.27} parent=0
    _
  %s7 = ssub.s32 1, %s5
  %s8 = scalar_select 0, %s7, %s5
  loop: start=0, step=1, limit=4
  $region2: #{_lambda_.27} parent=0 // loop_pre_header
    _
  $region3: #{_lambda_.27} parent=0 // loop_header
    %s10 = sphi 0, %s14
    %p11 = scmp.ge.s32.totalorder %s10, 4
    %s20 = sphi 0, %s22
    %s23 = sphi 0, %s20
    %s24 = sphi 0, %s23
    %s40 = sphi 0, %s24
    %s46 = sphi 0, %s48
    %s49 = sphi 0, %s46
    %s50 = sphi 0, %s49
    %s66 = sphi 0, %s50
    %s72 = sphi 0, %s74
    %s75 = sphi 0, %s72
    %s76 = sphi 0, %s75
    %s92 = sphi 0, %s76
    %s96 = sphi 0, %s96
    %s98 = sphi 0, %s96
    %s99 = sphi 0, %s98
    %s113 = sphi 0, %s99
    %s119 = sphi 0, %s121
    %s122 = sphi 0, %s119
    %s123 = sphi 0, %s122
    %s139 = sphi 0, %s123
  $region4: #{_lambda_.27} parent=0 // loop_header_branch
    %13 = sbr.rel (%p11) target = $region8
  $region5: #{_lambda_.27} parent=0 // loop_body
    %s15 = ssub.s32 %s10, 1
    %s16 = ssub.s32 %s10, 2
    %s17 = sadd.s32 %s10, 1
    %s18 = ssub.s32 %s10, %s17
    %p19 = scmp.eq.s32.totalorder %s18, 0
    %s21 = sadd.s32 %s20, 1
    %s22 = scalar_select %p19, %s20, %s21
    %p25 = pneg %p19
    %p26 = scmp.eq.s32.totalorder %s10, 1
    %p27 = por %p25, %p26
    %p28 = scmp.ne.s32.totalorder %s20, %s23
    %p29 = scmp.eq.s32.totalorder %s10, 0
    %p30 = por %p28, %p29
    %p31 = scmp.ne.s32.totalorder %s20, %s23
    %p32 = scmp.eq.s32.totalorder %s15, 1
    %p33 = por %p31, %p32
    %p34 = scmp.ne.s32.totalorder %s23, %s24
    %p35 = scmp.eq.s32.totalorder %s15, 0
    %p36 = por %p34, %p35
    %p37 = scmp.ne.s32.totalorder %s23, %s24
    %p38 = scmp.eq.s32.totalorder %s16, 1
    %p39 = por %p37, %p38
    %p41 = scmp.ne.s32.totalorder %s24, %s40
    %p42 = scmp.eq.s32.totalorder %s16, 0
    %p43 = por %p41, %p42
    %s44 = ssub.s32 %s10, %s17
    %p45 = scmp.eq.s32.totalorder %s44, 0
    %s47 = sadd.s32 %s46, 1
    %s48 = scalar_select %p45, %s46, %s47
    %p51 = pneg %p45
    %p52 = scmp.eq.s32.totalorder %s10, 1
    %p53 = por %p51, %p52
    %p54 = scmp.ne.s32.totalorder %s46, %s49
    %p55 = scmp.eq.s32.totalorder %s10, 0
    %p56 = por %p54, %p55
    %p57 = scmp.ne.s32.totalorder %s46, %s49
    %p58 = scmp.eq.s32.totalorder %s15, 1
    %p59 = por %p57, %p58
    %p60 = scmp.ne.s32.totalorder %s49, %s50
    %p61 = scmp.eq.s32.totalorder %s15, 0
    %p62 = por %p60, %p61
    %p63 = scmp.ne.s32.totalorder %s49, %s50
    %p64 = scmp.eq.s32.totalorder %s16, 1
    %p65 = por %p63, %p64
    %p67 = scmp.ne.s32.totalorder %s50, %s66
    %p68 = scmp.eq.s32.totalorder %s16, 0
    %p69 = por %p67, %p68
    %s70 = ssub.s32 %s10, %s17
    %p71 = scmp.eq.s32.totalorder %s70, 0
    %s73 = sadd.s32 %s72, 1
    %s74 = scalar_select %p71, %s72, %s73
    %p77 = pneg %p71
    %p78 = scmp.eq.s32.totalorder %s10, 1
    %p79 = por %p77, %p78
    %p80 = scmp.ne.s32.totalorder %s72, %s75
    %p81 = scmp.eq.s32.totalorder %s10, 0
    %p82 = por %p80, %p81
    %p83 = scmp.ne.s32.totalorder %s72, %s75
    %p84 = scmp.eq.s32.totalorder %s15, 1
    %p85 = por %p83, %p84
    %p86 = scmp.ne.s32.totalorder %s75, %s76
    %p87 = scmp.eq.s32.totalorder %s15, 0
    %p88 = por %p86, %p87
    %p89 = scmp.ne.s32.totalorder %s75, %s76
    %p90 = scmp.eq.s32.totalorder %s16, 1
    %p91 = por %p89, %p90
    %p93 = scmp.ne.s32.totalorder %s76, %s92
    %p94 = scmp.eq.s32.totalorder %s16, 0
    %p95 = por %p93, %p94
    %s97 = sadd.s32 %s96, 1
    %p100 = scmp.eq.s32.totalorder %s10, 1
    %p101 = scmp.ne.s32.totalorder %s96, %s98
    %p102 = scmp.eq.s32.totalorder %s10, 0
    %p103 = por %p101, %p102
    %p104 = scmp.ne.s32.totalorder %s96, %s98
    %p105 = scmp.eq.s32.totalorder %s15, 1
    %p106 = por %p104, %p105
    %p107 = scmp.ne.s32.totalorder %s98, %s99
    %p108 = scmp.eq.s32.totalorder %s15, 0
    %p109 = por %p107, %p108
    %p110 = scmp.ne.s32.totalorder %s98, %s99
    %p111 = scmp.eq.s32.totalorder %s16, 1
    %p112 = por %p110, %p111
    %p114 = scmp.ne.s32.totalorder %s99, %s113
    %p115 = scmp.eq.s32.totalorder %s16, 0
    %p116 = por %p114, %p115
    %s117 = ssub.s32 %s10, %s17
    %p118 = scmp.eq.s32.totalorder %s117, 0
    %s120 = sadd.s32 %s119, 1
    %s121 = scalar_select %p118, %s119, %s120
    %p124 = pneg %p118
    %p125 = scmp.eq.s32.totalorder %s10, 1
    %p126 = por %p124, %p125
    %p127 = scmp.ne.s32.totalorder %s119, %s122
    %p128 = scmp.eq.s32.totalorder %s10, 0
    %p129 = por %p127, %p128
    %p130 = scmp.ne.s32.totalorder %s119, %s122
    %p131 = scmp.eq.s32.totalorder %s15, 1
    %p132 = por %p130, %p131
    %p133 = scmp.ne.s32.totalorder %s122, %s123
    %p134 = scmp.eq.s32.totalorder %s15, 0
    %p135 = por %p133, %p134
    %p136 = scmp.ne.s32.totalorder %s122, %s123
    %p137 = scmp.eq.s32.totalorder %s16, 1
    %p138 = por %p136, %p137
    %p140 = scmp.ne.s32.totalorder %s123, %s139
    %p141 = scmp.eq.s32.totalorder %s16, 0
    %p142 = por %p140, %p141
    %p143 = scmp.le.s32.totalorder 1, %s10
    %p144 = scmp.lt.s32.totalorder %s10, 3
    %p145 = pnand %p143, %p144
    %p146 = pneg %p145
    // Predicated region
    $region9: #{_lambda_.27} parent=5 // pred_check
      _
    $region10: #{_lambda_.27} parent=5 // pred_check_branch
      %148 = sbr.rel (%p145) target = $region12
    $region11: #{_lambda_.27} parent=5 // pred_region
      %s149 = ssub.s32 %s10, 1
      // Predicated region
      $region13: #{_lambda_.27} parent=11 // pred_check
        %p150 = pneg %p109
      $region14: #{_lambda_.27} parent=11 // pred_check_branch
        %152 = sbr.rel (%p150) target = $region16
      $region15: #{_lambda_.27} parent=11 // pred_region
        _
      $region16: #{_lambda_.27} parent=11 // pred_fallthru
        _
    $region12: #{_lambda_.27} parent=5 // pred_fallthru
      _
    %p153 = scmp.lt.s32.totalorder %s10, 2
    // Predicated region
    $region17: #{_lambda_.27} parent=5 // pred_check
      %p154 = pneg %p153
    $region18: #{_lambda_.27} parent=5 // pred_check_branch
      %156 = sbr.rel (%p154) target = $region20
    $region19: #{_lambda_.27} parent=5 // pred_region
      // Predicated region
      $region21: #{_lambda_.27} parent=19 // pred_check
        %p157 = pneg %p30
      $region22: #{_lambda_.27} parent=19 // pred_check_branch
        %159 = sbr.rel (%p157) target = $region24
      $region23: #{_lambda_.27} parent=19 // pred_region
        %p160 = scmp.lt.s32.totalorder %s10, 1
        %s161 = scalar_select %p160, %s10, 1
        %s162 = smul.addr %s161, 4
        %s163 = smul.addr %s162, 4
        %s164 = scalar_lea.vmem %s0, %s163
      $region24: #{_lambda_.27} parent=19 // pred_fallthru
        _
      // Predicated region
      $region25: #{_lambda_.27} parent=19 // pred_check
        %p165 = pneg %p56
      $region26: #{_lambda_.27} parent=19 // pred_check_branch
        %167 = sbr.rel (%p165) target = $region28
      $region27: #{_lambda_.27} parent=19 // pred_region
        %p168 = scmp.lt.s32.totalorder %s10, 1
        %s169 = scalar_select %p168, %s10, 1
        %s170 = smul.addr %s169, 4
        %s171 = sadd.s32 1, %s170
        %s172 = smul.addr %s171, 4
        %s173 = scalar_lea.vmem %s1, %s172
      $region28: #{_lambda_.27} parent=19 // pred_fallthru
        _
      // Predicated region
      $region29: #{_lambda_.27} parent=19 // pred_check
        %p174 = pneg %p82
      $region30: #{_lambda_.27} parent=19 // pred_check_branch
        %176 = sbr.rel (%p174) target = $region32
      $region31: #{_lambda_.27} parent=19 // pred_region
        %p177 = scmp.lt.s32.totalorder %s10, 1
        %s178 = scalar_select %p177, %s10, 1
        %s179 = smul.addr %s178, 4
        %s180 = sadd.s32 2, %s179
        %s181 = smul.addr %s180, 4
        %s182 = scalar_lea.vmem %s2, %s181
      $region32: #{_lambda_.27} parent=19 // pred_fallthru
        _
    $region20: #{_lambda_.27} parent=5 // pred_fallthru
      _
    %p183 = scmp.le.s32.totalorder 1, %s10
    %p184 = scmp.lt.s32.totalorder %s10, 3
    %p185 = pnand %p183, %p184
    %p186 = pneg %p185
    // Predicated region
    $region33: #{_lambda_.27} parent=5 // pred_check
      _
    $region34: #{_lambda_.27} parent=5 // pred_check_branch
      %188 = sbr.rel (%p185) target = $region36
    $region35: #{_lambda_.27} parent=5 // pred_region
      %s189 = ssub.s32 %s10, 1
      %p190 = scmp.lt.s32.totalorder %s15, 1
      %s191 = scalar_select %p190, %s15, 1
      %s192 = smul.addr %s191, 4
      %s193 = smul.addr %s192, 4
      %s194 = scalar_lea.vmem %s0, %s193
      %p195 = pneg %p36
      %p196 = pneg %p33
      %p197 = scmp.lt.s32.totalorder %s15, 1
      %s198 = scalar_select %p197, %s15, 1
      %s199 = smul.addr %s198, 4
      %s200 = sadd.s32 1, %s199
      %s201 = smul.addr %s200, 4
      %s202 = scalar_lea.vmem %s1, %s201
      %p203 = pneg %p62
      %p204 = pneg %p59
      %p205 = scmp.lt.s32.totalorder %s15, 1
      %s206 = scalar_select %p205, %s15, 1
      %s207 = smul.addr %s206, 4
      %s208 = sadd.s32 2, %s207
      %s209 = smul.addr %s208, 4
      %s210 = scalar_lea.vmem %s2, %s209
      %p211 = pneg %p88
      %p212 = pneg %p85
      %p213 = pneg %p109
      %p214 = pneg %p106
      %p215 = pneg %p135
      %p216 = pneg %p132
      %p217 = scmp.lt.s32.totalorder %s15, 1
      %s218 = scalar_select %p217, %s15, 1
      %s219 = smul.addr %s218, 4
      %s220 = scalar_lea.vmem %s4, %s219
      %p221 = scmp.lt.s32.totalorder %s15, 1
      %s222 = scalar_select %p221, %s15, 1
      %s223 = smul.addr %s222, 4
      %s224 = smul.addr %s223, 4
      %s225 = scalar_lea.vmem %s0, %s224
      %p226 = scmp.lt.s32.totalorder %s15, 1
      %s227 = scalar_select %p226, %s15, 1
      %s228 = smul.addr %s227, 4
      %s229 = sadd.s32 1, %s228
      %s230 = smul.addr %s229, 4
      %s231 = scalar_lea.vmem %s1, %s230
      %p232 = scmp.lt.s32.totalorder %s15, 1
      %s233 = scalar_select %p232, %s15, 1
      %s234 = smul.addr %s233, 4
      %s235 = sadd.s32 2, %s234
      %s236 = smul.addr %s235, 4
      %s237 = scalar_lea.vmem %s2, %s236
      %p238 = scmp.lt.s32.totalorder %s15, 1
      %s239 = scalar_select %p238, %s15, 1
      %s240 = smul.addr %s239, 4
      %s241 = scalar_lea.vmem %s4, %s240
      %v244 = vld [vmem:[%s225] sm:$0xf]
      %v245 = vmul.bf16 %v244, 1043676725
      %v246 = vld [vmem:[%s231] sm:$0xf]
      %v247 = vld [vmem:[%s237] sm:$0xf]
      %v248 = vld [vmem:[%s3] sm:$0xff]
      %vm249 = vcmask 261120
      %v251 = vsel %vm249, %v245, 0
      %v254 = vsel %vm249, %v246, 0
      %256 = vmatprep.subr.bf16.mxu0 0
      %257 = vmatpush1.bf16.xpose.msra.mxu0 %v254
      %258 = vmatprep.subr.bf16.mxu0 0
      %259 = vmatpush1.bf16.xpose.msra.mxu0 0
      %260 = vmatprep.subr.bf16.mxu0 0
      %261 = vmatpush1.bf16.xpose.msra.mxu0 0
      %262 = vmatprep.subr.bf16.mxu0 0
      %263 = vmatpush1.bf16.xpose.msra.mxu0 0
      %264 = vmatprep.subr.bf16.mxu0 0
      %265 = vmatpush1.bf16.xpose.msra.mxu0 0
      %266 = vmatprep.subr.bf16.mxu0 0
      %267 = vmatpush1.bf16.xpose.msra.mxu0 0
      %268 = vmatprep.subr.bf16.mxu0 0
      %269 = vmatpush1.bf16.xpose.msra.mxu0 0
      %270 = vmatprep.subr.bf16.mxu0 0
      %271 = vmatpush1.bf16.xpose.msra.mxu0 0
      %272 = vmatprep.subr.bf16.mxu0 0
      %273 = vmatpush1.bf16.xpose.msra.mxu0 0
      %274 = vmatprep.subr.bf16.mxu0 0
      %275 = vmatpush1.bf16.xpose.msra.mxu0 0
      %276 = vmatprep.subr.bf16.mxu0 0
      %277 = vmatpush1.bf16.xpose.msra.mxu0 0
      %278 = vmatprep.subr.bf16.mxu0 0
      %279 = vmatpush1.bf16.xpose.msra.mxu0 0
      %280 = vmatprep.subr.bf16.mxu0 0
      %281 = vmatpush1.bf16.xpose.msra.mxu0 0
      %282 = vmatprep.subr.bf16.mxu0 0
      %283 = vmatpush1.bf16.xpose.msra.mxu0 0
      %284 = vmatprep.subr.bf16.mxu0 0
      %285 = vmatpush1.bf16.xpose.msra.mxu0 0
      %286 = vmatprep.subr.bf16.mxu0 0
      %287 = vmatpush1.bf16.xpose.msra.mxu0 0
      %288 = vmatprep.mubr.bf16.mxu0 0
      %289 = vmatmul.mubr.bf16.gmra.mrb[0].mxu0 %v251
      %v290 = vpop.f32.mrb[0].mxu0
      %v291 = vadd.f32 %v248, %v290
      %v292 = vpop.f32.mrb[0].mxu0
      %v293 = vpop.f32.mrb[0].mxu0
      %v294 = vpop.f32.mrb[0].mxu0
      %295 = vdwg.mxu0
      %vm296 = vcmask 64512
      %v297 = vsel %vm296, %v291, -inf
      %298 = vmax.xlane.f32.xlu0 %v297
      %v299 = vpop.xlane.xlu0 %298
      %v300 = vsub.f32 %v291, %v299
      %v301 = vmul.f32 %v300, 1.442695
      %v302 = vpow.pop %v301
      %v303 = vsel %vm296, %v302, 0.0
      %304 = vadd.xlane.f32.xlu0 %v303
      %v305 = vpop.xlane.xlu0 %304
      %v306 = vrcp.pop %v305
      %v307 = vmul.f32 %v302, %v306
      %v308 = vpack.c.bf16 %v307, %v307
      %v310 = vsel %vm296, %v308, 0
      %vm312 = vcmask 1043456
      %v314 = vsel %vm312, %v247, 0
      %316 = vmatprep.subr.bf16.mxu0 0
      %317 = vmatpush1.bf16.msra.mxu0 %v314
      %318 = vmatprep.subr.bf16.mxu0 0
      %319 = vmatpush1.bf16.msra.mxu0 0
      %320 = vmatprep.subr.bf16.mxu0 0
      %321 = vmatpush1.bf16.msra.mxu0 0
      %322 = vmatprep.subr.bf16.mxu0 0
      %323 = vmatpush1.bf16.msra.mxu0 0
      %324 = vmatprep.subr.bf16.mxu0 0
      %325 = vmatpush1.bf16.msra.mxu0 0
      %326 = vmatprep.subr.bf16.mxu0 0
      %327 = vmatpush1.bf16.msra.mxu0 0
      %328 = vmatprep.subr.bf16.mxu0 0
      %329 = vmatpush1.bf16.msra.mxu0 0
      %330 = vmatprep.subr.bf16.mxu0 0
      %331 = vmatpush1.bf16.msra.mxu0 0
      %332 = vmatprep.subr.bf16.mxu0 0
      %333 = vmatpush1.bf16.msra.mxu0 0
      %334 = vmatprep.subr.bf16.mxu0 0
      %335 = vmatpush1.bf16.msra.mxu0 0
      %336 = vmatprep.subr.bf16.mxu0 0
      %337 = vmatpush1.bf16.msra.mxu0 0
      %338 = vmatprep.subr.bf16.mxu0 0
      %339 = vmatpush1.bf16.msra.mxu0 0
      %340 = vmatprep.subr.bf16.mxu0 0
      %341 = vmatpush1.bf16.msra.mxu0 0
      %342 = vmatprep.subr.bf16.mxu0 0
      %343 = vmatpush1.bf16.msra.mxu0 0
      %344 = vmatprep.subr.bf16.mxu0 0
      %345 = vmatpush1.bf16.msra.mxu0 0
      %346 = vmatprep.subr.bf16.mxu0 0
      %347 = vmatpush1.bf16.msra.mxu0 0
      %348 = vmatprep.mubr.bf16.mxu0 0
      %349 = vmatmul.mubr.bf16.gmra.mrb[0].mxu0 %v310
      %v350 = vpop.f32.mrb[0].mxu0
      %v351 = vadd.f32 0.0, %v350
      %v352 = vpop.f32.mrb[0].mxu0
      %v353 = vpop.f32.mrb[0].mxu0
      %v354 = vpop.f32.mrb[0].mxu0
      %355 = vdwg.mxu0
      %v357 = vunpack.c.l.b16 %v245
      %v358 = vpack.c.b16 %v357, %v357
      %359 = vrot.lane.b32.xlu0 %v358, 96
      %v360 = vpop.permute.xlu0 %359
      %v362 = vunpack.c.l.b16 %v246
      %v363 = vpack.c.b16 %v362, %v362
      %364 = vrot.lane.b32.xlu0 %v363, 96
      %v365 = vpop.permute.xlu0 %364
      %v367 = vsel %vm249, %v360, 0
      %v370 = vsel %vm249, %v365, 0
      %372 = vmatprep.subr.bf16.mxu0 0
      %373 = vmatpush1.bf16.xpose.msra.mxu0 %v370
      %374 = vmatprep.subr.bf16.mxu0 0
      %375 = vmatpush1.bf16.xpose.msra.mxu0 0
      %376 = vmatprep.subr.bf16.mxu0 0
      %377 = vmatpush1.bf16.xpose.msra.mxu0 0
      %378 = vmatprep.subr.bf16.mxu0 0
      %379 = vmatpush1.bf16.xpose.msra.mxu0 0
      %380 = vmatprep.subr.bf16.mxu0 0
      %381 = vmatpush1.bf16.xpose.msra.mxu0 0
      %382 = vmatprep.subr.bf16.mxu0 0
      %383 = vmatpush1.bf16.xpose.msra.mxu0 0
      %384 = vmatprep.subr.bf16.mxu0 0
      %385 = vmatpush1.bf16.xpose.msra.mxu0 0
      %386 = vmatprep.subr.bf16.mxu0 0
      %387 = vmatpush1.bf16.xpose.msra.mxu0 0
      %388 = vmatprep.subr.bf16.mxu0 0
      %389 = vmatpush1.bf16.xpose.msra.mxu0 0
      %390 = vmatprep.subr.bf16.mxu0 0
      %391 = vmatpush1.bf16.xpose.msra.mxu0 0
      %392 = vmatprep.subr.bf16.mxu0 0
      %393 = vmatpush1.bf16.xpose.msra.mxu0 0
      %394 = vmatprep.subr.bf16.mxu0 0
      %395 = vmatpush1.bf16.xpose.msra.mxu0 0
      %396 = vmatprep.subr.bf16.mxu0 0
      %397 = vmatpush1.bf16.xpose.msra.mxu0 0
      %398 = vmatprep.subr.bf16.mxu0 0
      %399 = vmatpush1.bf16.xpose.msra.mxu0 0
      %400 = vmatprep.subr.bf16.mxu0 0
      %401 = vmatpush1.bf16.xpose.msra.mxu0 0
      %402 = vmatprep.subr.bf16.mxu0 0
      %403 = vmatpush1.bf16.xpose.msra.mxu0 0
      %404 = vmatprep.mubr.bf16.mxu0 0
      %405 = vmatmul.mubr.bf16.gmra.mrb[0].mxu0 %v367
      %v406 = vpop.f32.mrb[0].mxu0
      %v407 = vadd.f32 %v248, %v406
      %v408 = vpop.f32.mrb[0].mxu0
      %v409 = vpop.f32.mrb[0].mxu0
      %v410 = vpop.f32.mrb[0].mxu0
      %411 = vdwg.mxu0
      %v412 = vsel %vm296, %v407, -inf
      %413 = vmax.xlane.f32.xlu0 %v412
      %v414 = vpop.xlane.xlu0 %413
      %v415 = vsub.f32 %v407, %v414
      %v416 = vmul.f32 %v415, 1.442695
      %v417 = vpow.pop %v416
      %v418 = vsel %vm296, %v417, 0.0
      %419 = vadd.xlane.f32.xlu0 %v418
      %v420 = vpop.xlane.xlu0 %419
      %v421 = vrcp.pop %v420
      %v422 = vmul.f32 %v417, %v421
      %v423 = vpack.c.bf16 %v422, %v422
      %v425 = vunpack.c.l.b16 %v247
      %v426 = vpack.c.b16 %v425, %v425
      %427 = vrot.lane.b32.xlu0 %v426, 96
      %v428 = vpop.permute.xlu0 %427
      %v430 = vsel %vm296, %v423, 0
      %v433 = vsel %vm312, %v428, 0
      %435 = vmatprep.subr.bf16.mxu0 0
      %436 = vmatpush1.bf16.msra.mxu0 %v433
      %437 = vmatprep.subr.bf16.mxu0 0
      %438 = vmatpush1.bf16.msra.mxu0 0
      %439 = vmatprep.subr.bf16.mxu0 0
      %440 = vmatpush1.bf16.msra.mxu0 0
      %441 = vmatprep.subr.bf16.mxu0 0
      %442 = vmatpush1.bf16.msra.mxu0 0
      %443 = vmatprep.subr.bf16.mxu0 0
      %444 = vmatpush1.bf16.msra.mxu0 0
      %445 = vmatprep.subr.bf16.mxu0 0
      %446 = vmatpush1.bf16.msra.mxu0 0
      %447 = vmatprep.subr.bf16.mxu0 0
      %448 = vmatpush1.bf16.msra.mxu0 0
      %449 = vmatprep.subr.bf16.mxu0 0
      %450 = vmatpush1.bf16.msra.mxu0 0
      %451 = vmatprep.subr.bf16.mxu0 0
      %452 = vmatpush1.bf16.msra.mxu0 0
      %453 = vmatprep.subr.bf16.mxu0 0
      %454 = vmatpush1.bf16.msra.mxu0 0
      %455 = vmatprep.subr.bf16.mxu0 0
      %456 = vmatpush1.bf16.msra.mxu0 0
      %457 = vmatprep.subr.bf16.mxu0 0
      %458 = vmatpush1.bf16.msra.mxu0 0
      %459 = vmatprep.subr.bf16.mxu0 0
      %460 = vmatpush1.bf16.msra.mxu0 0
      %461 = vmatprep.subr.bf16.mxu0 0
      %462 = vmatpush1.bf16.msra.mxu0 0
      %463 = vmatprep.subr.bf16.mxu0 0
      %464 = vmatpush1.bf16.msra.mxu0 0
      %465 = vmatprep.subr.bf16.mxu0 0
      %466 = vmatpush1.bf16.msra.mxu0 0
      %467 = vmatprep.mubr.bf16.mxu0 0
      %468 = vmatmul.mubr.bf16.gmra.mrb[0].mxu0 %v430
      %v469 = vpop.f32.mrb[0].mxu0
      %v470 = vadd.f32 0.0, %v469
      %v471 = vpop.f32.mrb[0].mxu0
      %v472 = vpop.f32.mrb[0].mxu0
      %v473 = vpop.f32.mrb[0].mxu0
      %474 = vdwg.mxu0
      %475 = vrot.lane.b32.xlu0 %v358, 64
      %v476 = vpop.permute.xlu0 %475
      %477 = vrot.lane.b32.xlu0 %v363, 64
      %v478 = vpop.permute.xlu0 %477
      %v480 = vsel %vm249, %v476, 0
      %v483 = vsel %vm249, %v478, 0
      %485 = vmatprep.subr.bf16.mxu0 0
      %486 = vmatpush1.bf16.xpose.msra.mxu0 %v483
      %487 = vmatprep.subr.bf16.mxu0 0
      %488 = vmatpush1.bf16.xpose.msra.mxu0 0
      %489 = vmatprep.subr.bf16.mxu0 0
      %490 = vmatpush1.bf16.xpose.msra.mxu0 0
      %491 = vmatprep.subr.bf16.mxu0 0
      %492 = vmatpush1.bf16.xpose.msra.mxu0 0
      %493 = vmatprep.subr.bf16.mxu0 0
      %494 = vmatpush1.bf16.xpose.msra.mxu0 0
      %495 = vmatprep.subr.bf16.mxu0 0
      %496 = vmatpush1.bf16.xpose.msra.mxu0 0
      %497 = vmatprep.subr.bf16.mxu0 0
      %498 = vmatpush1.bf16.xpose.msra.mxu0 0
      %499 = vmatprep.subr.bf16.mxu0 0
      %500 = vmatpush1.bf16.xpose.msra.mxu0 0
      %501 = vmatprep.subr.bf16.mxu0 0
      %502 = vmatpush1.bf16.xpose.msra.mxu0 0
      %503 = vmatprep.subr.bf16.mxu0 0
      %504 = vmatpush1.bf16.xpose.msra.mxu0 0
      %505 = vmatprep.subr.bf16.mxu0 0
      %506 = vmatpush1.bf16.xpose.msra.mxu0 0
      %507 = vmatprep.subr.bf16.mxu0 0
      %508 = vmatpush1.bf16.xpose.msra.mxu0 0
      %509 = vmatprep.subr.bf16.mxu0 0
      %510 = vmatpush1.bf16.xpose.msra.mxu0 0
      %511 = vmatprep.subr.bf16.mxu0 0
      %512 = vmatpush1.bf16.xpose.msra.mxu0 0
      %513 = vmatprep.subr.bf16.mxu0 0
      %514 = vmatpush1.bf16.xpose.msra.mxu0 0
      %515 = vmatprep.subr.bf16.mxu0 0
      %516 = vmatpush1.bf16.xpose.msra.mxu0 0
      %517 = vmatprep.mubr.bf16.mxu0 0
      %518 = vmatmul.mubr.bf16.gmra.mrb[0].mxu0 %v480
      %v519 = vpop.f32.mrb[0].mxu0
      %v520 = vadd.f32 %v248, %v519
      %v521 = vpop.f32.mrb[0].mxu0
      %v522 = vpop.f32.mrb[0].mxu0
      %v523 = vpop.f32.mrb[0].mxu0
      %524 = vdwg.mxu0
      %v525 = vsel %vm296, %v520, -inf
      %526 = vmax.xlane.f32.xlu0 %v525
      %v527 = vpop.xlane.xlu0 %526
      %v528 = vsub.f32 %v520, %v527
      %v529 = vmul.f32 %v528, 1.442695
      %v530 = vpow.pop %v529
      %v531 = vsel %vm296, %v530, 0.0
      %532 = vadd.xlane.f32.xlu0 %v531
      %v533 = vpop.xlane.xlu0 %532
      %v534 = vrcp.pop %v533
      %v535 = vmul.f32 %v530, %v534
      %v536 = vpack.c.bf16 %v535, %v535
      %537 = vrot.lane.b32.xlu0 %v426, 64
      %v538 = vpop.permute.xlu0 %537
      %v540 = vsel %vm296, %v536, 0
      %v543 = vsel %vm312, %v538, 0
      %545 = vmatprep.subr.bf16.mxu0 0
      %546 = vmatpush1.bf16.msra.mxu0 %v543
      %547 = vmatprep.subr.bf16.mxu0 0
      %548 = vmatpush1.bf16.msra.mxu0 0
      %549 = vmatprep.subr.bf16.mxu0 0
      %550 = vmatpush1.bf16.msra.mxu0 0
      %551 = vmatprep.subr.bf16.mxu0 0
      %552 = vmatpush1.bf16.msra.mxu0 0
      %553 = vmatprep.subr.bf16.mxu0 0
      %554 = vmatpush1.bf16.msra.mxu0 0
      %555 = vmatprep.subr.bf16.mxu0 0
      %556 = vmatpush1.bf16.msra.mxu0 0
      %557 = vmatprep.subr.bf16.mxu0 0
      %558 = vmatpush1.bf16.msra.mxu0 0
      %559 = vmatprep.subr.bf16.mxu0 0
      %560 = vmatpush1.bf16.msra.mxu0 0
      %561 = vmatprep.subr.bf16.mxu0 0
      %562 = vmatpush1.bf16.msra.mxu0 0
      %563 = vmatprep.subr.bf16.mxu0 0
      %564 = vmatpush1.bf16.msra.mxu0 0
      %565 = vmatprep.subr.bf16.mxu0 0
      %566 = vmatpush1.bf16.msra.mxu0 0
      %567 = vmatprep.subr.bf16.mxu0 0
      %568 = vmatpush1.bf16.msra.mxu0 0
      %569 = vmatprep.subr.bf16.mxu0 0
      %570 = vmatpush1.bf16.msra.mxu0 0
      %571 = vmatprep.subr.bf16.mxu0 0
      %572 = vmatpush1.bf16.msra.mxu0 0
      %573 = vmatprep.subr.bf16.mxu0 0
      %574 = vmatpush1.bf16.msra.mxu0 0
      %575 = vmatprep.subr.bf16.mxu0 0
      %576 = vmatpush1.bf16.msra.mxu0 0
      %577 = vmatprep.mubr.bf16.mxu0 0
      %578 = vmatmul.mubr.bf16.gmra.mrb[0].mxu0 %v540
      %v579 = vpop.f32.mrb[0].mxu0
      %v580 = vadd.f32 0.0, %v579
      %v581 = vpop.f32.mrb[0].mxu0
      %v582 = vpop.f32.mrb[0].mxu0
      %v583 = vpop.f32.mrb[0].mxu0
      %584 = vdwg.mxu0
      %585 = vrot.lane.b32.xlu0 %v358, 32
      %v586 = vpop.permute.xlu0 %585
      %587 = vrot.lane.b32.xlu0 %v363, 32
      %v588 = vpop.permute.xlu0 %587
      %v590 = vsel %vm249, %v586, 0
      %v593 = vsel %vm249, %v588, 0
      %595 = vmatprep.subr.bf16.mxu0 0
      %596 = vmatpush1.bf16.xpose.msra.mxu0 %v593
      %597 = vmatprep.subr.bf16.mxu0 0
      %598 = vmatpush1.bf16.xpose.msra.mxu0 0
      %599 = vmatprep.subr.bf16.mxu0 0
      %600 = vmatpush1.bf16.xpose.msra.mxu0 0
      %601 = vmatprep.subr.bf16.mxu0 0
      %602 = vmatpush1.bf16.xpose.msra.mxu0 0
      %603 = vmatprep.subr.bf16.mxu0 0
      %604 = vmatpush1.bf16.xpose.msra.mxu0 0
      %605 = vmatprep.subr.bf16.mxu0 0
      %606 = vmatpush1.bf16.xpose.msra.mxu0 0
      %607 = vmatprep.subr.bf16.mxu0 0
      %608 = vmatpush1.bf16.xpose.msra.mxu0 0
      %609 = vmatprep.subr.bf16.mxu0 0
      %610 = vmatpush1.bf16.xpose.msra.mxu0 0
      %611 = vmatprep.subr.bf16.mxu0 0
      %612 = vmatpush1.bf16.xpose.msra.mxu0 0
      %613 = vmatprep.subr.bf16.mxu0 0
      %614 = vmatpush1.bf16.xpose.msra.mxu0 0
      %615 = vmatprep.subr.bf16.mxu0 0
      %616 = vmatpush1.bf16.xpose.msra.mxu0 0
      %617 = vmatprep.subr.bf16.mxu0 0
      %618 = vmatpush1.bf16.xpose.msra.mxu0 0
      %619 = vmatprep.subr.bf16.mxu0 0
      %620 = vmatpush1.bf16.xpose.msra.mxu0 0
      %621 = vmatprep.subr.bf16.mxu0 0
      %622 = vmatpush1.bf16.xpose.msra.mxu0 0
      %623 = vmatprep.subr.bf16.mxu0 0
      %624 = vmatpush1.bf16.xpose.msra.mxu0 0
      %625 = vmatprep.subr.bf16.mxu0 0
      %626 = vmatpush1.bf16.xpose.msra.mxu0 0
      %627 = vmatprep.mubr.bf16.mxu0 0
      %628 = vmatmul.mubr.bf16.gmra.mrb[0].mxu0 %v590
      %v629 = vpop.f32.mrb[0].mxu0
      %v630 = vadd.f32 %v248, %v629
      %v631 = vpop.f32.mrb[0].mxu0
      %v632 = vpop.f32.mrb[0].mxu0
      %v633 = vpop.f32.mrb[0].mxu0
      %634 = vdwg.mxu0
      %v635 = vsel %vm296, %v630, -inf
      %636 = vmax.xlane.f32.xlu0 %v635
      %v637 = vpop.xlane.xlu0 %636
      %v638 = vsub.f32 %v630, %v637
      %v639 = vmul.f32 %v638, 1.442695
      %v640 = vpow.pop %v639
      %v641 = vsel %vm296, %v640, 0.0
      %642 = vadd.xlane.f32.xlu0 %v641
      %v643 = vpop.xlane.xlu0 %642
      %v644 = vrcp.pop %v643
      %v645 = vmul.f32 %v640, %v644
      %v646 = vpack.c.bf16 %v645, %v645
      %647 = vrot.lane.b32.xlu0 %v426, 32
      %v648 = vpop.permute.xlu0 %647
      %v650 = vsel %vm296, %v646, 0
      %v653 = vsel %vm312, %v648, 0
      %655 = vmatprep.subr.bf16.mxu0 0
      %656 = vmatpush1.bf16.msra.mxu0 %v653
      %657 = vmatprep.subr.bf16.mxu0 0
      %658 = vmatpush1.bf16.msra.mxu0 0
      %659 = vmatprep.subr.bf16.mxu0 0
      %660 = vmatpush1.bf16.msra.mxu0 0
      %661 = vmatprep.subr.bf16.mxu0 0
      %662 = vmatpush1.bf16.msra.mxu0 0
      %663 = vmatprep.subr.bf16.mxu0 0
      %664 = vmatpush1.bf16.msra.mxu0 0
      %665 = vmatprep.subr.bf16.mxu0 0
      %666 = vmatpush1.bf16.msra.mxu0 0
      %667 = vmatprep.subr.bf16.mxu0 0
      %668 = vmatpush1.bf16.msra.mxu0 0
      %669 = vmatprep.subr.bf16.mxu0 0
      %670 = vmatpush1.bf16.msra.mxu0 0
      %671 = vmatprep.subr.bf16.mxu0 0
      %672 = vmatpush1.bf16.msra.mxu0 0
      %673 = vmatprep.subr.bf16.mxu0 0
      %674 = vmatpush1.bf16.msra.mxu0 0
      %675 = vmatprep.subr.bf16.mxu0 0
      %676 = vmatpush1.bf16.msra.mxu0 0
      %677 = vmatprep.subr.bf16.mxu0 0
      %678 = vmatpush1.bf16.msra.mxu0 0
      %679 = vmatprep.subr.bf16.mxu0 0
      %680 = vmatpush1.bf16.msra.mxu0 0
      %681 = vmatprep.subr.bf16.mxu0 0
      %682 = vmatpush1.bf16.msra.mxu0 0
      %683 = vmatprep.subr.bf16.mxu0 0
      %684 = vmatpush1.bf16.msra.mxu0 0
      %685 = vmatprep.subr.bf16.mxu0 0
      %686 = vmatpush1.bf16.msra.mxu0 0
      %687 = vmatprep.mubr.bf16.mxu0 0
      %688 = vmatmul.mubr.bf16.gmra.mrb[0].mxu0 %v650
      %v689 = vpop.f32.mrb[0].mxu0
      %v690 = vadd.f32 0.0, %v689
      %v691 = vpop.f32.mrb[0].mxu0
      %v692 = vpop.f32.mrb[0].mxu0
      %v693 = vpop.f32.mrb[0].mxu0
      %694 = vdwg.mxu0
      %696 = vrot.lane.b32.xlu0 %v470, 32
      %v697 = vpop.permute.xlu0 %696
      %700 = vrot.lane.b32.xlu0 %v580, 64
      %v701 = vpop.permute.xlu0 %700
      %704 = vrot.lane.b32.xlu0 %v690, 96
      %v705 = vpop.permute.xlu0 %704
      %v707 = vsel %vm249, %v351, %v697
      %vm708 = vcmask 523264
      %v709 = vsel %vm708, %v707, %v701
      %vm710 = vcmask 785408
      %v711 = vsel %vm710, %v709, %v705
      %v712 = vpack.c.bf16 %v711, %v711
      %713 = vst [vmem:[%s241] sm:$0xf] %v712
      %p714 = scmp.lt.s32.totalorder %s15, 1
      %s715 = scalar_select %p714, %s15, 1
      %s716 = smul.addr %s715, 4
      %s717 = scalar_lea.vmem %s4, %s716
      // Predicated region
      $region37: #{_lambda_.27} parent=35 // pred_check
        %p718 = pneg %p132
      $region38: #{_lambda_.27} parent=35 // pred_check_branch
        %720 = sbr.rel (%p718) target = $region40
      $region39: #{_lambda_.27} parent=35 // pred_region
        _
      $region40: #{_lambda_.27} parent=35 // pred_fallthru
        _
    $region36: #{_lambda_.27} parent=5 // pred_fallthru
      _
    %p721 = scmp.le.s32.totalorder 2, %s10
    // Predicated region
    $region41: #{_lambda_.27} parent=5 // pred_check
      %p722 = pneg %p721
    $region42: #{_lambda_.27} parent=5 // pred_check_branch
      %724 = sbr.rel (%p722) target = $region44
    $region43: #{_lambda_.27} parent=5 // pred_region
      %s725 = ssub.s32 %s10, 2
      // Predicated region
      $region45: #{_lambda_.27} parent=43 // pred_check
        %p726 = pneg %p138
      $region46: #{_lambda_.27} parent=43 // pred_check_branch
        %728 = sbr.rel (%p726) target = $region48
      $region47: #{_lambda_.27} parent=43 // pred_region
        %p729 = scmp.lt.s32.totalorder %s16, 1
        %s730 = scalar_select %p729, %s16, 1
        %s731 = smul.addr %s730, 4
        %s732 = scalar_lea.vmem %s4, %s731
      $region48: #{_lambda_.27} parent=43 // pred_fallthru
        _
    $region44: #{_lambda_.27} parent=5 // pred_fallthru
      _
  $region6: #{_lambda_.27} parent=0 // loop_footer
    %s14 = sadd.s32 1, %s10
  $region7: #{_lambda_.27} parent=0 // loop_footer_branch
    %9 = sbr.rel target = $region3
  $region8: #{_lambda_.27} parent=0 // loop_exit
    _

// kernel: _lambda_.26
$region0: #{_lambda_.26}
  #allocation0 [shape = 'u32[]', space=smem, size = 0x4, offset = 0x4, fixed_abs, tag = 'smem constant byte address 0x4 - core index']
  #allocation1 [shape = 'u32[144,128]{1,0:T(1,128)}', space=vmem, size = 0x12000, scoped, tag = 'internal scratch']
  #allocation2 [shape = 'f32[16,256]{1,0:T(8,128)}', space=vmem, size = 0x4000, scoped, tag = 'scratch operand']
  %s0 = inlined_call_operand.vmem [shape: bf16[16,128], index: 0, kind: input, shape index: {}]
  %s1 = inlined_call_operand.vmem [shape: bf16[128,256], index: 1, kind: input, shape index: {}]
  %s2 = inlined_call_operand.vmem [shape: f32[1,256], index: 2, kind: input, shape index: {}]
  %s3 = inlined_call_operand.vmem [shape: bf16[16,256], index: 3, kind: output, shape index: {}]
  %s4 = sld [smem:[#allocation0]]
  $region30: #{_lambda_.26} parent=0
    _
  %s6 = ssub.s32 1, %s4
  %s7 = scalar_select 0, %s6, %s4
  // Predicated region
  $region2: #{_lambda_.26} parent=0 // pred_check
    _
  $region3: #{_lambda_.26} parent=0 // pred_check_branch
    %9 = sbr.rel (0) target = $region5
  $region4: #{_lambda_.26} parent=0 // pred_region
    _
  $region5: #{_lambda_.26} parent=0 // pred_fallthru
    _
  // Predicated region
  $region6: #{_lambda_.26} parent=0 // pred_check
    _
  $region7: #{_lambda_.26} parent=0 // pred_check_branch
    %11 = sbr.rel (0) target = $region9
  $region8: #{_lambda_.26} parent=0 // pred_region
    _
  $region9: #{_lambda_.26} parent=0 // pred_fallthru
    _
  // Predicated region
  $region10: #{_lambda_.26} parent=0 // pred_check
    _
  $region11: #{_lambda_.26} parent=0 // pred_check_branch
    %13 = sbr.rel (0) target = $region13
  $region12: #{_lambda_.26} parent=0 // pred_region
    _
  $region13: #{_lambda_.26} parent=0 // pred_fallthru
    _
  %p15 = scmp.eq.s32.totalorder 0, 0
  // Predicated region
  $region14: #{_lambda_.26} parent=0 // pred_check
    %p16 = pneg %p15
  $region15: #{_lambda_.26} parent=0 // pred_check_branch
    %18 = sbr.rel (%p16) target = $region17
  $region16: #{_lambda_.26} parent=0 // pred_region
    %19 = vst [vmem:[#allocation2] sm:$0xff] 0.0
    %20 = vst [vmem:[#allocation2 + $0x8] sm:$0xff] 0.0
    %21 = vst [vmem:[#allocation2 + $0x10] sm:$0xff] 0.0
    %22 = vst [vmem:[#allocation2 + $0x18] sm:$0xff] 0.0
  $region17: #{_lambda_.26} parent=0 // pred_fallthru
    _
  %v23 = vld [vmem:[#allocation2] sm:$0xff]
  %v24 = vld [vmem:[#allocation2 + $0x8] sm:$0xff]
  %v25 = vld [vmem:[#allocation2 + $0x10] sm:$0xff]
  %v26 = vld [vmem:[#allocation2 + $0x18] sm:$0xff]
  %v27 = vld [vmem:[%s0] sm:$0xf]
  %v28 = vld [vmem:[%s0 + $0x4] sm:$0xf]
  %v29 = vld [vmem:[%s1] sm:$0xff]
  %v30 = vld [vmem:[%s1 + $0x8] sm:$0xff]
  %v31 = vld [vmem:[%s1 + $0x10] sm:$0xff]
  %v32 = vld [vmem:[%s1 + $0x18] sm:$0xff]
  %v33 = vld [vmem:[%s1 + $0x20] sm:$0xff]
  %v34 = vld [vmem:[%s1 + $0x28] sm:$0xff]
  %v35 = vld [vmem:[%s1 + $0x30] sm:$0xff]
  %v36 = vld [vmem:[%s1 + $0x38] sm:$0xff]
  %v37 = vld [vmem:[%s1 + $0x40] sm:$0xff]
  %v38 = vld [vmem:[%s1 + $0x48] sm:$0xff]
  %v39 = vld [vmem:[%s1 + $0x50] sm:$0xff]
  %v40 = vld [vmem:[%s1 + $0x58] sm:$0xff]
  %v41 = vld [vmem:[%s1 + $0x60] sm:$0xff]
  %v42 = vld [vmem:[%s1 + $0x68] sm:$0xff]
  %v43 = vld [vmem:[%s1 + $0x70] sm:$0xff]
  %v44 = vld [vmem:[%s1 + $0x78] sm:$0xff]
  %v47 = vunpack.c.l.b16 %v27
  %v48 = vunpack.c.l.b16 %v28
  %v49 = vpack.c.b16 %v48, %v47
  %v67 = vunpack.c.l.b16 %v29
  %v68 = vunpack.c.h.b16 %v29
  %v69 = vunpack.c.l.b16 %v30
  %v70 = vunpack.c.h.b16 %v30
  %v71 = vunpack.c.l.b16 %v31
  %v72 = vunpack.c.h.b16 %v31
  %v73 = vunpack.c.l.b16 %v32
  %v74 = vunpack.c.h.b16 %v32
  %v75 = vunpack.c.l.b16 %v33
  %v76 = vunpack.c.h.b16 %v33
  %v77 = vunpack.c.l.b16 %v34
  %v78 = vunpack.c.h.b16 %v34
  %v79 = vunpack.c.l.b16 %v35
  %v80 = vunpack.c.h.b16 %v35
  %v81 = vunpack.c.l.b16 %v36
  %v82 = vunpack.c.h.b16 %v36
  %v83 = vunpack.c.l.b16 %v37
  %v84 = vunpack.c.h.b16 %v37
  %v85 = vunpack.c.l.b16 %v38
  %v86 = vunpack.c.h.b16 %v38
  %v87 = vunpack.c.l.b16 %v39
  %v88 = vunpack.c.h.b16 %v39
  %v89 = vunpack.c.l.b16 %v40
  %v90 = vunpack.c.h.b16 %v40
  %v91 = vunpack.c.l.b16 %v41
  %v92 = vunpack.c.h.b16 %v41
  %v93 = vunpack.c.l.b16 %v42
  %v94 = vunpack.c.h.b16 %v42
  %v95 = vunpack.c.l.b16 %v43
  %v96 = vunpack.c.h.b16 %v43
  %v97 = vunpack.c.l.b16 %v44
  %v98 = vunpack.c.h.b16 %v44
  %v99 = vpack.c.b16 %v69, %v67
  %v100 = vpack.c.b16 %v70, %v68
  %v101 = vpack.c.b16 %v73, %v71
  %v102 = vpack.c.b16 %v74, %v72
  %v103 = vpack.c.b16 %v77, %v75
  %v104 = vpack.c.b16 %v78, %v76
  %v105 = vpack.c.b16 %v81, %v79
  %v106 = vpack.c.b16 %v82, %v80
  %v107 = vpack.c.b16 %v85, %v83
  %v108 = vpack.c.b16 %v86, %v84
  %v109 = vpack.c.b16 %v89, %v87
  %v110 = vpack.c.b16 %v90, %v88
  %v111 = vpack.c.b16 %v93, %v91
  %v112 = vpack.c.b16 %v94, %v92
  %v113 = vpack.c.b16 %v97, %v95
  %v114 = vpack.c.b16 %v98, %v96
  %131 = vmatprep.subr.bf16.mxu0 %v100
  %132 = vmatpush1.bf16.msra.mxu0 %v99
  %133 = vmatprep.subr.bf16.mxu0 %v102
  %134 = vmatpush1.bf16.msra.mxu0 %v101
  %135 = vmatprep.subr.bf16.mxu0 %v104
  %136 = vmatpush1.bf16.msra.mxu0 %v103
  %137 = vmatprep.subr.bf16.mxu0 %v106
  %138 = vmatpush1.bf16.msra.mxu0 %v105
  %139 = vmatprep.subr.bf16.mxu0 %v108
  %140 = vmatpush1.bf16.msra.mxu0 %v107
  %141 = vmatprep.subr.bf16.mxu0 %v110
  %142 = vmatpush1.bf16.msra.mxu0 %v109
  %143 = vmatprep.subr.bf16.mxu0 %v112
  %144 = vmatpush1.bf16.msra.mxu0 %v111
  %145 = vmatprep.subr.bf16.mxu0 %v114
  %146 = vmatpush1.bf16.msra.mxu0 %v113
  %147 = vmatprep.subr.bf16.mxu0 0
  %148 = vmatpush1.bf16.msra.mxu0 0
  %149 = vmatprep.subr.bf16.mxu0 0
  %150 = vmatpush1.bf16.msra.mxu0 0
  %151 = vmatprep.subr.bf16.mxu0 0
  %152 = vmatpush1.bf16.msra.mxu0 0
  %153 = vmatprep.subr.bf16.mxu0 0
  %154 = vmatpush1.bf16.msra.mxu0 0
  %155 = vmatprep.subr.bf16.mxu0 0
  %156 = vmatpush1.bf16.msra.mxu0 0
  %157 = vmatprep.subr.bf16.mxu0 0
  %158 = vmatpush1.bf16.msra.mxu0 0
  %159 = vmatprep.subr.bf16.mxu0 0
  %160 = vmatpush1.bf16.msra.mxu0 0
  %161 = vmatprep.subr.bf16.mxu0 0
  %162 = vmatpush1.bf16.msra.mxu0 0
  %163 = vmatprep.mubr.bf16.mxu0 0
  %164 = vmatmul.mubr.bf16.gmra.mrb[0].mxu0 %v49
  %v165 = vpop.f32.mrb[0].mxu0
  %v166 = vadd.f32 0.0, %v165
  %v167 = vpop.f32.mrb[0].mxu0
  %v168 = vadd.f32 0.0, %v167
  %v169 = vpop.f32.mrb[0].mxu0
  %v170 = vadd.f32 0.0, %v169
  %v171 = vpop.f32.mrb[0].mxu0
  %v172 = vadd.f32 0.0, %v171
  %173 = vdwg.mxu0
  %v174 = vadd.f32 %v23, %v166
  %v175 = vadd.f32 %v24, %v168
  %v176 = vadd.f32 %v25, %v170
  %v177 = vadd.f32 %v26, %v172
  %178 = vst [vmem:[#allocation2] sm:$0xff] %v174
  %179 = vst [vmem:[#allocation2 + $0x8] sm:$0xff] %v175
  %180 = vst [vmem:[#allocation2 + $0x10] sm:$0xff] %v176
  %181 = vst [vmem:[#allocation2 + $0x18] sm:$0xff] %v177
  // Predicated region
  $region18: #{_lambda_.26} parent=0 // pred_check
    %p182 = pneg %p15
  $region19: #{_lambda_.26} parent=0 // pred_check_branch
    %184 = sbr.rel (%p182) target = $region21
  $region20: #{_lambda_.26} parent=0 // pred_region
    %v185 = vld [vmem:[#allocation2] sm:$0xff]
    %v186 = vld [vmem:[#allocation2 + $0x8] sm:$0xff]
    %v187 = vld [vmem:[#allocation2 + $0x10] sm:$0xff]
    %v188 = vld [vmem:[#allocation2 + $0x18] sm:$0xff]
    %v189 = vld [vmem:[%s2] sm:$0x3]
    %v191 = vlaneseq
    %v192 = vshrl.u32 %v191, 7
    %v193 = vsub.s32 0, %v192
    %v194 = vrot.slane %v189, %v193
    %v195 = vlaneseq
    %v196 = vshrl.u32 %v195, 7
    %v197 = vsub.s32 1, %v196
    %v198 = vrot.slane %v189, %v197
    %v201 = vadd.f32 %v185, %v194
    %v202 = vadd.f32 %v186, %v198
    %v203 = vadd.f32 %v187, %v194
    %v204 = vadd.f32 %v188, %v198
    %v205 = vpack.c.bf16 %v203, %v201
    %v206 = vpack.c.bf16 %v204, %v202
    %v209 = vunpack.c.l.b16 %v205
    %v210 = vunpack.c.l.b16 %v206
    %v211 = vunpack.c.h.b16 %v205
    %v212 = vunpack.c.h.b16 %v206
    %v213 = vpack.c.b16 %v210, %v209
    %v214 = vpack.c.b16 %v212, %v211
    %217 = vst [vmem:[%s3] sm:$0xff] %v213
    %218 = vst [vmem:[%s3 + $0x8] sm:$0xff] %v214
  $region21: #{_lambda_.26} parent=0 // pred_fallthru
    _
  // Predicated region
  $region22: #{_lambda_.26} parent=0 // pred_check
    _
  $region23: #{_lambda_.26} parent=0 // pred_check_branch
    %220 = sbr.rel (0) target = $region25
  $region24: #{_lambda_.26} parent=0 // pred_region
    _
  $region25: #{_lambda_.26} parent=0 // pred_fallthru
    _
  // Predicated region
  $region26: #{_lambda_.26} parent=0 // pred_check
    _
  $region27: #{_lambda_.26} parent=0 // pred_check_branch
    %222 = sbr.rel (0) target = $region29
  $region28: #{_lambda_.26} parent=0 // pred_region
    _
  $region29: #{_lambda_.26} parent=0 // pred_fallthru
    _

// kernel: _lambda_.33
$region0: #{_lambda_.33}
  #allocation0 [shape = 'u32[]', space=smem, size = 0x4, offset = 0x4, fixed_abs, tag = 'smem constant byte address 0x4 - core index']
  #allocation1 [shape = 'u32[144,128]{1,0:T(1,128)}', space=vmem, size = 0x12000, scoped, tag = 'internal scratch']
  #allocation2 [shape = 'f32[16,256]{1,0:T(8,128)}', space=vmem, size = 0x4000, scoped, tag = 'scratch operand']
  %s0 = inlined_call_operand.vmem [shape: bf16[16,128], index: 0, kind: input, shape index: {}]
  %s1 = inlined_call_operand.vmem [shape: bf16[128,256], index: 1, kind: input, shape index: {}]
  %s2 = inlined_call_operand.vmem [shape: f32[1,256], index: 2, kind: input, shape index: {}]
  %s3 = inlined_call_operand.vmem [shape: bf16[16,256], index: 3, kind: output, shape index: {}]
  %s4 = sld [smem:[#allocation0]]
  $region30: #{_lambda_.33} parent=0
    _
  %s6 = ssub.s32 1, %s4
  %s7 = scalar_select 0, %s6, %s4
  // Predicated region
  $region2: #{_lambda_.33} parent=0 // pred_check
    _
  $region3: #{_lambda_.33} parent=0 // pred_check_branch
    %9 = sbr.rel (0) target = $region5
  $region4: #{_lambda_.33} parent=0 // pred_region
    _
  $region5: #{_lambda_.33} parent=0 // pred_fallthru
    _
  // Predicated region
  $region6: #{_lambda_.33} parent=0 // pred_check
    _
  $region7: #{_lambda_.33} parent=0 // pred_check_branch
    %11 = sbr.rel (0) target = $region9
  $region8: #{_lambda_.33} parent=0 // pred_region
    _
  $region9: #{_lambda_.33} parent=0 // pred_fallthru
    _
  // Predicated region
  $region10: #{_lambda_.33} parent=0 // pred_check
    _
  $region11: #{_lambda_.33} parent=0 // pred_check_branch
    %13 = sbr.rel (0) target = $region13
  $region12: #{_lambda_.33} parent=0 // pred_region
    _
  $region13: #{_lambda_.33} parent=0 // pred_fallthru
    _
  %p15 = scmp.eq.s32.totalorder 0, 0
  // Predicated region
  $region14: #{_lambda_.33} parent=0 // pred_check
    %p16 = pneg %p15
  $region15: #{_lambda_.33} parent=0 // pred_check_branch
    %18 = sbr.rel (%p16) target = $region17
  $region16: #{_lambda_.33} parent=0 // pred_region
    %19 = vst [vmem:[#allocation2] sm:$0xff] 0.0
    %20 = vst [vmem:[#allocation2 + $0x8] sm:$0xff] 0.0
    %21 = vst [vmem:[#allocation2 + $0x10] sm:$0xff] 0.0
    %22 = vst [vmem:[#allocation2 + $0x18] sm:$0xff] 0.0
  $region17: #{_lambda_.33} parent=0 // pred_fallthru
    _
  %v23 = vld [vmem:[#allocation2] sm:$0xff]
  %v24 = vld [vmem:[#allocation2 + $0x8] sm:$0xff]
  %v25 = vld [vmem:[#allocation2 + $0x10] sm:$0xff]
  %v26 = vld [vmem:[#allocation2 + $0x18] sm:$0xff]
  %v27 = vld [vmem:[%s0] sm:$0xf]
  %v28 = vld [vmem:[%s0 + $0x4] sm:$0xf]
  %v29 = vld [vmem:[%s1] sm:$0xff]
  %v30 = vld [vmem:[%s1 + $0x8] sm:$0xff]
  %v31 = vld [vmem:[%s1 + $0x10] sm:$0xff]
  %v32 = vld [vmem:[%s1 + $0x18] sm:$0xff]
  %v33 = vld [vmem:[%s1 + $0x20] sm:$0xff]
  %v34 = vld [vmem:[%s1 + $0x28] sm:$0xff]
  %v35 = vld [vmem:[%s1 + $0x30] sm:$0xff]
  %v36 = vld [vmem:[%s1 + $0x38] sm:$0xff]
  %v37 = vld [vmem:[%s1 + $0x40] sm:$0xff]
  %v38 = vld [vmem:[%s1 + $0x48] sm:$0xff]
  %v39 = vld [vmem:[%s1 + $0x50] sm:$0xff]
  %v40 = vld [vmem:[%s1 + $0x58] sm:$0xff]
  %v41 = vld [vmem:[%s1 + $0x60] sm:$0xff]
  %v42 = vld [vmem:[%s1 + $0x68] sm:$0xff]
  %v43 = vld [vmem:[%s1 + $0x70] sm:$0xff]
  %v44 = vld [vmem:[%s1 + $0x78] sm:$0xff]
  %v47 = vunpack.c.l.b16 %v27
  %v48 = vunpack.c.l.b16 %v28
  %v49 = vpack.c.b16 %v48, %v47
  %v67 = vunpack.c.l.b16 %v29
  %v68 = vunpack.c.h.b16 %v29
  %v69 = vunpack.c.l.b16 %v30
  %v70 = vunpack.c.h.b16 %v30
  %v71 = vunpack.c.l.b16 %v31
  %v72 = vunpack.c.h.b16 %v31
  %v73 = vunpack.c.l.b16 %v32
  %v74 = vunpack.c.h.b16 %v32
  %v75 = vunpack.c.l.b16 %v33
  %v76 = vunpack.c.h.b16 %v33
  %v77 = vunpack.c.l.b16 %v34
  %v78 = vunpack.c.h.b16 %v34
  %v79 = vunpack.c.l.b16 %v35
  %v80 = vunpack.c.h.b16 %v35
  %v81 = vunpack.c.l.b16 %v36
  %v82 = vunpack.c.h.b16 %v36
  %v83 = vunpack.c.l.b16 %v37
  %v84 = vunpack.c.h.b16 %v37
  %v85 = vunpack.c.l.b16 %v38
  %v86 = vunpack.c.h.b16 %v38
  %v87 = vunpack.c.l.b16 %v39
  %v88 = vunpack.c.h.b16 %v39
  %v89 = vunpack.c.l.b16 %v40
  %v90 = vunpack.c.h.b16 %v40
  %v91 = vunpack.c.l.b16 %v41
  %v92 = vunpack.c.h.b16 %v41
  %v93 = vunpack.c.l.b16 %v42
  %v94 = vunpack.c.h.b16 %v42
  %v95 = vunpack.c.l.b16 %v43
  %v96 = vunpack.c.h.b16 %v43
  %v97 = vunpack.c.l.b16 %v44
  %v98 = vunpack.c.h.b16 %v44
  %v99 = vpack.c.b16 %v69, %v67
  %v100 = vpack.c.b16 %v70, %v68
  %v101 = vpack.c.b16 %v73, %v71
  %v102 = vpack.c.b16 %v74, %v72
  %v103 = vpack.c.b16 %v77, %v75
  %v104 = vpack.c.b16 %v78, %v76
  %v105 = vpack.c.b16 %v81, %v79
  %v106 = vpack.c.b16 %v82, %v80
  %v107 = vpack.c.b16 %v85, %v83
  %v108 = vpack.c.b16 %v86, %v84
  %v109 = vpack.c.b16 %v89, %v87
  %v110 = vpack.c.b16 %v90, %v88
  %v111 = vpack.c.b16 %v93, %v91
  %v112 = vpack.c.b16 %v94, %v92
  %v113 = vpack.c.b16 %v97, %v95
  %v114 = vpack.c.b16 %v98, %v96
  %131 = vmatprep.subr.bf16.mxu0 %v100
  %132 = vmatpush1.bf16.msra.mxu0 %v99
  %133 = vmatprep.subr.bf16.mxu0 %v102
  %134 = vmatpush1.bf16.msra.mxu0 %v101
  %135 = vmatprep.subr.bf16.mxu0 %v104
  %136 = vmatpush1.bf16.msra.mxu0 %v103
  %137 = vmatprep.subr.bf16.mxu0 %v106
  %138 = vmatpush1.bf16.msra.mxu0 %v105
  %139 = vmatprep.subr.bf16.mxu0 %v108
  %140 = vmatpush1.bf16.msra.mxu0 %v107
  %141 = vmatprep.subr.bf16.mxu0 %v110
  %142 = vmatpush1.bf16.msra.mxu0 %v109
  %143 = vmatprep.subr.bf16.mxu0 %v112
  %144 = vmatpush1.bf16.msra.mxu0 %v111
  %145 = vmatprep.subr.bf16.mxu0 %v114
  %146 = vmatpush1.bf16.msra.mxu0 %v113
  %147 = vmatprep.subr.bf16.mxu0 0
  %148 = vmatpush1.bf16.msra.mxu0 0
  %149 = vmatprep.subr.bf16.mxu0 0
  %150 = vmatpush1.bf16.msra.mxu0 0
  %151 = vmatprep.subr.bf16.mxu0 0
  %152 = vmatpush1.bf16.msra.mxu0 0
  %153 = vmatprep.subr.bf16.mxu0 0
  %154 = vmatpush1.bf16.msra.mxu0 0
  %155 = vmatprep.subr.bf16.mxu0 0
  %156 = vmatpush1.bf16.msra.mxu0 0
  %157 = vmatprep.subr.bf16.mxu0 0
  %158 = vmatpush1.bf16.msra.mxu0 0
  %159 = vmatprep.subr.bf16.mxu0 0
  %160 = vmatpush1.bf16.msra.mxu0 0
  %161 = vmatprep.subr.bf16.mxu0 0
  %162 = vmatpush1.bf16.msra.mxu0 0
  %163 = vmatprep.mubr.bf16.mxu0 0
  %164 = vmatmul.mubr.bf16.gmra.mrb[0].mxu0 %v49
  %v165 = vpop.f32.mrb[0].mxu0
  %v166 = vadd.f32 0.0, %v165
  %v167 = vpop.f32.mrb[0].mxu0
  %v168 = vadd.f32 0.0, %v167
  %v169 = vpop.f32.mrb[0].mxu0
  %v170 = vadd.f32 0.0, %v169
  %v171 = vpop.f32.mrb[0].mxu0
  %v172 = vadd.f32 0.0, %v171
  %173 = vdwg.mxu0
  %v174 = vadd.f32 %v23, %v166
  %v175 = vadd.f32 %v24, %v168
  %v176 = vadd.f32 %v25, %v170
  %v177 = vadd.f32 %v26, %v172
  %178 = vst [vmem:[#allocation2] sm:$0xff] %v174
  %179 = vst [vmem:[#allocation2 + $0x8] sm:$0xff] %v175
  %180 = vst [vmem:[#allocation2 + $0x10] sm:$0xff] %v176
  %181 = vst [vmem:[#allocation2 + $0x18] sm:$0xff] %v177
  // Predicated region
  $region18: #{_lambda_.33} parent=0 // pred_check
    %p182 = pneg %p15
  $region19: #{_lambda_.33} parent=0 // pred_check_branch
    %184 = sbr.rel (%p182) target = $region21
  $region20: #{_lambda_.33} parent=0 // pred_region
    %v185 = vld [vmem:[#allocation2] sm:$0xff]
    %v186 = vld [vmem:[#allocation2 + $0x8] sm:$0xff]
    %v187 = vld [vmem:[#allocation2 + $0x10] sm:$0xff]
    %v188 = vld [vmem:[#allocation2 + $0x18] sm:$0xff]
    %v189 = vld [vmem:[%s2] sm:$0x3]
    %v191 = vlaneseq
    %v192 = vshrl.u32 %v191, 7
    %v193 = vsub.s32 0, %v192
    %v194 = vrot.slane %v189, %v193
    %v195 = vlaneseq
    %v196 = vshrl.u32 %v195, 7
    %v197 = vsub.s32 1, %v196
    %v198 = vrot.slane %v189, %v197
    %v201 = vadd.f32 %v185, %v194
    %v202 = vadd.f32 %v186, %v198
    %v203 = vadd.f32 %v187, %v194
    %v204 = vadd.f32 %v188, %v198
    %v205 = vmax.f32 %v201, 0.0
    %v206 = vmax.f32 %v202, 0.0
    %v207 = vmax.f32 %v203, 0.0
    %v208 = vmax.f32 %v204, 0.0
    %v209 = vpack.c.bf16 %v207, %v205
    %v210 = vpack.c.bf16 %v208, %v206
    %v213 = vunpack.c.l.b16 %v209
    %v214 = vunpack.c.l.b16 %v210
    %v215 = vunpack.c.h.b16 %v209
    %v216 = vunpack.c.h.b16 %v210
    %v217 = vpack.c.b16 %v214, %v213
    %v218 = vpack.c.b16 %v216, %v215
    %221 = vst [vmem:[%s3] sm:$0xff] %v217
    %222 = vst [vmem:[%s3 + $0x8] sm:$0xff] %v218
  $region21: #{_lambda_.33} parent=0 // pred_fallthru
    _
  // Predicated region
  $region22: #{_lambda_.33} parent=0 // pred_check
    _
  $region23: #{_lambda_.33} parent=0 // pred_check_branch
    %224 = sbr.rel (0) target = $region25
  $region24: #{_lambda_.33} parent=0 // pred_region
    _
  $region25: #{_lambda_.33} parent=0 // pred_fallthru
    _
  // Predicated region
  $region26: #{_lambda_.33} parent=0 // pred_check
    _
  $region27: #{_lambda_.33} parent=0 // pred_check_branch
    %226 = sbr.rel (0) target = $region29
  $region28: #{_lambda_.33} parent=0 // pred_region
    _
  $region29: #{_lambda_.33} parent=0 // pred_fallthru
    _

// kernel: _lambda_.34
$region0: #{_lambda_.34}
  #allocation0 [shape = 'u32[]', space=smem, size = 0x4, offset = 0x4, fixed_abs, tag = 'smem constant byte address 0x4 - core index']
  #allocation1 [shape = 'u32[144,128]{1,0:T(1,128)}', space=vmem, size = 0x12000, scoped, tag = 'internal scratch']
  #allocation2 [shape = 'f32[16,128]{1,0:T(8,128)}', space=vmem, size = 0x2000, scoped, tag = 'scratch operand']
  %s0 = inlined_call_operand.vmem [shape: bf16[16,256], index: 0, kind: input, shape index: {}]
  %s1 = inlined_call_operand.vmem [shape: bf16[256,128], index: 1, kind: input, shape index: {}]
  %s2 = inlined_call_operand.vmem [shape: f32[1,128], index: 2, kind: input, shape index: {}]
  %s3 = inlined_call_operand.vmem [shape: bf16[16,128], index: 3, kind: output, shape index: {}]
  %s4 = sld [smem:[#allocation0]]
  $region30: #{_lambda_.34} parent=0
    _
  %s6 = ssub.s32 1, %s4
  %s7 = scalar_select 0, %s6, %s4
  // Predicated region
  $region2: #{_lambda_.34} parent=0 // pred_check
    _
  $region3: #{_lambda_.34} parent=0 // pred_check_branch
    %9 = sbr.rel (0) target = $region5
  $region4: #{_lambda_.34} parent=0 // pred_region
    _
  $region5: #{_lambda_.34} parent=0 // pred_fallthru
    _
  // Predicated region
  $region6: #{_lambda_.34} parent=0 // pred_check
    _
  $region7: #{_lambda_.34} parent=0 // pred_check_branch
    %11 = sbr.rel (0) target = $region9
  $region8: #{_lambda_.34} parent=0 // pred_region
    _
  $region9: #{_lambda_.34} parent=0 // pred_fallthru
    _
  // Predicated region
  $region10: #{_lambda_.34} parent=0 // pred_check
    _
  $region11: #{_lambda_.34} parent=0 // pred_check_branch
    %13 = sbr.rel (0) target = $region13
  $region12: #{_lambda_.34} parent=0 // pred_region
    _
  $region13: #{_lambda_.34} parent=0 // pred_fallthru
    _
  %p15 = scmp.eq.s32.totalorder 0, 0
  // Predicated region
  $region14: #{_lambda_.34} parent=0 // pred_check
    %p16 = pneg %p15
  $region15: #{_lambda_.34} parent=0 // pred_check_branch
    %18 = sbr.rel (%p16) target = $region17
  $region16: #{_lambda_.34} parent=0 // pred_region
    %19 = vst [vmem:[#allocation2] sm:$0xff] 0.0
    %20 = vst [vmem:[#allocation2 + $0x8] sm:$0xff] 0.0
  $region17: #{_lambda_.34} parent=0 // pred_fallthru
    _
  %v21 = vld [vmem:[#allocation2] sm:$0xff]
  %v22 = vld [vmem:[#allocation2 + $0x8] sm:$0xff]
  %v23 = vld [vmem:[%s0] sm:$0xff]
  %v24 = vld [vmem:[%s0 + $0x8] sm:$0xff]
  %v25 = vld [vmem:[%s1] sm:$0xf]
  %v26 = vld [vmem:[%s1 + $0x4] sm:$0xf]
  %v27 = vld [vmem:[%s1 + $0x8] sm:$0xf]
  %v28 = vld [vmem:[%s1 + $0xc] sm:$0xf]
  %v29 = vld [vmem:[%s1 + $0x10] sm:$0xf]
  %v30 = vld [vmem:[%s1 + $0x14] sm:$0xf]
  %v31 = vld [vmem:[%s1 + $0x18] sm:$0xf]
  %v32 = vld [vmem:[%s1 + $0x1c] sm:$0xf]
  %v33 = vld [vmem:[%s1 + $0x20] sm:$0xf]
  %v34 = vld [vmem:[%s1 + $0x24] sm:$0xf]
  %v35 = vld [vmem:[%s1 + $0x28] sm:$0xf]
  %v36 = vld [vmem:[%s1 + $0x2c] sm:$0xf]
  %v37 = vld [vmem:[%s1 + $0x30] sm:$0xf]
  %v38 = vld [vmem:[%s1 + $0x34] sm:$0xf]
  %v39 = vld [vmem:[%s1 + $0x38] sm:$0xf]
  %v40 = vld [vmem:[%s1 + $0x3c] sm:$0xf]
  %v41 = vld [vmem:[%s1 + $0x40] sm:$0xf]
  %v42 = vld [vmem:[%s1 + $0x44] sm:$0xf]
  %v43 = vld [vmem:[%s1 + $0x48] sm:$0xf]
  %v44 = vld [vmem:[%s1 + $0x4c] sm:$0xf]
  %v45 = vld [vmem:[%s1 + $0x50] sm:$0xf]
  %v46 = vld [vmem:[%s1 + $0x54] sm:$0xf]
  %v47 = vld [vmem:[%s1 + $0x58] sm:$0xf]
  %v48 = vld [vmem:[%s1 + $0x5c] sm:$0xf]
  %v49 = vld [vmem:[%s1 + $0x60] sm:$0xf]
  %v50 = vld [vmem:[%s1 + $0x64] sm:$0xf]
  %v51 = vld [vmem:[%s1 + $0x68] sm:$0xf]
  %v52 = vld [vmem:[%s1 + $0x6c] sm:$0xf]
  %v53 = vld [vmem:[%s1 + $0x70] sm:$0xf]
  %v54 = vld [vmem:[%s1 + $0x74] sm:$0xf]
  %v55 = vld [vmem:[%s1 + $0x78] sm:$0xf]
  %v56 = vld [vmem:[%s1 + $0x7c] sm:$0xf]
  %v59 = vunpack.c.l.b16 %v23
  %v60 = vunpack.c.h.b16 %v23
  %v61 = vunpack.c.l.b16 %v24
  %v62 = vunpack.c.h.b16 %v24
  %v63 = vpack.c.b16 %v61, %v59
  %v64 = vpack.c.b16 %v62, %v60
  %v99 = vunpack.c.l.b16 %v25
  %v100 = vunpack.c.l.b16 %v26
  %v101 = vunpack.c.l.b16 %v27
  %v102 = vunpack.c.l.b16 %v28
  %v103 = vunpack.c.l.b16 %v29
  %v104 = vunpack.c.l.b16 %v30
  %v105 = vunpack.c.l.b16 %v31
  %v106 = vunpack.c.l.b16 %v32
  %v107 = vunpack.c.l.b16 %v33
  %v108 = vunpack.c.l.b16 %v34
  %v109 = vunpack.c.l.b16 %v35
  %v110 = vunpack.c.l.b16 %v36
  %v111 = vunpack.c.l.b16 %v37
  %v112 = vunpack.c.l.b16 %v38
  %v113 = vunpack.c.l.b16 %v39
  %v114 = vunpack.c.l.b16 %v40
  %v115 = vunpack.c.l.b16 %v41
  %v116 = vunpack.c.l.b16 %v42
  %v117 = vunpack.c.l.b16 %v43
  %v118 = vunpack.c.l.b16 %v44
  %v119 = vunpack.c.l.b16 %v45
  %v120 = vunpack.c.l.b16 %v46
  %v121 = vunpack.c.l.b16 %v47
  %v122 = vunpack.c.l.b16 %v48
  %v123 = vunpack.c.l.b16 %v49
  %v124 = vunpack.c.l.b16 %v50
  %v125 = vunpack.c.l.b16 %v51
  %v126 = vunpack.c.l.b16 %v52
  %v127 = vunpack.c.l.b16 %v53
  %v128 = vunpack.c.l.b16 %v54
  %v129 = vunpack.c.l.b16 %v55
  %v130 = vunpack.c.l.b16 %v56
  %v131 = vpack.c.b16 %v100, %v99
  %v132 = vpack.c.b16 %v102, %v101
  %v133 = vpack.c.b16 %v104, %v103
  %v134 = vpack.c.b16 %v106, %v105
  %v135 = vpack.c.b16 %v108, %v107
  %v136 = vpack.c.b16 %v110, %v109
  %v137 = vpack.c.b16 %v112, %v111
  %v138 = vpack.c.b16 %v114, %v113
  %v139 = vpack.c.b16 %v116, %v115
  %v140 = vpack.c.b16 %v118, %v117
  %v141 = vpack.c.b16 %v120, %v119
  %v142 = vpack.c.b16 %v122, %v121
  %v143 = vpack.c.b16 %v124, %v123
  %v144 = vpack.c.b16 %v126, %v125
  %v145 = vpack.c.b16 %v128, %v127
  %v146 = vpack.c.b16 %v130, %v129
  %163 = vmatprep.subr.bf16.mxu0 0
  %164 = vmatpush1.bf16.msra.mxu0 %v131
  %165 = vmatprep.subr.bf16.mxu0 0
  %166 = vmatpush1.bf16.msra.mxu0 %v132
  %167 = vmatprep.subr.bf16.mxu0 0
  %168 = vmatpush1.bf16.msra.mxu0 %v133
  %169 = vmatprep.subr.bf16.mxu0 0
  %170 = vmatpush1.bf16.msra.mxu0 %v134
  %171 = vmatprep.subr.bf16.mxu0 0
  %172 = vmatpush1.bf16.msra.mxu0 %v135
  %173 = vmatprep.subr.bf16.mxu0 0
  %174 = vmatpush1.bf16.msra.mxu0 %v136
  %175 = vmatprep.subr.bf16.mxu0 0
  %176 = vmatpush1.bf16.msra.mxu0 %v137
  %177 = vmatprep.subr.bf16.mxu0 0
  %178 = vmatpush1.bf16.msra.mxu0 %v138
  %179 = vmatprep.subr.bf16.mxu0 0
  %180 = vmatpush1.bf16.msra.mxu0 %v139
  %181 = vmatprep.subr.bf16.mxu0 0
  %182 = vmatpush1.bf16.msra.mxu0 %v140
  %183 = vmatprep.subr.bf16.mxu0 0
  %184 = vmatpush1.bf16.msra.mxu0 %v141
  %185 = vmatprep.subr.bf16.mxu0 0
  %186 = vmatpush1.bf16.msra.mxu0 %v142
  %187 = vmatprep.subr.bf16.mxu0 0
  %188 = vmatpush1.bf16.msra.mxu0 %v143
  %189 = vmatprep.subr.bf16.mxu0 0
  %190 = vmatpush1.bf16.msra.mxu0 %v144
  %191 = vmatprep.subr.bf16.mxu0 0
  %192 = vmatpush1.bf16.msra.mxu0 %v145
  %193 = vmatprep.subr.bf16.mxu0 0
  %194 = vmatpush1.bf16.msra.mxu0 %v146
  %195 = vmatprep.mubr.bf16.mxu0 %v64
  %196 = vmatmul.mubr.bf16.gmra.mrb[0].mxu0 %v63
  %v197 = vpop.f32.mrb[0].mxu0
  %v198 = vadd.f32 0.0, %v197
  %v199 = vpop.f32.mrb[0].mxu0
  %v200 = vpop.f32.mrb[0].mxu0
  %v201 = vadd.f32 0.0, %v200
  %v202 = vpop.f32.mrb[0].mxu0
  %203 = vdwg.mxu0
  %v204 = vadd.f32 %v21, %v198
  %v205 = vadd.f32 %v22, %v201
  %206 = vst [vmem:[#allocation2] sm:$0xff] %v204
  %207 = vst [vmem:[#allocation2 + $0x8] sm:$0xff] %v205
  // Predicated region
  $region18: #{_lambda_.34} parent=0 // pred_check
    %p208 = pneg %p15
  $region19: #{_lambda_.34} parent=0 // pred_check_branch
    %210 = sbr.rel (%p208) target = $region21
  $region20: #{_lambda_.34} parent=0 // pred_region
    %v211 = vld [vmem:[#allocation2] sm:$0xff]
    %v212 = vld [vmem:[#allocation2 + $0x8] sm:$0xff]
    %v213 = vld [vmem:[%s2] sm:$0x1]
    %v215 = vlaneseq
    %v216 = vshrl.u32 %v215, 7
    %v217 = vsub.s32 0, %v216
    %v218 = vrot.slane %v213, %v217
    %v220 = vadd.f32 %v211, %v218
    %v221 = vadd.f32 %v212, %v218
    %v222 = vpack.c.bf16 %v221, %v220
    %v224 = vunpack.c.l.b16 %v222
    %v225 = vunpack.c.h.b16 %v222
    %v226 = vpack.c.b16 %v224, %v224
    %v227 = vpack.c.b16 %v225, %v225
    %230 = vst [vmem:[%s3] sm:$0xf] %v226
    %231 = vst [vmem:[%s3 + $0x4] sm:$0xf] %v227
  $region21: #{_lambda_.34} parent=0 // pred_fallthru
    _
  // Predicated region
  $region22: #{_lambda_.34} parent=0 // pred_check
    _
  $region23: #{_lambda_.34} parent=0 // pred_check_branch
    %233 = sbr.rel (0) target = $region25
  $region24: #{_lambda_.34} parent=0 // pred_region
    _
  $region25: #{_lambda_.34} parent=0 // pred_fallthru
    _
  // Predicated region
  $region26: #{_lambda_.34} parent=0 // pred_check
    _
  $region27: #{_lambda_.34} parent=0 // pred_check_branch
    %235 = sbr.rel (0) target = $region29
  $region28: #{_lambda_.34} parent=0 // pred_region
    _
  $region29: #{_lambda_.34} parent=0 // pred_fallthru
    _

// kernel: _lambda_.30
$region0: #{_lambda_.30}
  #allocation0 [shape = 'u32[]', space=smem, size = 0x4, offset = 0x4, fixed_abs, tag = 'smem constant byte address 0x4 - core index']
  #allocation1 [shape = 'u32[144,128]{1,0:T(1,128)}', space=vmem, size = 0x12000, scoped, tag = 'internal scratch']
  %s0 = inlined_call_operand.vmem [shape: bf16[2,8,512], index: 0, kind: input, shape index: {}]
  %s1 = inlined_call_operand.vmem [shape: bf16[2,8,256], index: 1, kind: input, shape index: {}, may-alias: {1,2}]
  %s2 = inlined_call_operand.vmem [shape: bf16[2,8,256], index: 2, kind: input, shape index: {}, may-alias: {1,2}]
  %s3 = inlined_call_operand.vmem [shape: f32[2,1,8], index: 3, kind: input, shape index: {}]
  %s4 = inlined_call_operand.vmem [shape: bf16[2,8,128], index: 4, kind: output, shape index: {}]
  %s5 = sld [smem:[#allocation0]]
  $region49: #{_lambda_.30} parent=0
    _
  %s7 = ssub.s32 1, %s5
  %s8 = scalar_select 0, %s7, %s5
  loop: start=0, step=1, limit=4
  $region2: #{_lambda_.30} parent=0 // loop_pre_header
    _
  $region3: #{_lambda_.30} parent=0 // loop_header
    %s10 = sphi 0, %s14
    %p11 = scmp.ge.s32.totalorder %s10, 4
    %s20 = sphi 0, %s22
    %s23 = sphi 0, %s20
    %s24 = sphi 0, %s23
    %s40 = sphi 0, %s24
    %s46 = sphi 0, %s48
    %s49 = sphi 0, %s46
    %s50 = sphi 0, %s49
    %s66 = sphi 0, %s50
    %s72 = sphi 0, %s74
    %s75 = sphi 0, %s72
    %s76 = sphi 0, %s75
    %s92 = sphi 0, %s76
    %s98 = sphi 0, %s100
    %s101 = sphi 0, %s98
    %s102 = sphi 0, %s101
    %s118 = sphi 0, %s102
    %s124 = sphi 0, %s126
    %s127 = sphi 0, %s124
    %s128 = sphi 0, %s127
    %s144 = sphi 0, %s128
  $region4: #{_lambda_.30} parent=0 // loop_header_branch
    %13 = sbr.rel (%p11) target = $region8
  $region5: #{_lambda_.30} parent=0 // loop_body
    %s15 = ssub.s32 %s10, 1
    %s16 = ssub.s32 %s10, 2
    %s17 = sadd.s32 %s10, 1
    %s18 = ssub.s32 %s10, %s17
    %p19 = scmp.eq.s32.totalorder %s18, 0
    %s21 = sadd.s32 %s20, 1
    %s22 = scalar_select %p19, %s20, %s21
    %p25 = pneg %p19
    %p26 = scmp.eq.s32.totalorder %s10, 1
    %p27 = por %p25, %p26
    %p28 = scmp.ne.s32.totalorder %s20, %s23
    %p29 = scmp.eq.s32.totalorder %s10, 0
    %p30 = por %p28, %p29
    %p31 = scmp.ne.s32.totalorder %s20, %s23
    %p32 = scmp.eq.s32.totalorder %s15, 1
    %p33 = por %p31, %p32
    %p34 = scmp.ne.s32.totalorder %s23, %s24
    %p35 = scmp.eq.s32.totalorder %s15, 0
    %p36 = por %p34, %p35
    %p37 = scmp.ne.s32.totalorder %s23, %s24
    %p38 = scmp.eq.s32.totalorder %s16, 1
    %p39 = por %p37, %p38
    %p41 = scmp.ne.s32.totalorder %s24, %s40
    %p42 = scmp.eq.s32.totalorder %s16, 0
    %p43 = por %p41, %p42
    %s44 = ssub.s32 %s10, %s17
    %p45 = scmp.eq.s32.totalorder %s44, 0
    %s47 = sadd.s32 %s46, 1
    %s48 = scalar_select %p45, %s46, %s47
    %p51 = pneg %p45
    %p52 = scmp.eq.s32.totalorder %s10, 1
    %p53 = por %p51, %p52
    %p54 = scmp.ne.s32.totalorder %s46, %s49
    %p55 = scmp.eq.s32.totalorder %s10, 0
    %p56 = por %p54, %p55
    %p57 = scmp.ne.s32.totalorder %s46, %s49
    %p58 = scmp.eq.s32.totalorder %s15, 1
    %p59 = por %p57, %p58
    %p60 = scmp.ne.s32.totalorder %s49, %s50
    %p61 = scmp.eq.s32.totalorder %s15, 0
    %p62 = por %p60, %p61
    %p63 = scmp.ne.s32.totalorder %s49, %s50
    %p64 = scmp.eq.s32.totalorder %s16, 1
    %p65 = por %p63, %p64
    %p67 = scmp.ne.s32.totalorder %s50, %s66
    %p68 = scmp.eq.s32.totalorder %s16, 0
    %p69 = por %p67, %p68
    %s70 = ssub.s32 %s10, %s17
    %p71 = scmp.eq.s32.totalorder %s70, 0
    %s73 = sadd.s32 %s72, 1
    %s74 = scalar_select %p71, %s72, %s73
    %p77 = pneg %p71
    %p78 = scmp.eq.s32.totalorder %s10, 1
    %p79 = por %p77, %p78
    %p80 = scmp.ne.s32.totalorder %s72, %s75
    %p81 = scmp.eq.s32.totalorder %s10, 0
    %p82 = por %p80, %p81
    %p83 = scmp.ne.s32.totalorder %s72, %s75
    %p84 = scmp.eq.s32.totalorder %s15, 1
    %p85 = por %p83, %p84
    %p86 = scmp.ne.s32.totalorder %s75, %s76
    %p87 = scmp.eq.s32.totalorder %s15, 0
    %p88 = por %p86, %p87
    %p89 = scmp.ne.s32.totalorder %s75, %s76
    %p90 = scmp.eq.s32.totalorder %s16, 1
    %p91 = por %p89, %p90
    %p93 = scmp.ne.s32.totalorder %s76, %s92
    %p94 = scmp.eq.s32.totalorder %s16, 0
    %p95 = por %p93, %p94
    %s96 = ssub.s32 %s10, %s17
    %p97 = scmp.eq.s32.totalorder %s96, 0
    %s99 = sadd.s32 %s98, 1
    %s100 = scalar_select %p97, %s98, %s99
    %p103 = pneg %p97
    %p104 = scmp.eq.s32.totalorder %s10, 1
    %p105 = por %p103, %p104
    %p106 = scmp.ne.s32.totalorder %s98, %s101
    %p107 = scmp.eq.s32.totalorder %s10, 0
    %p108 = por %p106, %p107
    %p109 = scmp.ne.s32.totalorder %s98, %s101
    %p110 = scmp.eq.s32.totalorder %s15, 1
    %p111 = por %p109, %p110
    %p112 = scmp.ne.s32.totalorder %s101, %s102
    %p113 = scmp.eq.s32.totalorder %s15, 0
    %p114 = por %p112, %p113
    %p115 = scmp.ne.s32.totalorder %s101, %s102
    %p116 = scmp.eq.s32.totalorder %s16, 1
    %p117 = por %p115, %p116
    %p119 = scmp.ne.s32.totalorder %s102, %s118
    %p120 = scmp.eq.s32.totalorder %s16, 0
    %p121 = por %p119, %p120
    %s122 = ssub.s32 %s10, %s17
    %p123 = scmp.eq.s32.totalorder %s122, 0
    %s125 = sadd.s32 %s124, 1
    %s126 = scalar_select %p123, %s124, %s125
    %p129 = pneg %p123
    %p130 = scmp.eq.s32.totalorder %s10, 1
    %p131 = por %p129, %p130
    %p132 = scmp.ne.s32.totalorder %s124, %s127
    %p133 = scmp.eq.s32.totalorder %s10, 0
    %p134 = por %p132, %p133
    %p135 = scmp.ne.s32.totalorder %s124, %s127
    %p136 = scmp.eq.s32.totalorder %s15, 1
    %p137 = por %p135, %p136
    %p138 = scmp.ne.s32.totalorder %s127, %s128
    %p139 = scmp.eq.s32.totalorder %s15, 0
    %p140 = por %p138, %p139
    %p141 = scmp.ne.s32.totalorder %s127, %s128
    %p142 = scmp.eq.s32.totalorder %s16, 1
    %p143 = por %p141, %p142
    %p145 = scmp.ne.s32.totalorder %s128, %s144
    %p146 = scmp.eq.s32.totalorder %s16, 0
    %p147 = por %p145, %p146
    %p148 = scmp.le.s32.totalorder 1, %s10
    %p149 = scmp.lt.s32.totalorder %s10, 3
    %p150 = pnand %p148, %p149
    %p151 = pneg %p150
    // Predicated region
    $region9: #{_lambda_.30} parent=5 // pred_check
      _
    $region10: #{_lambda_.30} parent=5 // pred_check_branch
      %153 = sbr.rel (%p150) target = $region12
    $region11: #{_lambda_.30} parent=5 // pred_region
      %s154 = ssub.s32 %s10, 1
    $region12: #{_lambda_.30} parent=5 // pred_fallthru
      _
    %p155 = scmp.lt.s32.totalorder %s10, 2
    // Predicated region
    $region13: #{_lambda_.30} parent=5 // pred_check
      %p156 = pneg %p155
    $region14: #{_lambda_.30} parent=5 // pred_check_branch
      %158 = sbr.rel (%p156) target = $region16
    $region15: #{_lambda_.30} parent=5 // pred_region
      // Predicated region
      $region17: #{_lambda_.30} parent=15 // pred_check
        %p159 = pneg %p30
      $region18: #{_lambda_.30} parent=15 // pred_check_branch
        %161 = sbr.rel (%p159) target = $region20
      $region19: #{_lambda_.30} parent=15 // pred_region
        %p162 = scmp.lt.s32.totalorder %s10, 1
        %s163 = scalar_select %p162, %s10, 1
        %s164 = smul.addr %s163, 4
        %s165 = sadd.s32 3, %s164
        %s166 = smul.addr %s165, 4
        %s167 = scalar_lea.vmem %s0, %s166
      $region20: #{_lambda_.30} parent=15 // pred_fallthru
        _
      // Predicated region
      $region21: #{_lambda_.30} parent=15 // pred_check
        %p168 = pneg %p56
      $region22: #{_lambda_.30} parent=15 // pred_check_branch
        %170 = sbr.rel (%p168) target = $region24
      $region23: #{_lambda_.30} parent=15 // pred_region
        %p171 = scmp.lt.s32.totalorder %s10, 1
        %s172 = scalar_select %p171, %s10, 1
        %s173 = smul.addr %s172, 2
        %s174 = smul.addr %s173, 4
        %s175 = scalar_lea.vmem %s1, %s174
      $region24: #{_lambda_.30} parent=15 // pred_fallthru
        _
      // Predicated region
      $region25: #{_lambda_.30} parent=15 // pred_check
        %p176 = pneg %p82
      $region26: #{_lambda_.30} parent=15 // pred_check_branch
        %178 = sbr.rel (%p176) target = $region28
      $region27: #{_lambda_.30} parent=15 // pred_region
        %p179 = scmp.lt.s32.totalorder %s10, 1
        %s180 = scalar_select %p179, %s10, 1
        %s181 = smul.addr %s180, 2
        %s182 = sadd.s32 1, %s181
        %s183 = smul.addr %s182, 4
        %s184 = scalar_lea.vmem %s2, %s183
      $region28: #{_lambda_.30} parent=15 // pred_fallthru
        _
      // Predicated region
      $region29: #{_lambda_.30} parent=15 // pred_check
        %p185 = pneg %p108
      $region30: #{_lambda_.30} parent=15 // pred_check_branch
        %187 = sbr.rel (%p185) target = $region32
      $region31: #{_lambda_.30} parent=15 // pred_region
        %p188 = scmp.lt.s32.totalorder %s10, 1
        %s189 = scalar_select %p188, %s10, 1
        %s190 = scalar_lea.vmem %s3, %s189
      $region32: #{_lambda_.30} parent=15 // pred_fallthru
        _
    $region16: #{_lambda_.30} parent=5 // pred_fallthru
      _
    %p191 = scmp.le.s32.totalorder 1, %s10
    %p192 = scmp.lt.s32.totalorder %s10, 3
    %p193 = pnand %p191, %p192
    %p194 = pneg %p193
    // Predicated region
    $region33: #{_lambda_.30} parent=5 // pred_check
      _
    $region34: #{_lambda_.30} parent=5 // pred_check_branch
      %196 = sbr.rel (%p193) target = $region36
    $region35: #{_lambda_.30} parent=5 // pred_region
      %s197 = ssub.s32 %s10, 1
      %p198 = scmp.lt.s32.totalorder %s15, 1
      %s199 = scalar_select %p198, %s15, 1
      %s200 = smul.addr %s199, 4
      %s201 = sadd.s32 3, %s200
      %s202 = smul.addr %s201, 4
      %s203 = scalar_lea.vmem %s0, %s202
      %p204 = pneg %p36
      %p205 = pneg %p33
      %p206 = scmp.lt.s32.totalorder %s15, 1
      %s207 = scalar_select %p206, %s15, 1
      %s208 = smul.addr %s207, 2
      %s209 = smul.addr %s208, 4
      %s210 = scalar_lea.vmem %s1, %s209
      %p211 = pneg %p62
      %p212 = pneg %p59
      %p213 = scmp.lt.s32.totalorder %s15, 1
      %s214 = scalar_select %p213, %s15, 1
      %s215 = smul.addr %s214, 2
      %s216 = sadd.s32 1, %s215
      %s217 = smul.addr %s216, 4
      %s218 = scalar_lea.vmem %s2, %s217
      %p219 = pneg %p88
      %p220 = pneg %p85
      %p221 = scmp.lt.s32.totalorder %s15, 1
      %s222 = scalar_select %p221, %s15, 1
      %s223 = scalar_lea.vmem %s3, %s222
      %p224 = pneg %p114
      %p225 = pneg %p111
      %p226 = pneg %p140
      %p227 = pneg %p137
      %p228 = scmp.lt.s32.totalorder %s15, 1
      %s229 = scalar_select %p228, %s15, 1
      %s230 = smul.addr %s229, 4
      %s231 = scalar_lea.vmem %s4, %s230
      %p232 = scmp.lt.s32.totalorder %s15, 1
      %s233 = scalar_select %p232, %s15, 1
      %s234 = smul.addr %s233, 4
      %s235 = sadd.s32 3, %s234
      %s236 = smul.addr %s235, 4
      %s237 = scalar_lea.vmem %s0, %s236
      %p238 = scmp.lt.s32.totalorder %s15, 1
      %s239 = scalar_select %p238, %s15, 1
      %s240 = smul.addr %s239, 2
      %s241 = smul.addr %s240, 4
      %s242 = scalar_lea.vmem %s1, %s241
      %p243 = scmp.lt.s32.totalorder %s15, 1
      %s244 = scalar_select %p243, %s15, 1
      %s245 = smul.addr %s244, 2
      %s246 = sadd.s32 1, %s245
      %s247 = smul.addr %s246, 4
      %s248 = scalar_lea.vmem %s2, %s247
      %p249 = scmp.lt.s32.totalorder %s15, 1
      %s250 = scalar_select %p249, %s15, 1
      %s251 = scalar_lea.vmem %s3, %s250
      %p252 = scmp.lt.s32.totalorder %s15, 1
      %s253 = scalar_select %p252, %s15, 1
      %s254 = smul.addr %s253, 4
      %s255 = scalar_lea.vmem %s4, %s254
      %v258 = vld [vmem:[%s237] sm:$0xf]
      %v259 = vmul.bf16 %v258, 1043676725
      %v260 = vld [vmem:[%s242] sm:$0xf]
      %v261 = vld [vmem:[%s248] sm:$0xf]
      %v262 = vld [vmem:[%s251] sm:$0x1]
      %v264 = vlaneseq
      %v265 = vshrl.u32 %v264, 7
      %v266 = vsub.s32 0, %v265
      %v267 = vrot.slane %v262, %v266
      %vm269 = vcmask 261120
      %v271 = vsel %vm269, %v259, 0
      %v274 = vsel %vm269, %v260, 0
      %276 = vmatprep.subr.bf16.mxu0 0
      %277 = vmatpush1.bf16.xpose.msra.mxu0 %v274
      %278 = vmatprep.subr.bf16.mxu0 0
      %279 = vmatpush1.bf16.xpose.msra.mxu0 0
      %280 = vmatprep.subr.bf16.mxu0 0
      %281 = vmatpush1.bf16.xpose.msra.mxu0 0
      %282 = vmatprep.subr.bf16.mxu0 0
      %283 = vmatpush1.bf16.xpose.msra.mxu0 0
      %284 = vmatprep.subr.bf16.mxu0 0
      %285 = vmatpush1.bf16.xpose.msra.mxu0 0
      %286 = vmatprep.subr.bf16.mxu0 0
      %287 = vmatpush1.bf16.xpose.msra.mxu0 0
      %288 = vmatprep.subr.bf16.mxu0 0
      %289 = vmatpush1.bf16.xpose.msra.mxu0 0
      %290 = vmatprep.subr.bf16.mxu0 0
      %291 = vmatpush1.bf16.xpose.msra.mxu0 0
      %292 = vmatprep.subr.bf16.mxu0 0
      %293 = vmatpush1.bf16.xpose.msra.mxu0 0
      %294 = vmatprep.subr.bf16.mxu0 0
      %295 = vmatpush1.bf16.xpose.msra.mxu0 0
      %296 = vmatprep.subr.bf16.mxu0 0
      %297 = vmatpush1.bf16.xpose.msra.mxu0 0
      %298 = vmatprep.subr.bf16.mxu0 0
      %299 = vmatpush1.bf16.xpose.msra.mxu0 0
      %300 = vmatprep.subr.bf16.mxu0 0
      %301 = vmatpush1.bf16.xpose.msra.mxu0 0
      %302 = vmatprep.subr.bf16.mxu0 0
      %303 = vmatpush1.bf16.xpose.msra.mxu0 0
      %304 = vmatprep.subr.bf16.mxu0 0
      %305 = vmatpush1.bf16.xpose.msra.mxu0 0
      %306 = vmatprep.subr.bf16.mxu0 0
      %307 = vmatpush1.bf16.xpose.msra.mxu0 0
      %308 = vmatprep.mubr.bf16.mxu0 0
      %309 = vmatmul.mubr.bf16.gmra.mrb[0].mxu0 %v271
      %v310 = vpop.f32.mrb[0].mxu0
      %v311 = vadd.f32 %v267, %v310
      %v312 = vpop.f32.mrb[0].mxu0
      %v313 = vpop.f32.mrb[0].mxu0
      %v314 = vpop.f32.mrb[0].mxu0
      %315 = vdwg.mxu0
      %vm316 = vcmask 64512
      %v317 = vsel %vm316, %v311, -inf
      %318 = vmax.xlane.f32.xlu0 %v317
      %v319 = vpop.xlane.xlu0 %318
      %v320 = vsub.f32 %v311, %v319
      %v321 = vmul.f32 %v320, 1.442695
      %v322 = vpow.pop %v321
      %v323 = vsel %vm316, %v322, 0.0
      %324 = vadd.xlane.f32.xlu0 %v323
      %v325 = vpop.xlane.xlu0 %324
      %v326 = vrcp.pop %v325
      %v327 = vmul.f32 %v322, %v326
      %v328 = vpack.c.bf16 %v327, %v327
      %v330 = vsel %vm316, %v328, 0
      %vm332 = vcmask 1043456
      %v334 = vsel %vm332, %v261, 0
      %336 = vmatprep.subr.bf16.mxu0 0
      %337 = vmatpush1.bf16.msra.mxu0 %v334
      %338 = vmatprep.subr.bf16.mxu0 0
      %339 = vmatpush1.bf16.msra.mxu0 0
      %340 = vmatprep.subr.bf16.mxu0 0
      %341 = vmatpush1.bf16.msra.mxu0 0
      %342 = vmatprep.subr.bf16.mxu0 0
      %343 = vmatpush1.bf16.msra.mxu0 0
      %344 = vmatprep.subr.bf16.mxu0 0
      %345 = vmatpush1.bf16.msra.mxu0 0
      %346 = vmatprep.subr.bf16.mxu0 0
      %347 = vmatpush1.bf16.msra.mxu0 0
      %348 = vmatprep.subr.bf16.mxu0 0
      %349 = vmatpush1.bf16.msra.mxu0 0
      %350 = vmatprep.subr.bf16.mxu0 0
      %351 = vmatpush1.bf16.msra.mxu0 0
      %352 = vmatprep.subr.bf16.mxu0 0
      %353 = vmatpush1.bf16.msra.mxu0 0
      %354 = vmatprep.subr.bf16.mxu0 0
      %355 = vmatpush1.bf16.msra.mxu0 0
      %356 = vmatprep.subr.bf16.mxu0 0
      %357 = vmatpush1.bf16.msra.mxu0 0
      %358 = vmatprep.subr.bf16.mxu0 0
      %359 = vmatpush1.bf16.msra.mxu0 0
      %360 = vmatprep.subr.bf16.mxu0 0
      %361 = vmatpush1.bf16.msra.mxu0 0
      %362 = vmatprep.subr.bf16.mxu0 0
      %363 = vmatpush1.bf16.msra.mxu0 0
      %364 = vmatprep.subr.bf16.mxu0 0
      %365 = vmatpush1.bf16.msra.mxu0 0
      %366 = vmatprep.subr.bf16.mxu0 0
      %367 = vmatpush1.bf16.msra.mxu0 0
      %368 = vmatprep.mubr.bf16.mxu0 0
      %369 = vmatmul.mubr.bf16.gmra.mrb[0].mxu0 %v330
      %v370 = vpop.f32.mrb[0].mxu0
      %v371 = vadd.f32 0.0, %v370
      %v372 = vpop.f32.mrb[0].mxu0
      %v373 = vpop.f32.mrb[0].mxu0
      %v374 = vpop.f32.mrb[0].mxu0
      %375 = vdwg.mxu0
      %v377 = vunpack.c.l.b16 %v259
      %v378 = vpack.c.b16 %v377, %v377
      %379 = vrot.lane.b32.xlu0 %v378, 96
      %v380 = vpop.permute.xlu0 %379
      %v382 = vunpack.c.l.b16 %v260
      %v383 = vpack.c.b16 %v382, %v382
      %384 = vrot.lane.b32.xlu0 %v383, 96
      %v385 = vpop.permute.xlu0 %384
      %v387 = vsel %vm269, %v380, 0
      %v390 = vsel %vm269, %v385, 0
      %392 = vmatprep.subr.bf16.mxu0 0
      %393 = vmatpush1.bf16.xpose.msra.mxu0 %v390
      %394 = vmatprep.subr.bf16.mxu0 0
      %395 = vmatpush1.bf16.xpose.msra.mxu0 0
      %396 = vmatprep.subr.bf16.mxu0 0
      %397 = vmatpush1.bf16.xpose.msra.mxu0 0
      %398 = vmatprep.subr.bf16.mxu0 0
      %399 = vmatpush1.bf16.xpose.msra.mxu0 0
      %400 = vmatprep.subr.bf16.mxu0 0
      %401 = vmatpush1.bf16.xpose.msra.mxu0 0
      %402 = vmatprep.subr.bf16.mxu0 0
      %403 = vmatpush1.bf16.xpose.msra.mxu0 0
      %404 = vmatprep.subr.bf16.mxu0 0
      %405 = vmatpush1.bf16.xpose.msra.mxu0 0
      %406 = vmatprep.subr.bf16.mxu0 0
      %407 = vmatpush1.bf16.xpose.msra.mxu0 0
      %408 = vmatprep.subr.bf16.mxu0 0
      %409 = vmatpush1.bf16.xpose.msra.mxu0 0
      %410 = vmatprep.subr.bf16.mxu0 0
      %411 = vmatpush1.bf16.xpose.msra.mxu0 0
      %412 = vmatprep.subr.bf16.mxu0 0
      %413 = vmatpush1.bf16.xpose.msra.mxu0 0
      %414 = vmatprep.subr.bf16.mxu0 0
      %415 = vmatpush1.bf16.xpose.msra.mxu0 0
      %416 = vmatprep.subr.bf16.mxu0 0
      %417 = vmatpush1.bf16.xpose.msra.mxu0 0
      %418 = vmatprep.subr.bf16.mxu0 0
      %419 = vmatpush1.bf16.xpose.msra.mxu0 0
      %420 = vmatprep.subr.bf16.mxu0 0
      %421 = vmatpush1.bf16.xpose.msra.mxu0 0
      %422 = vmatprep.subr.bf16.mxu0 0
      %423 = vmatpush1.bf16.xpose.msra.mxu0 0
      %424 = vmatprep.mubr.bf16.mxu0 0
      %425 = vmatmul.mubr.bf16.gmra.mrb[0].mxu0 %v387
      %v426 = vpop.f32.mrb[0].mxu0
      %v427 = vadd.f32 %v267, %v426
      %v428 = vpop.f32.mrb[0].mxu0
      %v429 = vpop.f32.mrb[0].mxu0
      %v430 = vpop.f32.mrb[0].mxu0
      %431 = vdwg.mxu0
      %v432 = vsel %vm316, %v427, -inf
      %433 = vmax.xlane.f32.xlu0 %v432
      %v434 = vpop.xlane.xlu0 %433
      %v435 = vsub.f32 %v427, %v434
      %v436 = vmul.f32 %v435, 1.442695
      %v437 = vpow.pop %v436
      %v438 = vsel %vm316, %v437, 0.0
      %439 = vadd.xlane.f32.xlu0 %v438
      %v440 = vpop.xlane.xlu0 %439
      %v441 = vrcp.pop %v440
      %v442 = vmul.f32 %v437, %v441
      %v443 = vpack.c.bf16 %v442, %v442
      %v445 = vunpack.c.l.b16 %v261
      %v446 = vpack.c.b16 %v445, %v445
      %447 = vrot.lane.b32.xlu0 %v446, 96
      %v448 = vpop.permute.xlu0 %447
      %v450 = vsel %vm316, %v443, 0
      %v453 = vsel %vm332, %v448, 0
      %455 = vmatprep.subr.bf16.mxu0 0
      %456 = vmatpush1.bf16.msra.mxu0 %v453
      %457 = vmatprep.subr.bf16.mxu0 0
      %458 = vmatpush1.bf16.msra.mxu0 0
      %459 = vmatprep.subr.bf16.mxu0 0
      %460 = vmatpush1.bf16.msra.mxu0 0
      %461 = vmatprep.subr.bf16.mxu0 0
      %462 = vmatpush1.bf16.msra.mxu0 0
      %463 = vmatprep.subr.bf16.mxu0 0
      %464 = vmatpush1.bf16.msra.mxu0 0
      %465 = vmatprep.subr.bf16.mxu0 0
      %466 = vmatpush1.bf16.msra.mxu0 0
      %467 = vmatprep.subr.bf16.mxu0 0
      %468 = vmatpush1.bf16.msra.mxu0 0
      %469 = vmatprep.subr.bf16.mxu0 0
      %470 = vmatpush1.bf16.msra.mxu0 0
      %471 = vmatprep.subr.bf16.mxu0 0
      %472 = vmatpush1.bf16.msra.mxu0 0
      %473 = vmatprep.subr.bf16.mxu0 0
      %474 = vmatpush1.bf16.msra.mxu0 0
      %475 = vmatprep.subr.bf16.mxu0 0
      %476 = vmatpush1.bf16.msra.mxu0 0
      %477 = vmatprep.subr.bf16.mxu0 0
      %478 = vmatpush1.bf16.msra.mxu0 0
      %479 = vmatprep.subr.bf16.mxu0 0
      %480 = vmatpush1.bf16.msra.mxu0 0
      %481 = vmatprep.subr.bf16.mxu0 0
      %482 = vmatpush1.bf16.msra.mxu0 0
      %483 = vmatprep.subr.bf16.mxu0 0
      %484 = vmatpush1.bf16.msra.mxu0 0
      %485 = vmatprep.subr.bf16.mxu0 0
      %486 = vmatpush1.bf16.msra.mxu0 0
      %487 = vmatprep.mubr.bf16.mxu0 0
      %488 = vmatmul.mubr.bf16.gmra.mrb[0].mxu0 %v450
      %v489 = vpop.f32.mrb[0].mxu0
      %v490 = vadd.f32 0.0, %v489
      %v491 = vpop.f32.mrb[0].mxu0
      %v492 = vpop.f32.mrb[0].mxu0
      %v493 = vpop.f32.mrb[0].mxu0
      %494 = vdwg.mxu0
      %495 = vrot.lane.b32.xlu0 %v378, 64
      %v496 = vpop.permute.xlu0 %495
      %497 = vrot.lane.b32.xlu0 %v383, 64
      %v498 = vpop.permute.xlu0 %497
      %v500 = vsel %vm269, %v496, 0
      %v503 = vsel %vm269, %v498, 0
      %505 = vmatprep.subr.bf16.mxu0 0
      %506 = vmatpush1.bf16.xpose.msra.mxu0 %v503
      %507 = vmatprep.subr.bf16.mxu0 0
      %508 = vmatpush1.bf16.xpose.msra.mxu0 0
      %509 = vmatprep.subr.bf16.mxu0 0
      %510 = vmatpush1.bf16.xpose.msra.mxu0 0
      %511 = vmatprep.subr.bf16.mxu0 0
      %512 = vmatpush1.bf16.xpose.msra.mxu0 0
      %513 = vmatprep.subr.bf16.mxu0 0
      %514 = vmatpush1.bf16.xpose.msra.mxu0 0
      %515 = vmatprep.subr.bf16.mxu0 0
      %516 = vmatpush1.bf16.xpose.msra.mxu0 0
      %517 = vmatprep.subr.bf16.mxu0 0
      %518 = vmatpush1.bf16.xpose.msra.mxu0 0
      %519 = vmatprep.subr.bf16.mxu0 0
      %520 = vmatpush1.bf16.xpose.msra.mxu0 0
      %521 = vmatprep.subr.bf16.mxu0 0
      %522 = vmatpush1.bf16.xpose.msra.mxu0 0
      %523 = vmatprep.subr.bf16.mxu0 0
      %524 = vmatpush1.bf16.xpose.msra.mxu0 0
      %525 = vmatprep.subr.bf16.mxu0 0
      %526 = vmatpush1.bf16.xpose.msra.mxu0 0
      %527 = vmatprep.subr.bf16.mxu0 0
      %528 = vmatpush1.bf16.xpose.msra.mxu0 0
      %529 = vmatprep.subr.bf16.mxu0 0
      %530 = vmatpush1.bf16.xpose.msra.mxu0 0
      %531 = vmatprep.subr.bf16.mxu0 0
      %532 = vmatpush1.bf16.xpose.msra.mxu0 0
      %533 = vmatprep.subr.bf16.mxu0 0
      %534 = vmatpush1.bf16.xpose.msra.mxu0 0
      %535 = vmatprep.subr.bf16.mxu0 0
      %536 = vmatpush1.bf16.xpose.msra.mxu0 0
      %537 = vmatprep.mubr.bf16.mxu0 0
      %538 = vmatmul.mubr.bf16.gmra.mrb[0].mxu0 %v500
      %v539 = vpop.f32.mrb[0].mxu0
      %v540 = vadd.f32 %v267, %v539
      %v541 = vpop.f32.mrb[0].mxu0
      %v542 = vpop.f32.mrb[0].mxu0
      %v543 = vpop.f32.mrb[0].mxu0
      %544 = vdwg.mxu0
      %v545 = vsel %vm316, %v540, -inf
      %546 = vmax.xlane.f32.xlu0 %v545
      %v547 = vpop.xlane.xlu0 %546
      %v548 = vsub.f32 %v540, %v547
      %v549 = vmul.f32 %v548, 1.442695
      %v550 = vpow.pop %v549
      %v551 = vsel %vm316, %v550, 0.0
      %552 = vadd.xlane.f32.xlu0 %v551
      %v553 = vpop.xlane.xlu0 %552
      %v554 = vrcp.pop %v553
      %v555 = vmul.f32 %v550, %v554
      %v556 = vpack.c.bf16 %v555, %v555
      %557 = vrot.lane.b32.xlu0 %v446, 64
      %v558 = vpop.permute.xlu0 %557
      %v560 = vsel %vm316, %v556, 0
      %v563 = vsel %vm332, %v558, 0
      %565 = vmatprep.subr.bf16.mxu0 0
      %566 = vmatpush1.bf16.msra.mxu0 %v563
      %567 = vmatprep.subr.bf16.mxu0 0
      %568 = vmatpush1.bf16.msra.mxu0 0
      %569 = vmatprep.subr.bf16.mxu0 0
      %570 = vmatpush1.bf16.msra.mxu0 0
      %571 = vmatprep.subr.bf16.mxu0 0
      %572 = vmatpush1.bf16.msra.mxu0 0
      %573 = vmatprep.subr.bf16.mxu0 0
      %574 = vmatpush1.bf16.msra.mxu0 0
      %575 = vmatprep.subr.bf16.mxu0 0
      %576 = vmatpush1.bf16.msra.mxu0 0
      %577 = vmatprep.subr.bf16.mxu0 0
      %578 = vmatpush1.bf16.msra.mxu0 0
      %579 = vmatprep.subr.bf16.mxu0 0
      %580 = vmatpush1.bf16.msra.mxu0 0
      %581 = vmatprep.subr.bf16.mxu0 0
      %582 = vmatpush1.bf16.msra.mxu0 0
      %583 = vmatprep.subr.bf16.mxu0 0
      %584 = vmatpush1.bf16.msra.mxu0 0
      %585 = vmatprep.subr.bf16.mxu0 0
      %586 = vmatpush1.bf16.msra.mxu0 0
      %587 = vmatprep.subr.bf16.mxu0 0
      %588 = vmatpush1.bf16.msra.mxu0 0
      %589 = vmatprep.subr.bf16.mxu0 0
      %590 = vmatpush1.bf16.msra.mxu0 0
      %591 = vmatprep.subr.bf16.mxu0 0
      %592 = vmatpush1.bf16.msra.mxu0 0
      %593 = vmatprep.subr.bf16.mxu0 0
      %594 = vmatpush1.bf16.msra.mxu0 0
      %595 = vmatprep.subr.bf16.mxu0 0
      %596 = vmatpush1.bf16.msra.mxu0 0
      %597 = vmatprep.mubr.bf16.mxu0 0
      %598 = vmatmul.mubr.bf16.gmra.mrb[0].mxu0 %v560
      %v599 = vpop.f32.mrb[0].mxu0
      %v600 = vadd.f32 0.0, %v599
      %v601 = vpop.f32.mrb[0].mxu0
      %v602 = vpop.f32.mrb[0].mxu0
      %v603 = vpop.f32.mrb[0].mxu0
      %604 = vdwg.mxu0
      %605 = vrot.lane.b32.xlu0 %v378, 32
      %v606 = vpop.permute.xlu0 %605
      %607 = vrot.lane.b32.xlu0 %v383, 32
      %v608 = vpop.permute.xlu0 %607
      %v610 = vsel %vm269, %v606, 0
      %v613 = vsel %vm269, %v608, 0
      %615 = vmatprep.subr.bf16.mxu0 0
      %616 = vmatpush1.bf16.xpose.msra.mxu0 %v613
      %617 = vmatprep.subr.bf16.mxu0 0
      %618 = vmatpush1.bf16.xpose.msra.mxu0 0
      %619 = vmatprep.subr.bf16.mxu0 0
      %620 = vmatpush1.bf16.xpose.msra.mxu0 0
      %621 = vmatprep.subr.bf16.mxu0 0
      %622 = vmatpush1.bf16.xpose.msra.mxu0 0
      %623 = vmatprep.subr.bf16.mxu0 0
      %624 = vmatpush1.bf16.xpose.msra.mxu0 0
      %625 = vmatprep.subr.bf16.mxu0 0
      %626 = vmatpush1.bf16.xpose.msra.mxu0 0
      %627 = vmatprep.subr.bf16.mxu0 0
      %628 = vmatpush1.bf16.xpose.msra.mxu0 0
      %629 = vmatprep.subr.bf16.mxu0 0
      %630 = vmatpush1.bf16.xpose.msra.mxu0 0
      %631 = vmatprep.subr.bf16.mxu0 0
      %632 = vmatpush1.bf16.xpose.msra.mxu0 0
      %633 = vmatprep.subr.bf16.mxu0 0
      %634 = vmatpush1.bf16.xpose.msra.mxu0 0
      %635 = vmatprep.subr.bf16.mxu0 0
      %636 = vmatpush1.bf16.xpose.msra.mxu0 0
      %637 = vmatprep.subr.bf16.mxu0 0
      %638 = vmatpush1.bf16.xpose.msra.mxu0 0
      %639 = vmatprep.subr.bf16.mxu0 0
      %640 = vmatpush1.bf16.xpose.msra.mxu0 0
      %641 = vmatprep.subr.bf16.mxu0 0
      %642 = vmatpush1.bf16.xpose.msra.mxu0 0
      %643 = vmatprep.subr.bf16.mxu0 0
      %644 = vmatpush1.bf16.xpose.msra.mxu0 0
      %645 = vmatprep.subr.bf16.mxu0 0
      %646 = vmatpush1.bf16.xpose.msra.mxu0 0
      %647 = vmatprep.mubr.bf16.mxu0 0
      %648 = vmatmul.mubr.bf16.gmra.mrb[0].mxu0 %v610
      %v649 = vpop.f32.mrb[0].mxu0
      %v650 = vadd.f32 %v267, %v649
      %v651 = vpop.f32.mrb[0].mxu0
      %v652 = vpop.f32.mrb[0].mxu0
      %v653 = vpop.f32.mrb[0].mxu0
      %654 = vdwg.mxu0
      %v655 = vsel %vm316, %v650, -inf
      %656 = vmax.xlane.f32.xlu0 %v655
      %v657 = vpop.xlane.xlu0 %656
      %v658 = vsub.f32 %v650, %v657
      %v659 = vmul.f32 %v658, 1.442695
      %v660 = vpow.pop %v659
      %v661 = vsel %vm316, %v660, 0.0
      %662 = vadd.xlane.f32.xlu0 %v661
      %v663 = vpop.xlane.xlu0 %662
      %v664 = vrcp.pop %v663
      %v665 = vmul.f32 %v660, %v664
      %v666 = vpack.c.bf16 %v665, %v665
      %667 = vrot.lane.b32.xlu0 %v446, 32
      %v668 = vpop.permute.xlu0 %667
      %v670 = vsel %vm316, %v666, 0
      %v673 = vsel %vm332, %v668, 0
      %675 = vmatprep.subr.bf16.mxu0 0
      %676 = vmatpush1.bf16.msra.mxu0 %v673
      %677 = vmatprep.subr.bf16.mxu0 0
      %678 = vmatpush1.bf16.msra.mxu0 0
      %679 = vmatprep.subr.bf16.mxu0 0
      %680 = vmatpush1.bf16.msra.mxu0 0
      %681 = vmatprep.subr.bf16.mxu0 0
      %682 = vmatpush1.bf16.msra.mxu0 0
      %683 = vmatprep.subr.bf16.mxu0 0
      %684 = vmatpush1.bf16.msra.mxu0 0
      %685 = vmatprep.subr.bf16.mxu0 0
      %686 = vmatpush1.bf16.msra.mxu0 0
      %687 = vmatprep.subr.bf16.mxu0 0
      %688 = vmatpush1.bf16.msra.mxu0 0
      %689 = vmatprep.subr.bf16.mxu0 0
      %690 = vmatpush1.bf16.msra.mxu0 0
      %691 = vmatprep.subr.bf16.mxu0 0
      %692 = vmatpush1.bf16.msra.mxu0 0
      %693 = vmatprep.subr.bf16.mxu0 0
      %694 = vmatpush1.bf16.msra.mxu0 0
      %695 = vmatprep.subr.bf16.mxu0 0
      %696 = vmatpush1.bf16.msra.mxu0 0
      %697 = vmatprep.subr.bf16.mxu0 0
      %698 = vmatpush1.bf16.msra.mxu0 0
      %699 = vmatprep.subr.bf16.mxu0 0
      %700 = vmatpush1.bf16.msra.mxu0 0
      %701 = vmatprep.subr.bf16.mxu0 0
      %702 = vmatpush1.bf16.msra.mxu0 0
      %703 = vmatprep.subr.bf16.mxu0 0
      %704 = vmatpush1.bf16.msra.mxu0 0
      %705 = vmatprep.subr.bf16.mxu0 0
      %706 = vmatpush1.bf16.msra.mxu0 0
      %707 = vmatprep.mubr.bf16.mxu0 0
      %708 = vmatmul.mubr.bf16.gmra.mrb[0].mxu0 %v670
      %v709 = vpop.f32.mrb[0].mxu0
      %v710 = vadd.f32 0.0, %v709
      %v711 = vpop.f32.mrb[0].mxu0
      %v712 = vpop.f32.mrb[0].mxu0
      %v713 = vpop.f32.mrb[0].mxu0
      %714 = vdwg.mxu0
      %716 = vrot.lane.b32.xlu0 %v490, 32
      %v717 = vpop.permute.xlu0 %716
      %720 = vrot.lane.b32.xlu0 %v600, 64
      %v721 = vpop.permute.xlu0 %720
      %724 = vrot.lane.b32.xlu0 %v710, 96
      %v725 = vpop.permute.xlu0 %724
      %v727 = vsel %vm269, %v371, %v717
      %vm728 = vcmask 523264
      %v729 = vsel %vm728, %v727, %v721
      %vm730 = vcmask 785408
      %v731 = vsel %vm730, %v729, %v725
      %v732 = vpack.c.bf16 %v731, %v731
      %733 = vst [vmem:[%s255] sm:$0xf] %v732
      %p734 = scmp.lt.s32.totalorder %s15, 1
      %s735 = scalar_select %p734, %s15, 1
      %s736 = smul.addr %s735, 4
      %s737 = scalar_lea.vmem %s4, %s736
      // Predicated region
      $region37: #{_lambda_.30} parent=35 // pred_check
        %p738 = pneg %p137
      $region38: #{_lambda_.30} parent=35 // pred_check_branch
        %740 = sbr.rel (%p738) target = $region40
      $region39: #{_lambda_.30} parent=35 // pred_region
        _
      $region40: #{_lambda_.30} parent=35 // pred_fallthru
        _
    $region36: #{_lambda_.30} parent=5 // pred_fallthru
      _
    %p741 = scmp.le.s32.totalorder 2, %s10
    // Predicated region
    $region41: #{_lambda_.30} parent=5 // pred_check
      %p742 = pneg %p741
    $region42: #{_lambda_.30} parent=5 // pred_check_branch
      %744 = sbr.rel (%p742) target = $region44
    $region43: #{_lambda_.30} parent=5 // pred_region
      %s745 = ssub.s32 %s10, 2
      // Predicated region
      $region45: #{_lambda_.30} parent=43 // pred_check
        %p746 = pneg %p143
      $region46: #{_lambda_.30} parent=43 // pred_check_branch
        %748 = sbr.rel (%p746) target = $region48
      $region47: #{_lambda_.30} parent=43 // pred_region
        %p749 = scmp.lt.s32.totalorder %s16, 1
        %s750 = scalar_select %p749, %s16, 1
        %s751 = smul.addr %s750, 4
        %s752 = scalar_lea.vmem %s4, %s751
      $region48: #{_lambda_.30} parent=43 // pred_fallthru
        _
    $region44: #{_lambda_.30} parent=5 // pred_fallthru
      _
  $region6: #{_lambda_.30} parent=0 // loop_footer
    %s14 = sadd.s32 1, %s10
  $region7: #{_lambda_.30} parent=0 // loop_footer_branch
    %9 = sbr.rel target = $region3
  $region8: #{_lambda_.30} parent=0 // loop_exit
    _

// kernel: _lambda_.47
$region0: #{_lambda_.47}
  #allocation0 [shape = 'u32[]', space=smem, size = 0x4, offset = 0x4, fixed_abs, tag = 'smem constant byte address 0x4 - core index']
  #allocation1 [shape = 'u32[144,128]{1,0:T(1,128)}', space=vmem, size = 0x12000, scoped, tag = 'internal scratch']
  #allocation2 [shape = 'f32[16,128]{1,0:T(8,128)}', space=vmem, size = 0x2000, scoped, tag = 'scratch operand']
  %s0 = inlined_call_operand.vmem [shape: bf16[16,128], index: 0, kind: input, shape index: {}]
  %s1 = inlined_call_operand.vmem [shape: bf16[128,128], index: 1, kind: input, shape index: {}]
  %s2 = inlined_call_operand.vmem [shape: f32[1,128], index: 2, kind: input, shape index: {}]
  %s3 = inlined_call_operand.vmem [shape: f32[16,128], index: 3, kind: output, shape index: {}]
  %s4 = sld [smem:[#allocation0]]
  $region30: #{_lambda_.47} parent=0
    _
  %s6 = ssub.s32 1, %s4
  %s7 = scalar_select 0, %s6, %s4
  // Predicated region
  $region2: #{_lambda_.47} parent=0 // pred_check
    _
  $region3: #{_lambda_.47} parent=0 // pred_check_branch
    %9 = sbr.rel (0) target = $region5
  $region4: #{_lambda_.47} parent=0 // pred_region
    _
  $region5: #{_lambda_.47} parent=0 // pred_fallthru
    _
  // Predicated region
  $region6: #{_lambda_.47} parent=0 // pred_check
    _
  $region7: #{_lambda_.47} parent=0 // pred_check_branch
    %11 = sbr.rel (0) target = $region9
  $region8: #{_lambda_.47} parent=0 // pred_region
    _
  $region9: #{_lambda_.47} parent=0 // pred_fallthru
    _
  // Predicated region
  $region10: #{_lambda_.47} parent=0 // pred_check
    _
  $region11: #{_lambda_.47} parent=0 // pred_check_branch
    %13 = sbr.rel (0) target = $region13
  $region12: #{_lambda_.47} parent=0 // pred_region
    _
  $region13: #{_lambda_.47} parent=0 // pred_fallthru
    _
  %p15 = scmp.eq.s32.totalorder 0, 0
  // Predicated region
  $region14: #{_lambda_.47} parent=0 // pred_check
    %p16 = pneg %p15
  $region15: #{_lambda_.47} parent=0 // pred_check_branch
    %18 = sbr.rel (%p16) target = $region17
  $region16: #{_lambda_.47} parent=0 // pred_region
    %19 = vst [vmem:[#allocation2] sm:$0xff] 0.0
    %20 = vst [vmem:[#allocation2 + $0x8] sm:$0xff] 0.0
  $region17: #{_lambda_.47} parent=0 // pred_fallthru
    _
  %v21 = vld [vmem:[#allocation2] sm:$0xff]
  %v22 = vld [vmem:[#allocation2 + $0x8] sm:$0xff]
  %v23 = vld [vmem:[%s0] sm:$0xf]
  %v24 = vld [vmem:[%s0 + $0x4] sm:$0xf]
  %v25 = vld [vmem:[%s1] sm:$0xf]
  %v26 = vld [vmem:[%s1 + $0x4] sm:$0xf]
  %v27 = vld [vmem:[%s1 + $0x8] sm:$0xf]
  %v28 = vld [vmem:[%s1 + $0xc] sm:$0xf]
  %v29 = vld [vmem:[%s1 + $0x10] sm:$0xf]
  %v30 = vld [vmem:[%s1 + $0x14] sm:$0xf]
  %v31 = vld [vmem:[%s1 + $0x18] sm:$0xf]
  %v32 = vld [vmem:[%s1 + $0x1c] sm:$0xf]
  %v33 = vld [vmem:[%s1 + $0x20] sm:$0xf]
  %v34 = vld [vmem:[%s1 + $0x24] sm:$0xf]
  %v35 = vld [vmem:[%s1 + $0x28] sm:$0xf]
  %v36 = vld [vmem:[%s1 + $0x2c] sm:$0xf]
  %v37 = vld [vmem:[%s1 + $0x30] sm:$0xf]
  %v38 = vld [vmem:[%s1 + $0x34] sm:$0xf]
  %v39 = vld [vmem:[%s1 + $0x38] sm:$0xf]
  %v40 = vld [vmem:[%s1 + $0x3c] sm:$0xf]
  %v43 = vunpack.c.l.b16 %v23
  %v44 = vunpack.c.l.b16 %v24
  %v45 = vpack.c.b16 %v44, %v43
  %v63 = vunpack.c.l.b16 %v25
  %v64 = vunpack.c.l.b16 %v26
  %v65 = vunpack.c.l.b16 %v27
  %v66 = vunpack.c.l.b16 %v28
  %v67 = vunpack.c.l.b16 %v29
  %v68 = vunpack.c.l.b16 %v30
  %v69 = vunpack.c.l.b16 %v31
  %v70 = vunpack.c.l.b16 %v32
  %v71 = vunpack.c.l.b16 %v33
  %v72 = vunpack.c.l.b16 %v34
  %v73 = vunpack.c.l.b16 %v35
  %v74 = vunpack.c.l.b16 %v36
  %v75 = vunpack.c.l.b16 %v37
  %v76 = vunpack.c.l.b16 %v38
  %v77 = vunpack.c.l.b16 %v39
  %v78 = vunpack.c.l.b16 %v40
  %v79 = vpack.c.b16 %v64, %v63
  %v80 = vpack.c.b16 %v66, %v65
  %v81 = vpack.c.b16 %v68, %v67
  %v82 = vpack.c.b16 %v70, %v69
  %v83 = vpack.c.b16 %v72, %v71
  %v84 = vpack.c.b16 %v74, %v73
  %v85 = vpack.c.b16 %v76, %v75
  %v86 = vpack.c.b16 %v78, %v77
  %95 = vmatprep.subr.bf16.mxu0 0
  %96 = vmatpush1.bf16.msra.mxu0 %v79
  %97 = vmatprep.subr.bf16.mxu0 0
  %98 = vmatpush1.bf16.msra.mxu0 %v80
  %99 = vmatprep.subr.bf16.mxu0 0
  %100 = vmatpush1.bf16.msra.mxu0 %v81
  %101 = vmatprep.subr.bf16.mxu0 0
  %102 = vmatpush1.bf16.msra.mxu0 %v82
  %103 = vmatprep.subr.bf16.mxu0 0
  %104 = vmatpush1.bf16.msra.mxu0 %v83
  %105 = vmatprep.subr.bf16.mxu0 0
  %106 = vmatpush1.bf16.msra.mxu0 %v84
  %107 = vmatprep.subr.bf16.mxu0 0
  %108 = vmatpush1.bf16.msra.mxu0 %v85
  %109 = vmatprep.subr.bf16.mxu0 0
  %110 = vmatpush1.bf16.msra.mxu0 %v86
  %111 = vmatprep.subr.bf16.mxu0 0
  %112 = vmatpush1.bf16.msra.mxu0 0
  %113 = vmatprep.subr.bf16.mxu0 0
  %114 = vmatpush1.bf16.msra.mxu0 0
  %115 = vmatprep.subr.bf16.mxu0 0
  %116 = vmatpush1.bf16.msra.mxu0 0
  %117 = vmatprep.subr.bf16.mxu0 0
  %118 = vmatpush1.bf16.msra.mxu0 0
  %119 = vmatprep.subr.bf16.mxu0 0
  %120 = vmatpush1.bf16.msra.mxu0 0
  %121 = vmatprep.subr.bf16.mxu0 0
  %122 = vmatpush1.bf16.msra.mxu0 0
  %123 = vmatprep.subr.bf16.mxu0 0
  %124 = vmatpush1.bf16.msra.mxu0 0
  %125 = vmatprep.subr.bf16.mxu0 0
  %126 = vmatpush1.bf16.msra.mxu0 0
  %127 = vmatprep.mubr.bf16.mxu0 0
  %128 = vmatmul.mubr.bf16.gmra.mrb[0].mxu0 %v45
  %v129 = vpop.f32.mrb[0].mxu0
  %v130 = vadd.f32 0.0, %v129
  %v131 = vpop.f32.mrb[0].mxu0
  %v132 = vpop.f32.mrb[0].mxu0
  %v133 = vadd.f32 0.0, %v132
  %v134 = vpop.f32.mrb[0].mxu0
  %135 = vdwg.mxu0
  %v136 = vadd.f32 %v21, %v130
  %v137 = vadd.f32 %v22, %v133
  %138 = vst [vmem:[#allocation2] sm:$0xff] %v136
  %139 = vst [vmem:[#allocation2 + $0x8] sm:$0xff] %v137
  // Predicated region
  $region18: #{_lambda_.47} parent=0 // pred_check
    %p140 = pneg %p15
  $region19: #{_lambda_.47} parent=0 // pred_check_branch
    %142 = sbr.rel (%p140) target = $region21
  $region20: #{_lambda_.47} parent=0 // pred_region
    %v143 = vld [vmem:[#allocation2] sm:$0xff]
    %v144 = vld [vmem:[#allocation2 + $0x8] sm:$0xff]
    %v145 = vld [vmem:[%s2] sm:$0x1]
    %v147 = vlaneseq
    %v148 = vshrl.u32 %v147, 7
    %v149 = vsub.s32 0, %v148
    %v150 = vrot.slane %v145, %v149
    %v152 = vadd.f32 %v143, %v150
    %v153 = vadd.f32 %v144, %v150
    %154 = vst [vmem:[%s3] sm:$0xff] %v152
    %155 = vst [vmem:[%s3 + $0x8] sm:$0xff] %v153
  $region21: #{_lambda_.47} parent=0 // pred_fallthru
    _
  // Predicated region
  $region22: #{_lambda_.47} parent=0 // pred_check
    _
  $region23: #{_lambda_.47} parent=0 // pred_check_branch
    %157 = sbr.rel (0) target = $region25
  $region24: #{_lambda_.47} parent=0 // pred_region
    _
  $region25: #{_lambda_.47} parent=0 // pred_fallthru
    _
  // Predicated region
  $region26: #{_lambda_.47} parent=0 // pred_check
    _
  $region27: #{_lambda_.47} parent=0 // pred_check_branch
    %159 = sbr.rel (0) target = $region29
  $region28: #{_lambda_.47} parent=0 // pred_region
    _
  $region29: #{_lambda_.47} parent=0 // pred_fallthru
    _

</llo_original>
